<compile_context>
chip_gen: v6e
topology: v6e:2x2x1
jax: 0.10.0
libtpu: 0.0.40
codegen_flags: <defaults>
</compile_context>

<pallas_src>
import jax
import jax.numpy as jnp
from jax.experimental import pallas as pl
from jax.experimental.pallas import tpu as pltpu


# ----------------------------------------------------------------------------
# Fused multi-layer GRU stack kernel.
#   has_h0:       seed per-layer hidden from an (L,B,H) input (decoder);
#                 otherwise zeros (encoder init_hidden).
#   emit_hidden:  output the (L,B,H) final hidden states (encoder).
#   project:      fuse logits = hs_top @ W_out + b_out epilogue (decoder).
# ----------------------------------------------------------------------------
def make_gru_stack_kernel(num_layers, T, B, H, *, has_h0, emit_hidden, project):
    def kernel(*refs):
        pos = 0
        x_ref = refs[pos]; pos += 1                        # (T*B, E_in)
        h0_ref = None
        if has_h0:
            h0_ref = refs[pos]; pos += 1                   # (L, B, H)
        layer_refs = refs[pos:pos + 4 * num_layers]
        pos += 4 * num_layers
        if project:
            w_out_ref = refs[pos]; pos += 1                # (H, V)
            b_out_ref = refs[pos]; pos += 1                # (1, V)
        if emit_hidden:
            hT_ref = refs[pos]; pos += 1                   # (L, B, H) out
        if project:
            logits_ref = refs[pos]; pos += 1               # (T*B, V) out
        seq_ref = refs[pos]; pos += 1                      # (T*B, H) scratch

        layer_in = x_ref[...].astype(jnp.float32)          # (T*B, E_in)
        for l in range(num_layers):
            w_ih = layer_refs[4 * l][...]                  # (E_in|H, 3H)
            w_hh = layer_refs[4 * l + 1][...]              # (H, 3H)
            b_ih = layer_refs[4 * l + 2][...]              # (1, 3H)
            b_hh = layer_refs[4 * l + 3][...]              # (1, 3H)

            # Hoisted input projection for ALL time steps: one MXU call,
            # biases folded in once.
            gi_all = jnp.dot(layer_in, w_ih,
                             preferred_element_type=jnp.float32) + b_ih

            if has_h0:
                h = h0_ref[l].astype(jnp.float32)          # (B, H)
            else:
                h = jnp.zeros((B, H), jnp.float32)

            # Serial recurrence, fully unrolled (T is small & static).
            for t in range(T):
                gi = gi_all[t * B:(t + 1) * B, :]          # (B, 3H)
                gh = jnp.dot(h, w_hh,
                             preferred_element_type=jnp.float32) + b_hh
                r = jax.nn.sigmoid(gi[:, :H] + gh[:, :H])
                z = jax.nn.sigmoid(gi[:, H:2 * H] + gh[:, H:2 * H])
                n = jnp.tanh(gi[:, 2 * H:] + r * gh[:, 2 * H:])
                h = (1.0 - z) * n + z * h                  # PyTorch GRU update
                seq_ref[t * B:(t + 1) * B, :] = h          # layer-l hidden seq

            if emit_hidden:
                hT_ref[l] = h.astype(hT_ref.dtype)

            if l + 1 < num_layers or project:
                layer_in = seq_ref[...]                    # next layer / proj

        if project:
            logits_ref[...] = (
                jnp.dot(layer_in, w_out_ref[...],
                        preferred_element_type=jnp.float32) + b_out_ref[...]
            ).astype(logits_ref.dtype)

    return kernel


def gru_stack(x_flat, layer_params, *, T, B, H, h0=None,
              w_out=None, b_out=None, emit_hidden=True):
    """x_flat: (T*B, E) f32, time-major. Returns tuple of requested outputs."""
    num_layers = len(layer_params)
    has_h0 = h0 is not None
    project = w_out is not None

    kernel = make_gru_stack_kernel(num_layers, T, B, H, has_h0=has_h0,
                                   emit_hidden=emit_hidden, project=project)

    inputs = [x_flat]
    if has_h0:
        inputs.append(h0)
    for p in layer_params:
        inputs += [p["w_ih"], p["w_hh"], p["b_ih"], p["b_hh"]]

    out_shapes = []
    if emit_hidden:
        out_shapes.append(jax.ShapeDtypeStruct((num_layers, B, H), jnp.float32))
    if project:
        V = w_out.shape[-1]
        inputs += [w_out, b_out]
        out_shapes.append(jax.ShapeDtypeStruct((T * B, V), jnp.float32))

    return pl.pallas_call(
        kernel,
        out_shape=tuple(out_shapes),
        scratch_shapes=[pltpu.VMEM((T * B, H), jnp.float32)],
    )(*inputs)


# ----------------------------------------------------------------------------
# Parameter construction (deterministic "synthetic" init, like the reference:
# GRU / linear params ~ U(-0.01, 0.01), embedding weights ~ U(-0.1, 0.1)).
# ----------------------------------------------------------------------------
def make_gru_params(key, num_layers, input_dim, hidden_dim):
    params = []
    for l in range(num_layers):
        in_dim = input_dim if l == 0 else hidden_dim
        key, k1, k2, k3, k4 = jax.random.split(key, 5)
        params.append(dict(
            w_ih=jax.random.uniform(k1, (in_dim, 3 * hidden_dim),
                                    jnp.float32, -0.01, 0.01),
            w_hh=jax.random.uniform(k2, (hidden_dim, 3 * hidden_dim),
                                    jnp.float32, -0.01, 0.01),
            b_ih=jax.random.uniform(k3, (1, 3 * hidden_dim),
                                    jnp.float32, -0.01, 0.01),
            b_hh=jax.random.uniform(k4, (1, 3 * hidden_dim),
                                    jnp.float32, -0.01, 0.01),
        ))
    return params, key


def make_baseline_params(key, vocab, emb_dim, hidden_dim, num_layers):
    key, ke, kd, ko, kb = jax.random.split(key, 5)
    enc_embed = jax.random.uniform(ke, (vocab, emb_dim), jnp.float32, -0.1, 0.1)
    dec_embed = jax.random.uniform(kd, (vocab, emb_dim), jnp.float32, -0.1, 0.1)
    enc_gru, key = make_gru_params(key, num_layers, emb_dim, hidden_dim)
    dec_gru, key = make_gru_params(key, num_layers, emb_dim, hidden_dim)
    w_out = jax.random.uniform(ko, (hidden_dim, vocab), jnp.float32, -0.01, 0.01)
    b_out = jax.random.uniform(kb, (1, vocab), jnp.float32, -0.01, 0.01)
    return dict(enc_embed=enc_embed, dec_embed=dec_embed,
                enc_gru=enc_gru, dec_gru=dec_gru, w_out=w_out, b_out=b_out)


# ----------------------------------------------------------------------------
# Baseline forward: encode -> decode (teacher forcing, train=True)
# ----------------------------------------------------------------------------
def baseline_forward(params, x, x_lens=None):
    # x: (B, T, 1) int32 token ids (batch_first, like the PyTorch module)
    # TODO(synk): x_lens packing (pack_padded_sequence) is not modeled; the
    # full-length GRU is run over padded positions as well.
    B, T, _ = x.shape
    tokens = x[..., 0]                                        # (B, T)
    H = params["enc_gru"][0]["w_hh"].shape[0]
    V = params["w_out"].shape[-1]

    # ---- encode (fused kernel: all layers, whole sequence; no hs output) ----
    enc_in = jnp.take(params["enc_embed"], tokens, axis=0)    # (B, T, E)
    enc_in = jnp.transpose(enc_in, (1, 0, 2)).reshape(T * B, -1)  # (T*B, E)
    enc_hidden = gru_stack(enc_in, params["enc_gru"], T=T, B=B, H=H,
                           emit_hidden=True)[0]               # (L, B, H)

    # ---- decode (fused kernel: all layers + vocab projection epilogue) ----
    dec_in = jnp.take(params["dec_embed"], tokens, axis=0)    # (B, T, E)
    dec_in = jnp.transpose(dec_in, (1, 0, 2)).reshape(T * B, -1)
    logits_flat = gru_stack(dec_in, params["dec_gru"], T=T, B=B, H=H,
                            h0=enc_hidden,
                            w_out=params["w_out"], b_out=params["b_out"],
                            emit_hidden=False)[0]             # (T*B, V)

    logits = logits_flat.reshape(T, B, V).transpose(1, 0, 2)  # (B, T, V)
    return logits


# ----------------------------------------------------------------------------
if __name__ == "__main__":
    # Small shapes consistent with the module's forward.
    batch, max_len = 2, 8
    vocab, emb_dim, hidden_dim, num_layers = 64, 16, 32, 2

    key = jax.random.PRNGKey(0)
    key, kp, kx = jax.random.split(key, 3)
    params = make_baseline_params(kp, vocab, emb_dim, hidden_dim, num_layers)

    x = jax.random.randint(kx, (batch, max_len, 1), 0, vocab, dtype=jnp.int32)

    fwd = jax.jit(baseline_forward)
    out = fwd(params, x)
    out = jax.block_until_ready(out)
    assert out.shape == (batch, max_len, vocab), out.shape
    print("KERNEL_OK")
</pallas_src>

<mosaic_0001>
module attributes {stable_mosaic.version = 11 : i64} {
  func.func @kernel(%arg0: memref<16x16xf32, #tpu.memory_space<vmem>>, %arg1: memref<16x96xf32, #tpu.memory_space<vmem>>, %arg2: memref<32x96xf32, #tpu.memory_space<vmem>>, %arg3: memref<1x96xf32, #tpu.memory_space<vmem>>, %arg4: memref<1x96xf32, #tpu.memory_space<vmem>>, %arg5: memref<32x96xf32, #tpu.memory_space<vmem>>, %arg6: memref<32x96xf32, #tpu.memory_space<vmem>>, %arg7: memref<1x96xf32, #tpu.memory_space<vmem>>, %arg8: memref<1x96xf32, #tpu.memory_space<vmem>>, %arg9: memref<2x2x32xf32, #tpu.memory_space<vmem>>, %arg10: memref<16x32xf32, #tpu.memory_space<vmem>>) attributes {dimension_semantics = [], scalar_prefetch = 0 : i64, scratch_operands = 1 : i64, tpu.core_type = #tpu.core_type<tc>} {
    %c0 = arith.constant 0 : index
    %c0_0 = arith.constant 0 : index
    %0 = vector.load %arg0[%c0, %c0_0] : memref<16x16xf32, #tpu.memory_space<vmem>>, vector<16x16xf32>
    %c0_1 = arith.constant 0 : index
    %c0_2 = arith.constant 0 : index
    %1 = vector.load %arg1[%c0_1, %c0_2] : memref<16x96xf32, #tpu.memory_space<vmem>>, vector<16x96xf32>
    %c0_3 = arith.constant 0 : index
    %c0_4 = arith.constant 0 : index
    %2 = vector.load %arg2[%c0_3, %c0_4] : memref<32x96xf32, #tpu.memory_space<vmem>>, vector<32x96xf32>
    %c0_5 = arith.constant 0 : index
    %c0_6 = arith.constant 0 : index
    %3 = vector.load %arg3[%c0_5, %c0_6] : memref<1x96xf32, #tpu.memory_space<vmem>>, vector<1x96xf32>
    %c0_7 = arith.constant 0 : index
    %c0_8 = arith.constant 0 : index
    %4 = vector.load %arg4[%c0_7, %c0_8] : memref<1x96xf32, #tpu.memory_space<vmem>>, vector<1x96xf32>
    %cst = arith.constant dense<0.000000e+00> : vector<16x96xf32>
    %5 = tpu.matmul %0, %1, %cst {dimension_numbers = #tpu.dot_dimension_numbers<[1], [0], [0], [1], [0, 0, 1, 1], [], []>} : vector<16x16xf32>, vector<16x96xf32>, vector<16x96xf32> -> vector<16x96xf32>
    %6 = vector.broadcast %3 : vector<1x96xf32> to vector<16x96xf32>
    %7 = arith.addf %5, %6 : vector<16x96xf32>
    %cst_9 = arith.constant 0.000000e+00 : f32
    %8 = vector.broadcast %cst_9 : f32 to vector<2x32xf32>
    %9 = vector.extract_strided_slice %7 {offsets = [0, 0], sizes = [2, 96], strides = [1, 1]} : vector<16x96xf32> to vector<2x96xf32>
    %cst_10 = arith.constant dense<0.000000e+00> : vector<2x96xf32>
    %10 = tpu.matmul %8, %2, %cst_10 {dimension_numbers = #tpu.dot_dimension_numbers<[1], [0], [0], [1], [0, 0, 1, 1], [], []>} : vector<2x32xf32>, vector<32x96xf32>, vector<2x96xf32> -> vector<2x96xf32>
    %11 = vector.broadcast %4 : vector<1x96xf32> to vector<2x96xf32>
    %12 = arith.addf %10, %11 : vector<2x96xf32>
    %13 = vector.extract_strided_slice %9 {offsets = [0, 0], sizes = [2, 32], strides = [1, 1]} : vector<2x96xf32> to vector<2x32xf32>
    %14 = vector.extract_strided_slice %12 {offsets = [0, 0], sizes = [2, 32], strides = [1, 1]} : vector<2x96xf32> to vector<2x32xf32>
    %15 = arith.addf %13, %14 : vector<2x32xf32>
    %16 = arith.negf %15 : vector<2x32xf32>
    %17 = math.exp %16 : vector<2x32xf32>
    %cst_11 = arith.constant 1.000000e+00 : f32
    %18 = vector.broadcast %cst_11 : f32 to vector<2x32xf32>
    %19 = arith.addf %18, %17 : vector<2x32xf32>
    %20 = arith.divf %18, %19 : vector<2x32xf32>
    %21 = vector.extract_strided_slice %9 {offsets = [0, 32], sizes = [2, 32], strides = [1, 1]} : vector<2x96xf32> to vector<2x32xf32>
    %22 = vector.extract_strided_slice %12 {offsets = [0, 32], sizes = [2, 32], strides = [1, 1]} : vector<2x96xf32> to vector<2x32xf32>
    %23 = arith.addf %21, %22 : vector<2x32xf32>
    %24 = arith.negf %23 : vector<2x32xf32>
    %25 = math.exp %24 : vector<2x32xf32>
    %cst_12 = arith.constant 1.000000e+00 : f32
    %26 = vector.broadcast %cst_12 : f32 to vector<2x32xf32>
    %27 = arith.addf %26, %25 : vector<2x32xf32>
    %28 = arith.divf %26, %27 : vector<2x32xf32>
    %29 = vector.extract_strided_slice %9 {offsets = [0, 64], sizes = [2, 32], strides = [1, 1]} : vector<2x96xf32> to vector<2x32xf32>
    %30 = vector.extract_strided_slice %12 {offsets = [0, 64], sizes = [2, 32], strides = [1, 1]} : vector<2x96xf32> to vector<2x32xf32>
    %31 = arith.mulf %20, %30 : vector<2x32xf32>
    %32 = arith.addf %29, %31 : vector<2x32xf32>
    %33 = math.tanh %32 : vector<2x32xf32>
    %cst_13 = arith.constant 1.000000e+00 : f32
    %34 = vector.broadcast %cst_13 : f32 to vector<2x32xf32>
    %35 = arith.subf %34, %28 : vector<2x32xf32>
    %36 = arith.mulf %35, %33 : vector<2x32xf32>
    %37 = arith.mulf %28, %8 : vector<2x32xf32>
    %38 = arith.addf %36, %37 : vector<2x32xf32>
    %c0_14 = arith.constant 0 : index
    %c0_15 = arith.constant 0 : index
    %39 = vector.load %arg10[%c0_14, %c0_15] : memref<16x32xf32, #tpu.memory_space<vmem>>, vector<2x32xf32>
    tpu.vector_store %arg10[%c0_14, %c0_15], %38 {strides = array<i32>} : memref<16x32xf32, #tpu.memory_space<vmem>>, vector<2x32xf32>,
    %40 = vector.extract_strided_slice %7 {offsets = [2, 0], sizes = [2, 96], strides = [1, 1]} : vector<16x96xf32> to vector<2x96xf32>
    %cst_16 = arith.constant dense<0.000000e+00> : vector<2x96xf32>
    %41 = tpu.matmul %38, %2, %cst_16 {dimension_numbers = #tpu.dot_dimension_numbers<[1], [0], [0], [1], [0, 0, 1, 1], [], []>} : vector<2x32xf32>, vector<32x96xf32>, vector<2x96xf32> -> vector<2x96xf32>
    %42 = vector.broadcast %4 : vector<1x96xf32> to vector<2x96xf32>
    %43 = arith.addf %41, %42 : vector<2x96xf32>
    %44 = vector.extract_strided_slice %40 {offsets = [0, 0], sizes = [2, 32], strides = [1, 1]} : vector<2x96xf32> to vector<2x32xf32>
    %45 = vector.extract_strided_slice %43 {offsets = [0, 0], sizes = [2, 32], strides = [1, 1]} : vector<2x96xf32> to vector<2x32xf32>
    %46 = arith.addf %44, %45 : vector<2x32xf32>
    %47 = arith.negf %46 : vector<2x32xf32>
    %48 = math.exp %47 : vector<2x32xf32>
    %cst_17 = arith.constant 1.000000e+00 : f32
    %49 = vector.broadcast %cst_17 : f32 to vector<2x32xf32>
    %50 = arith.addf %49, %48 : vector<2x32xf32>
    %51 = arith.divf %49, %50 : vector<2x32xf32>
    %52 = vector.extract_strided_slice %40 {offsets = [0, 32], sizes = [2, 32], strides = [1, 1]} : vector<2x96xf32> to vector<2x32xf32>
    %53 = vector.extract_strided_slice %43 {offsets = [0, 32], sizes = [2, 32], strides = [1, 1]} : vector<2x96xf32> to vector<2x32xf32>
    %54 = arith.addf %52, %53 : vector<2x32xf32>
    %55 = arith.negf %54 : vector<2x32xf32>
    %56 = math.exp %55 : vector<2x32xf32>
    %cst_18 = arith.constant 1.000000e+00 : f32
    %57 = vector.broadcast %cst_18 : f32 to vector<2x32xf32>
    %58 = arith.addf %57, %56 : vector<2x32xf32>
    %59 = arith.divf %57, %58 : vector<2x32xf32>
    %60 = vector.extract_strided_slice %40 {offsets = [0, 64], sizes = [2, 32], strides = [1, 1]} : vector<2x96xf32> to vector<2x32xf32>
    %61 = vector.extract_strided_slice %43 {offsets = [0, 64], sizes = [2, 32], strides = [1, 1]} : vector<2x96xf32> to vector<2x32xf32>
    %62 = arith.mulf %51, %61 : vector<2x32xf32>
    %63 = arith.addf %60, %62 : vector<2x32xf32>
    %64 = math.tanh %63 : vector<2x32xf32>
    %cst_19 = arith.constant 1.000000e+00 : f32
    %65 = vector.broadcast %cst_19 : f32 to vector<2x32xf32>
    %66 = arith.subf %65, %59 : vector<2x32xf32>
    %67 = arith.mulf %66, %64 : vector<2x32xf32>
    %68 = arith.mulf %59, %38 : vector<2x32xf32>
    %69 = arith.addf %67, %68 : vector<2x32xf32>
    %c2 = arith.constant 2 : index
    %c0_20 = arith.constant 0 : index
    %70 = vector.load %arg10[%c2, %c0_20] : memref<16x32xf32, #tpu.memory_space<vmem>>, vector<2x32xf32>
    tpu.vector_store %arg10[%c2, %c0_20], %69 {strides = array<i32>} : memref<16x32xf32, #tpu.memory_space<vmem>>, vector<2x32xf32>,
    %71 = vector.extract_strided_slice %7 {offsets = [4, 0], sizes = [2, 96], strides = [1, 1]} : vector<16x96xf32> to vector<2x96xf32>
    %cst_21 = arith.constant dense<0.000000e+00> : vector<2x96xf32>
    %72 = tpu.matmul %69, %2, %cst_21 {dimension_numbers = #tpu.dot_dimension_numbers<[1], [0], [0], [1], [0, 0, 1, 1], [], []>} : vector<2x32xf32>, vector<32x96xf32>, vector<2x96xf32> -> vector<2x96xf32>
    %73 = vector.broadcast %4 : vector<1x96xf32> to vector<2x96xf32>
    %74 = arith.addf %72, %73 : vector<2x96xf32>
    %75 = vector.extract_strided_slice %71 {offsets = [0, 0], sizes = [2, 32], strides = [1, 1]} : vector<2x96xf32> to vector<2x32xf32>
    %76 = vector.extract_strided_slice %74 {offsets = [0, 0], sizes = [2, 32], strides = [1, 1]} : vector<2x96xf32> to vector<2x32xf32>
    %77 = arith.addf %75, %76 : vector<2x32xf32>
    %78 = arith.negf %77 : vector<2x32xf32>
    %79 = math.exp %78 : vector<2x32xf32>
    %cst_22 = arith.constant 1.000000e+00 : f32
    %80 = vector.broadcast %cst_22 : f32 to vector<2x32xf32>
    %81 = arith.addf %80, %79 : vector<2x32xf32>
    %82 = arith.divf %80, %81 : vector<2x32xf32>
    %83 = vector.extract_strided_slice %71 {offsets = [0, 32], sizes = [2, 32], strides = [1, 1]} : vector<2x96xf32> to vector<2x32xf32>
    %84 = vector.extract_strided_slice %74 {offsets = [0, 32], sizes = [2, 32], strides = [1, 1]} : vector<2x96xf32> to vector<2x32xf32>
    %85 = arith.addf %83, %84 : vector<2x32xf32>
    %86 = arith.negf %85 : vector<2x32xf32>
    %87 = math.exp %86 : vector<2x32xf32>
    %cst_23 = arith.constant 1.000000e+00 : f32
    %88 = vector.broadcast %cst_23 : f32 to vector<2x32xf32>
    %89 = arith.addf %88, %87 : vector<2x32xf32>
    %90 = arith.divf %88, %89 : vector<2x32xf32>
    %91 = vector.extract_strided_slice %71 {offsets = [0, 64], sizes = [2, 32], strides = [1, 1]} : vector<2x96xf32> to vector<2x32xf32>
    %92 = vector.extract_strided_slice %74 {offsets = [0, 64], sizes = [2, 32], strides = [1, 1]} : vector<2x96xf32> to vector<2x32xf32>
    %93 = arith.mulf %82, %92 : vector<2x32xf32>
    %94 = arith.addf %91, %93 : vector<2x32xf32>
    %95 = math.tanh %94 : vector<2x32xf32>
    %cst_24 = arith.constant 1.000000e+00 : f32
    %96 = vector.broadcast %cst_24 : f32 to vector<2x32xf32>
    %97 = arith.subf %96, %90 : vector<2x32xf32>
    %98 = arith.mulf %97, %95 : vector<2x32xf32>
    %99 = arith.mulf %90, %69 : vector<2x32xf32>
    %100 = arith.addf %98, %99 : vector<2x32xf32>
    %c4 = arith.constant 4 : index
    %c0_25 = arith.constant 0 : index
    %101 = vector.load %arg10[%c4, %c0_25] : memref<16x32xf32, #tpu.memory_space<vmem>>, vector<2x32xf32>
    tpu.vector_store %arg10[%c4, %c0_25], %100 {strides = array<i32>} : memref<16x32xf32, #tpu.memory_space<vmem>>, vector<2x32xf32>,
    %102 = vector.extract_strided_slice %7 {offsets = [6, 0], sizes = [2, 96], strides = [1, 1]} : vector<16x96xf32> to vector<2x96xf32>
    %cst_26 = arith.constant dense<0.000000e+00> : vector<2x96xf32>
    %103 = tpu.matmul %100, %2, %cst_26 {dimension_numbers = #tpu.dot_dimension_numbers<[1], [0], [0], [1], [0, 0, 1, 1], [], []>} : vector<2x32xf32>, vector<32x96xf32>, vector<2x96xf32> -> vector<2x96xf32>
    %104 = vector.broadcast %4 : vector<1x96xf32> to vector<2x96xf32>
    %105 = arith.addf %103, %104 : vector<2x96xf32>
    %106 = vector.extract_strided_slice %102 {offsets = [0, 0], sizes = [2, 32], strides = [1, 1]} : vector<2x96xf32> to vector<2x32xf32>
    %107 = vector.extract_strided_slice %105 {offsets = [0, 0], sizes = [2, 32], strides = [1, 1]} : vector<2x96xf32> to vector<2x32xf32>
    %108 = arith.addf %106, %107 : vector<2x32xf32>
    %109 = arith.negf %108 : vector<2x32xf32>
    %110 = math.exp %109 : vector<2x32xf32>
    %cst_27 = arith.constant 1.000000e+00 : f32
    %111 = vector.broadcast %cst_27 : f32 to vector<2x32xf32>
    %112 = arith.addf %111, %110 : vector<2x32xf32>
    %113 = arith.divf %111, %112 : vector<2x32xf32>
    %114 = vector.extract_strided_slice %102 {offsets = [0, 32], sizes = [2, 32], strides = [1, 1]} : vector<2x96xf32> to vector<2x32xf32>
    %115 = vector.extract_strided_slice %105 {offsets = [0, 32], sizes = [2, 32], strides = [1, 1]} : vector<2x96xf32> to vector<2x32xf32>
    %116 = arith.addf %114, %115 : vector<2x32xf32>
    %117 = arith.negf %116 : vector<2x32xf32>
    %118 = math.exp %117 : vector<2x32xf32>
    %cst_28 = arith.constant 1.000000e+00 : f32
    %119 = vector.broadcast %cst_28 : f32 to vector<2x32xf32>
    %120 = arith.addf %119, %118 : vector<2x32xf32>
    %121 = arith.divf %119, %120 : vector<2x32xf32>
    %122 = vector.extract_strided_slice %102 {offsets = [0, 64], sizes = [2, 32], strides = [1, 1]} : vector<2x96xf32> to vector<2x32xf32>
    %123 = vector.extract_strided_slice %105 {offsets = [0, 64], sizes = [2, 32], strides = [1, 1]} : vector<2x96xf32> to vector<2x32xf32>
    %124 = arith.mulf %113, %123 : vector<2x32xf32>
    %125 = arith.addf %122, %124 : vector<2x32xf32>
    %126 = math.tanh %125 : vector<2x32xf32>
    %cst_29 = arith.constant 1.000000e+00 : f32
    %127 = vector.broadcast %cst_29 : f32 to vector<2x32xf32>
    %128 = arith.subf %127, %121 : vector<2x32xf32>
    %129 = arith.mulf %128, %126 : vector<2x32xf32>
    %130 = arith.mulf %121, %100 : vector<2x32xf32>
    %131 = arith.addf %129, %130 : vector<2x32xf32>
    %c6 = arith.constant 6 : index
    %c0_30 = arith.constant 0 : index
    %132 = vector.load %arg10[%c6, %c0_30] : memref<16x32xf32, #tpu.memory_space<vmem>>, vector<2x32xf32>
    tpu.vector_store %arg10[%c6, %c0_30], %131 {strides = array<i32>} : memref<16x32xf32, #tpu.memory_space<vmem>>, vector<2x32xf32>,
    %133 = vector.extract_strided_slice %7 {offsets = [8, 0], sizes = [2, 96], strides = [1, 1]} : vector<16x96xf32> to vector<2x96xf32>
    %cst_31 = arith.constant dense<0.000000e+00> : vector<2x96xf32>
    %134 = tpu.matmul %131, %2, %cst_31 {dimension_numbers = #tpu.dot_dimension_numbers<[1], [0], [0], [1], [0, 0, 1, 1], [], []>} : vector<2x32xf32>, vector<32x96xf32>, vector<2x96xf32> -> vector<2x96xf32>
    %135 = vector.broadcast %4 : vector<1x96xf32> to vector<2x96xf32>
    %136 = arith.addf %134, %135 : vector<2x96xf32>
    %137 = vector.extract_strided_slice %133 {offsets = [0, 0], sizes = [2, 32], strides = [1, 1]} : vector<2x96xf32> to vector<2x32xf32>
    %138 = vector.extract_strided_slice %136 {offsets = [0, 0], sizes = [2, 32], strides = [1, 1]} : vector<2x96xf32> to vector<2x32xf32>
    %139 = arith.addf %137, %138 : vector<2x32xf32>
    %140 = arith.negf %139 : vector<2x32xf32>
    %141 = math.exp %140 : vector<2x32xf32>
    %cst_32 = arith.constant 1.000000e+00 : f32
    %142 = vector.broadcast %cst_32 : f32 to vector<2x32xf32>
    %143 = arith.addf %142, %141 : vector<2x32xf32>
    %144 = arith.divf %142, %143 : vector<2x32xf32>
    %145 = vector.extract_strided_slice %133 {offsets = [0, 32], sizes = [2, 32], strides = [1, 1]} : vector<2x96xf32> to vector<2x32xf32>
    %146 = vector.extract_strided_slice %136 {offsets = [0, 32], sizes = [2, 32], strides = [1, 1]} : vector<2x96xf32> to vector<2x32xf32>
    %147 = arith.addf %145, %146 : vector<2x32xf32>
    %148 = arith.negf %147 : vector<2x32xf32>
    %149 = math.exp %148 : vector<2x32xf32>
    %cst_33 = arith.constant 1.000000e+00 : f32
    %150 = vector.broadcast %cst_33 : f32 to vector<2x32xf32>
    %151 = arith.addf %150, %149 : vector<2x32xf32>
    %152 = arith.divf %150, %151 : vector<2x32xf32>
    %153 = vector.extract_strided_slice %133 {offsets = [0, 64], sizes = [2, 32], strides = [1, 1]} : vector<2x96xf32> to vector<2x32xf32>
    %154 = vector.extract_strided_slice %136 {offsets = [0, 64], sizes = [2, 32], strides = [1, 1]} : vector<2x96xf32> to vector<2x32xf32>
    %155 = arith.mulf %144, %154 : vector<2x32xf32>
    %156 = arith.addf %153, %155 : vector<2x32xf32>
    %157 = math.tanh %156 : vector<2x32xf32>
    %cst_34 = arith.constant 1.000000e+00 : f32
    %158 = vector.broadcast %cst_34 : f32 to vector<2x32xf32>
    %159 = arith.subf %158, %152 : vector<2x32xf32>
    %160 = arith.mulf %159, %157 : vector<2x32xf32>
    %161 = arith.mulf %152, %131 : vector<2x32xf32>
    %162 = arith.addf %160, %161 : vector<2x32xf32>
    %c8 = arith.constant 8 : index
    %c0_35 = arith.constant 0 : index
    %163 = vector.load %arg10[%c8, %c0_35] : memref<16x32xf32, #tpu.memory_space<vmem>>, vector<2x32xf32>
    tpu.vector_store %arg10[%c8, %c0_35], %162 {strides = array<i32>} : memref<16x32xf32, #tpu.memory_space<vmem>>, vector<2x32xf32>,
    %164 = vector.extract_strided_slice %7 {offsets = [10, 0], sizes = [2, 96], strides = [1, 1]} : vector<16x96xf32> to vector<2x96xf32>
    %cst_36 = arith.constant dense<0.000000e+00> : vector<2x96xf32>
    %165 = tpu.matmul %162, %2, %cst_36 {dimension_numbers = #tpu.dot_dimension_numbers<[1], [0], [0], [1], [0, 0, 1, 1], [], []>} : vector<2x32xf32>, vector<32x96xf32>, vector<2x96xf32> -> vector<2x96xf32>
    %166 = vector.broadcast %4 : vector<1x96xf32> to vector<2x96xf32>
    %167 = arith.addf %165, %166 : vector<2x96xf32>
    %168 = vector.extract_strided_slice %164 {offsets = [0, 0], sizes = [2, 32], strides = [1, 1]} : vector<2x96xf32> to vector<2x32xf32>
    %169 = vector.extract_strided_slice %167 {offsets = [0, 0], sizes = [2, 32], strides = [1, 1]} : vector<2x96xf32> to vector<2x32xf32>
    %170 = arith.addf %168, %169 : vector<2x32xf32>
    %171 = arith.negf %170 : vector<2x32xf32>
    %172 = math.exp %171 : vector<2x32xf32>
    %cst_37 = arith.constant 1.000000e+00 : f32
    %173 = vector.broadcast %cst_37 : f32 to vector<2x32xf32>
    %174 = arith.addf %173, %172 : vector<2x32xf32>
    %175 = arith.divf %173, %174 : vector<2x32xf32>
    %176 = vector.extract_strided_slice %164 {offsets = [0, 32], sizes = [2, 32], strides = [1, 1]} : vector<2x96xf32> to vector<2x32xf32>
    %177 = vector.extract_strided_slice %167 {offsets = [0, 32], sizes = [2, 32], strides = [1, 1]} : vector<2x96xf32> to vector<2x32xf32>
    %178 = arith.addf %176, %177 : vector<2x32xf32>
    %179 = arith.negf %178 : vector<2x32xf32>
    %180 = math.exp %179 : vector<2x32xf32>
    %cst_38 = arith.constant 1.000000e+00 : f32
    %181 = vector.broadcast %cst_38 : f32 to vector<2x32xf32>
    %182 = arith.addf %181, %180 : vector<2x32xf32>
    %183 = arith.divf %181, %182 : vector<2x32xf32>
    %184 = vector.extract_strided_slice %164 {offsets = [0, 64], sizes = [2, 32], strides = [1, 1]} : vector<2x96xf32> to vector<2x32xf32>
    %185 = vector.extract_strided_slice %167 {offsets = [0, 64], sizes = [2, 32], strides = [1, 1]} : vector<2x96xf32> to vector<2x32xf32>
    %186 = arith.mulf %175, %185 : vector<2x32xf32>
    %187 = arith.addf %184, %186 : vector<2x32xf32>
    %188 = math.tanh %187 : vector<2x32xf32>
    %cst_39 = arith.constant 1.000000e+00 : f32
    %189 = vector.broadcast %cst_39 : f32 to vector<2x32xf32>
    %190 = arith.subf %189, %183 : vector<2x32xf32>
    %191 = arith.mulf %190, %188 : vector<2x32xf32>
    %192 = arith.mulf %183, %162 : vector<2x32xf32>
    %193 = arith.addf %191, %192 : vector<2x32xf32>
    %c10 = arith.constant 10 : index
    %c0_40 = arith.constant 0 : index
    %194 = vector.load %arg10[%c10, %c0_40] : memref<16x32xf32, #tpu.memory_space<vmem>>, vector<2x32xf32>
    tpu.vector_store %arg10[%c10, %c0_40], %193 {strides = array<i32>} : memref<16x32xf32, #tpu.memory_space<vmem>>, vector<2x32xf32>,
    %195 = vector.extract_strided_slice %7 {offsets = [12, 0], sizes = [2, 96], strides = [1, 1]} : vector<16x96xf32> to vector<2x96xf32>
    %cst_41 = arith.constant dense<0.000000e+00> : vector<2x96xf32>
    %196 = tpu.matmul %193, %2, %cst_41 {dimension_numbers = #tpu.dot_dimension_numbers<[1], [0], [0], [1], [0, 0, 1, 1], [], []>} : vector<2x32xf32>, vector<32x96xf32>, vector<2x96xf32> -> vector<2x96xf32>
    %197 = vector.broadcast %4 : vector<1x96xf32> to vector<2x96xf32>
    %198 = arith.addf %196, %197 : vector<2x96xf32>
    %199 = vector.extract_strided_slice %195 {offsets = [0, 0], sizes = [2, 32], strides = [1, 1]} : vector<2x96xf32> to vector<2x32xf32>
    %200 = vector.extract_strided_slice %198 {offsets = [0, 0], sizes = [2, 32], strides = [1, 1]} : vector<2x96xf32> to vector<2x32xf32>
    %201 = arith.addf %199, %200 : vector<2x32xf32>
    %202 = arith.negf %201 : vector<2x32xf32>
    %203 = math.exp %202 : vector<2x32xf32>
    %cst_42 = arith.constant 1.000000e+00 : f32
    %204 = vector.broadcast %cst_42 : f32 to vector<2x32xf32>
    %205 = arith.addf %204, %203 : vector<2x32xf32>
    %206 = arith.divf %204, %205 : vector<2x32xf32>
    %207 = vector.extract_strided_slice %195 {offsets = [0, 32], sizes = [2, 32], strides = [1, 1]} : vector<2x96xf32> to vector<2x32xf32>
    %208 = vector.extract_strided_slice %198 {offsets = [0, 32], sizes = [2, 32], strides = [1, 1]} : vector<2x96xf32> to vector<2x32xf32>
    %209 = arith.addf %207, %208 : vector<2x32xf32>
    %210 = arith.negf %209 : vector<2x32xf32>
    %211 = math.exp %210 : vector<2x32xf32>
    %cst_43 = arith.constant 1.000000e+00 : f32
    %212 = vector.broadcast %cst_43 : f32 to vector<2x32xf32>
    %213 = arith.addf %212, %211 : vector<2x32xf32>
    %214 = arith.divf %212, %213 : vector<2x32xf32>
    %215 = vector.extract_strided_slice %195 {offsets = [0, 64], sizes = [2, 32], strides = [1, 1]} : vector<2x96xf32> to vector<2x32xf32>
    %216 = vector.extract_strided_slice %198 {offsets = [0, 64], sizes = [2, 32], strides = [1, 1]} : vector<2x96xf32> to vector<2x32xf32>
    %217 = arith.mulf %206, %216 : vector<2x32xf32>
    %218 = arith.addf %215, %217 : vector<2x32xf32>
    %219 = math.tanh %218 : vector<2x32xf32>
    %cst_44 = arith.constant 1.000000e+00 : f32
    %220 = vector.broadcast %cst_44 : f32 to vector<2x32xf32>
    %221 = arith.subf %220, %214 : vector<2x32xf32>
    %222 = arith.mulf %221, %219 : vector<2x32xf32>
    %223 = arith.mulf %214, %193 : vector<2x32xf32>
    %224 = arith.addf %222, %223 : vector<2x32xf32>
    %c12 = arith.constant 12 : index
    %c0_45 = arith.constant 0 : index
    %225 = vector.load %arg10[%c12, %c0_45] : memref<16x32xf32, #tpu.memory_space<vmem>>, vector<2x32xf32>
    tpu.vector_store %arg10[%c12, %c0_45], %224 {strides = array<i32>} : memref<16x32xf32, #tpu.memory_space<vmem>>, vector<2x32xf32>,
    %226 = vector.extract_strided_slice %7 {offsets = [14, 0], sizes = [2, 96], strides = [1, 1]} : vector<16x96xf32> to vector<2x96xf32>
    %cst_46 = arith.constant dense<0.000000e+00> : vector<2x96xf32>
    %227 = tpu.matmul %224, %2, %cst_46 {dimension_numbers = #tpu.dot_dimension_numbers<[1], [0], [0], [1], [0, 0, 1, 1], [], []>} : vector<2x32xf32>, vector<32x96xf32>, vector<2x96xf32> -> vector<2x96xf32>
    %228 = vector.broadcast %4 : vector<1x96xf32> to vector<2x96xf32>
    %229 = arith.addf %227, %228 : vector<2x96xf32>
    %230 = vector.extract_strided_slice %226 {offsets = [0, 0], sizes = [2, 32], strides = [1, 1]} : vector<2x96xf32> to vector<2x32xf32>
    %231 = vector.extract_strided_slice %229 {offsets = [0, 0], sizes = [2, 32], strides = [1, 1]} : vector<2x96xf32> to vector<2x32xf32>
    %232 = arith.addf %230, %231 : vector<2x32xf32>
    %233 = arith.negf %232 : vector<2x32xf32>
    %234 = math.exp %233 : vector<2x32xf32>
    %cst_47 = arith.constant 1.000000e+00 : f32
    %235 = vector.broadcast %cst_47 : f32 to vector<2x32xf32>
    %236 = arith.addf %235, %234 : vector<2x32xf32>
    %237 = arith.divf %235, %236 : vector<2x32xf32>
    %238 = vector.extract_strided_slice %226 {offsets = [0, 32], sizes = [2, 32], strides = [1, 1]} : vector<2x96xf32> to vector<2x32xf32>
    %239 = vector.extract_strided_slice %229 {offsets = [0, 32], sizes = [2, 32], strides = [1, 1]} : vector<2x96xf32> to vector<2x32xf32>
    %240 = arith.addf %238, %239 : vector<2x32xf32>
    %241 = arith.negf %240 : vector<2x32xf32>
    %242 = math.exp %241 : vector<2x32xf32>
    %cst_48 = arith.constant 1.000000e+00 : f32
    %243 = vector.broadcast %cst_48 : f32 to vector<2x32xf32>
    %244 = arith.addf %243, %242 : vector<2x32xf32>
    %245 = arith.divf %243, %244 : vector<2x32xf32>
    %246 = vector.extract_strided_slice %226 {offsets = [0, 64], sizes = [2, 32], strides = [1, 1]} : vector<2x96xf32> to vector<2x32xf32>
    %247 = vector.extract_strided_slice %229 {offsets = [0, 64], sizes = [2, 32], strides = [1, 1]} : vector<2x96xf32> to vector<2x32xf32>
    %248 = arith.mulf %237, %247 : vector<2x32xf32>
    %249 = arith.addf %246, %248 : vector<2x32xf32>
    %250 = math.tanh %249 : vector<2x32xf32>
    %cst_49 = arith.constant 1.000000e+00 : f32
    %251 = vector.broadcast %cst_49 : f32 to vector<2x32xf32>
    %252 = arith.subf %251, %245 : vector<2x32xf32>
    %253 = arith.mulf %252, %250 : vector<2x32xf32>
    %254 = arith.mulf %245, %224 : vector<2x32xf32>
    %255 = arith.addf %253, %254 : vector<2x32xf32>
    %c14 = arith.constant 14 : index
    %c0_50 = arith.constant 0 : index
    %256 = vector.load %arg10[%c14, %c0_50] : memref<16x32xf32, #tpu.memory_space<vmem>>, vector<2x32xf32>
    tpu.vector_store %arg10[%c14, %c0_50], %255 {strides = array<i32>} : memref<16x32xf32, #tpu.memory_space<vmem>>, vector<2x32xf32>,
    %c0_51 = arith.constant 0 : index
    %c0_52 = arith.constant 0 : index
    %c0_53 = arith.constant 0 : index
    %257 = vector.load %arg9[%c0_51, %c0_52, %c0_53] : memref<2x2x32xf32, #tpu.memory_space<vmem>>, vector<1x2x32xf32>
    %258 = vector.shape_cast %257 : vector<1x2x32xf32> to vector<2x32xf32>
    %259 = vector.shape_cast %255 : vector<2x32xf32> to vector<1x2x32xf32>
    tpu.vector_store %arg9[%c0_51, %c0_52, %c0_53], %259 {strides = array<i32>} : memref<2x2x32xf32, #tpu.memory_space<vmem>>, vector<1x2x32xf32>,
    %c0_54 = arith.constant 0 : index
    %c0_55 = arith.constant 0 : index
    %260 = vector.load %arg10[%c0_54, %c0_55] : memref<16x32xf32, #tpu.memory_space<vmem>>, vector<16x32xf32>
    %c0_56 = arith.constant 0 : index
    %c0_57 = arith.constant 0 : index
    %261 = vector.load %arg5[%c0_56, %c0_57] : memref<32x96xf32, #tpu.memory_space<vmem>>, vector<32x96xf32>
    %c0_58 = arith.constant 0 : index
    %c0_59 = arith.constant 0 : index
    %262 = vector.load %arg6[%c0_58, %c0_59] : memref<32x96xf32, #tpu.memory_space<vmem>>, vector<32x96xf32>
    %c0_60 = arith.constant 0 : index
    %c0_61 = arith.constant 0 : index
    %263 = vector.load %arg7[%c0_60, %c0_61] : memref<1x96xf32, #tpu.memory_space<vmem>>, vector<1x96xf32>
    %c0_62 = arith.constant 0 : index
    %c0_63 = arith.constant 0 : index
    %264 = vector.load %arg8[%c0_62, %c0_63] : memref<1x96xf32, #tpu.memory_space<vmem>>, vector<1x96xf32>
    %cst_64 = arith.constant dense<0.000000e+00> : vector<16x96xf32>
    %265 = tpu.matmul %260, %261, %cst_64 {dimension_numbers = #tpu.dot_dimension_numbers<[1], [0], [0], [1], [0, 0, 1, 1], [], []>} : vector<16x32xf32>, vector<32x96xf32>, vector<16x96xf32> -> vector<16x96xf32>
    %266 = vector.broadcast %263 : vector<1x96xf32> to vector<16x96xf32>
    %267 = arith.addf %265, %266 : vector<16x96xf32>
    %cst_65 = arith.constant 0.000000e+00 : f32
    %268 = vector.broadcast %cst_65 : f32 to vector<2x32xf32>
    %269 = vector.extract_strided_slice %267 {offsets = [0, 0], sizes = [2, 96], strides = [1, 1]} : vector<16x96xf32> to vector<2x96xf32>
    %cst_66 = arith.constant dense<0.000000e+00> : vector<2x96xf32>
    %270 = tpu.matmul %268, %262, %cst_66 {dimension_numbers = #tpu.dot_dimension_numbers<[1], [0], [0], [1], [0, 0, 1, 1], [], []>} : vector<2x32xf32>, vector<32x96xf32>, vector<2x96xf32> -> vector<2x96xf32>
    %271 = vector.broadcast %264 : vector<1x96xf32> to vector<2x96xf32>
    %272 = arith.addf %270, %271 : vector<2x96xf32>
    %273 = vector.extract_strided_slice %269 {offsets = [0, 0], sizes = [2, 32], strides = [1, 1]} : vector<2x96xf32> to vector<2x32xf32>
    %274 = vector.extract_strided_slice %272 {offsets = [0, 0], sizes = [2, 32], strides = [1, 1]} : vector<2x96xf32> to vector<2x32xf32>
    %275 = arith.addf %273, %274 : vector<2x32xf32>
    %276 = arith.negf %275 : vector<2x32xf32>
    %277 = math.exp %276 : vector<2x32xf32>
    %cst_67 = arith.constant 1.000000e+00 : f32
    %278 = vector.broadcast %cst_67 : f32 to vector<2x32xf32>
    %279 = arith.addf %278, %277 : vector<2x32xf32>
    %280 = arith.divf %278, %279 : vector<2x32xf32>
    %281 = vector.extract_strided_slice %269 {offsets = [0, 32], sizes = [2, 32], strides = [1, 1]} : vector<2x96xf32> to vector<2x32xf32>
    %282 = vector.extract_strided_slice %272 {offsets = [0, 32], sizes = [2, 32], strides = [1, 1]} : vector<2x96xf32> to vector<2x32xf32>
    %283 = arith.addf %281, %282 : vector<2x32xf32>
    %284 = arith.negf %283 : vector<2x32xf32>
    %285 = math.exp %284 : vector<2x32xf32>
    %cst_68 = arith.constant 1.000000e+00 : f32
    %286 = vector.broadcast %cst_68 : f32 to vector<2x32xf32>
    %287 = arith.addf %286, %285 : vector<2x32xf32>
    %288 = arith.divf %286, %287 : vector<2x32xf32>
    %289 = vector.extract_strided_slice %269 {offsets = [0, 64], sizes = [2, 32], strides = [1, 1]} : vector<2x96xf32> to vector<2x32xf32>
    %290 = vector.extract_strided_slice %272 {offsets = [0, 64], sizes = [2, 32], strides = [1, 1]} : vector<2x96xf32> to vector<2x32xf32>
    %291 = arith.mulf %280, %290 : vector<2x32xf32>
    %292 = arith.addf %289, %291 : vector<2x32xf32>
    %293 = math.tanh %292 : vector<2x32xf32>
    %cst_69 = arith.constant 1.000000e+00 : f32
    %294 = vector.broadcast %cst_69 : f32 to vector<2x32xf32>
    %295 = arith.subf %294, %288 : vector<2x32xf32>
    %296 = arith.mulf %295, %293 : vector<2x32xf32>
    %297 = arith.mulf %288, %268 : vector<2x32xf32>
    %298 = arith.addf %296, %297 : vector<2x32xf32>
    %c0_70 = arith.constant 0 : index
    %c0_71 = arith.constant 0 : index
    %299 = vector.load %arg10[%c0_70, %c0_71] : memref<16x32xf32, #tpu.memory_space<vmem>>, vector<2x32xf32>
    tpu.vector_store %arg10[%c0_70, %c0_71], %298 {strides = array<i32>} : memref<16x32xf32, #tpu.memory_space<vmem>>, vector<2x32xf32>,
    %300 = vector.extract_strided_slice %267 {offsets = [2, 0], sizes = [2, 96], strides = [1, 1]} : vector<16x96xf32> to vector<2x96xf32>
    %cst_72 = arith.constant dense<0.000000e+00> : vector<2x96xf32>
    %301 = tpu.matmul %298, %262, %cst_72 {dimension_numbers = #tpu.dot_dimension_numbers<[1], [0], [0], [1], [0, 0, 1, 1], [], []>} : vector<2x32xf32>, vector<32x96xf32>, vector<2x96xf32> -> vector<2x96xf32>
    %302 = vector.broadcast %264 : vector<1x96xf32> to vector<2x96xf32>
    %303 = arith.addf %301, %302 : vector<2x96xf32>
    %304 = vector.extract_strided_slice %300 {offsets = [0, 0], sizes = [2, 32], strides = [1, 1]} : vector<2x96xf32> to vector<2x32xf32>
    %305 = vector.extract_strided_slice %303 {offsets = [0, 0], sizes = [2, 32], strides = [1, 1]} : vector<2x96xf32> to vector<2x32xf32>
    %306 = arith.addf %304, %305 : vector<2x32xf32>
    %307 = arith.negf %306 : vector<2x32xf32>
    %308 = math.exp %307 : vector<2x32xf32>
    %cst_73 = arith.constant 1.000000e+00 : f32
    %309 = vector.broadcast %cst_73 : f32 to vector<2x32xf32>
    %310 = arith.addf %309, %308 : vector<2x32xf32>
    %311 = arith.divf %309, %310 : vector<2x32xf32>
    %312 = vector.extract_strided_slice %300 {offsets = [0, 32], sizes = [2, 32], strides = [1, 1]} : vector<2x96xf32> to vector<2x32xf32>
    %313 = vector.extract_strided_slice %303 {offsets = [0, 32], sizes = [2, 32], strides = [1, 1]} : vector<2x96xf32> to vector<2x32xf32>
    %314 = arith.addf %312, %313 : vector<2x32xf32>
    %315 = arith.negf %314 : vector<2x32xf32>
    %316 = math.exp %315 : vector<2x32xf32>
    %cst_74 = arith.constant 1.000000e+00 : f32
    %317 = vector.broadcast %cst_74 : f32 to vector<2x32xf32>
    %318 = arith.addf %317, %316 : vector<2x32xf32>
    %319 = arith.divf %317, %318 : vector<2x32xf32>
    %320 = vector.extract_strided_slice %300 {offsets = [0, 64], sizes = [2, 32], strides = [1, 1]} : vector<2x96xf32> to vector<2x32xf32>
    %321 = vector.extract_strided_slice %303 {offsets = [0, 64], sizes = [2, 32], strides = [1, 1]} : vector<2x96xf32> to vector<2x32xf32>
    %322 = arith.mulf %311, %321 : vector<2x32xf32>
    %323 = arith.addf %320, %322 : vector<2x32xf32>
    %324 = math.tanh %323 : vector<2x32xf32>
    %cst_75 = arith.constant 1.000000e+00 : f32
    %325 = vector.broadcast %cst_75 : f32 to vector<2x32xf32>
    %326 = arith.subf %325, %319 : vector<2x32xf32>
    %327 = arith.mulf %326, %324 : vector<2x32xf32>
    %328 = arith.mulf %319, %298 : vector<2x32xf32>
    %329 = arith.addf %327, %328 : vector<2x32xf32>
    %c2_76 = arith.constant 2 : index
    %c0_77 = arith.constant 0 : index
    %330 = vector.load %arg10[%c2_76, %c0_77] : memref<16x32xf32, #tpu.memory_space<vmem>>, vector<2x32xf32>
    tpu.vector_store %arg10[%c2_76, %c0_77], %329 {strides = array<i32>} : memref<16x32xf32, #tpu.memory_space<vmem>>, vector<2x32xf32>,
    %331 = vector.extract_strided_slice %267 {offsets = [4, 0], sizes = [2, 96], strides = [1, 1]} : vector<16x96xf32> to vector<2x96xf32>
    %cst_78 = arith.constant dense<0.000000e+00> : vector<2x96xf32>
    %332 = tpu.matmul %329, %262, %cst_78 {dimension_numbers = #tpu.dot_dimension_numbers<[1], [0], [0], [1], [0, 0, 1, 1], [], []>} : vector<2x32xf32>, vector<32x96xf32>, vector<2x96xf32> -> vector<2x96xf32>
    %333 = vector.broadcast %264 : vector<1x96xf32> to vector<2x96xf32>
    %334 = arith.addf %332, %333 : vector<2x96xf32>
    %335 = vector.extract_strided_slice %331 {offsets = [0, 0], sizes = [2, 32], strides = [1, 1]} : vector<2x96xf32> to vector<2x32xf32>
    %336 = vector.extract_strided_slice %334 {offsets = [0, 0], sizes = [2, 32], strides = [1, 1]} : vector<2x96xf32> to vector<2x32xf32>
    %337 = arith.addf %335, %336 : vector<2x32xf32>
    %338 = arith.negf %337 : vector<2x32xf32>
    %339 = math.exp %338 : vector<2x32xf32>
    %cst_79 = arith.constant 1.000000e+00 : f32
    %340 = vector.broadcast %cst_79 : f32 to vector<2x32xf32>
    %341 = arith.addf %340, %339 : vector<2x32xf32>
    %342 = arith.divf %340, %341 : vector<2x32xf32>
    %343 = vector.extract_strided_slice %331 {offsets = [0, 32], sizes = [2, 32], strides = [1, 1]} : vector<2x96xf32> to vector<2x32xf32>
    %344 = vector.extract_strided_slice %334 {offsets = [0, 32], sizes = [2, 32], strides = [1, 1]} : vector<2x96xf32> to vector<2x32xf32>
    %345 = arith.addf %343, %344 : vector<2x32xf32>
    %346 = arith.negf %345 : vector<2x32xf32>
    %347 = math.exp %346 : vector<2x32xf32>
    %cst_80 = arith.constant 1.000000e+00 : f32
    %348 = vector.broadcast %cst_80 : f32 to vector<2x32xf32>
    %349 = arith.addf %348, %347 : vector<2x32xf32>
    %350 = arith.divf %348, %349 : vector<2x32xf32>
    %351 = vector.extract_strided_slice %331 {offsets = [0, 64], sizes = [2, 32], strides = [1, 1]} : vector<2x96xf32> to vector<2x32xf32>
    %352 = vector.extract_strided_slice %334 {offsets = [0, 64], sizes = [2, 32], strides = [1, 1]} : vector<2x96xf32> to vector<2x32xf32>
    %353 = arith.mulf %342, %352 : vector<2x32xf32>
    %354 = arith.addf %351, %353 : vector<2x32xf32>
    %355 = math.tanh %354 : vector<2x32xf32>
    %cst_81 = arith.constant 1.000000e+00 : f32
    %356 = vector.broadcast %cst_81 : f32 to vector<2x32xf32>
    %357 = arith.subf %356, %350 : vector<2x32xf32>
    %358 = arith.mulf %357, %355 : vector<2x32xf32>
    %359 = arith.mulf %350, %329 : vector<2x32xf32>
    %360 = arith.addf %358, %359 : vector<2x32xf32>
    %c4_82 = arith.constant 4 : index
    %c0_83 = arith.constant 0 : index
    %361 = vector.load %arg10[%c4_82, %c0_83] : memref<16x32xf32, #tpu.memory_space<vmem>>, vector<2x32xf32>
    tpu.vector_store %arg10[%c4_82, %c0_83], %360 {strides = array<i32>} : memref<16x32xf32, #tpu.memory_space<vmem>>, vector<2x32xf32>,
    %362 = vector.extract_strided_slice %267 {offsets = [6, 0], sizes = [2, 96], strides = [1, 1]} : vector<16x96xf32> to vector<2x96xf32>
    %cst_84 = arith.constant dense<0.000000e+00> : vector<2x96xf32>
    %363 = tpu.matmul %360, %262, %cst_84 {dimension_numbers = #tpu.dot_dimension_numbers<[1], [0], [0], [1], [0, 0, 1, 1], [], []>} : vector<2x32xf32>, vector<32x96xf32>, vector<2x96xf32> -> vector<2x96xf32>
    %364 = vector.broadcast %264 : vector<1x96xf32> to vector<2x96xf32>
    %365 = arith.addf %363, %364 : vector<2x96xf32>
    %366 = vector.extract_strided_slice %362 {offsets = [0, 0], sizes = [2, 32], strides = [1, 1]} : vector<2x96xf32> to vector<2x32xf32>
    %367 = vector.extract_strided_slice %365 {offsets = [0, 0], sizes = [2, 32], strides = [1, 1]} : vector<2x96xf32> to vector<2x32xf32>
    %368 = arith.addf %366, %367 : vector<2x32xf32>
    %369 = arith.negf %368 : vector<2x32xf32>
    %370 = math.exp %369 : vector<2x32xf32>
    %cst_85 = arith.constant 1.000000e+00 : f32
    %371 = vector.broadcast %cst_85 : f32 to vector<2x32xf32>
    %372 = arith.addf %371, %370 : vector<2x32xf32>
    %373 = arith.divf %371, %372 : vector<2x32xf32>
    %374 = vector.extract_strided_slice %362 {offsets = [0, 32], sizes = [2, 32], strides = [1, 1]} : vector<2x96xf32> to vector<2x32xf32>
    %375 = vector.extract_strided_slice %365 {offsets = [0, 32], sizes = [2, 32], strides = [1, 1]} : vector<2x96xf32> to vector<2x32xf32>
    %376 = arith.addf %374, %375 : vector<2x32xf32>
    %377 = arith.negf %376 : vector<2x32xf32>
    %378 = math.exp %377 : vector<2x32xf32>
    %cst_86 = arith.constant 1.000000e+00 : f32
    %379 = vector.broadcast %cst_86 : f32 to vector<2x32xf32>
    %380 = arith.addf %379, %378 : vector<2x32xf32>
    %381 = arith.divf %379, %380 : vector<2x32xf32>
    %382 = vector.extract_strided_slice %362 {offsets = [0, 64], sizes = [2, 32], strides = [1, 1]} : vector<2x96xf32> to vector<2x32xf32>
    %383 = vector.extract_strided_slice %365 {offsets = [0, 64], sizes = [2, 32], strides = [1, 1]} : vector<2x96xf32> to vector<2x32xf32>
    %384 = arith.mulf %373, %383 : vector<2x32xf32>
    %385 = arith.addf %382, %384 : vector<2x32xf32>
    %386 = math.tanh %385 : vector<2x32xf32>
    %cst_87 = arith.constant 1.000000e+00 : f32
    %387 = vector.broadcast %cst_87 : f32 to vector<2x32xf32>
    %388 = arith.subf %387, %381 : vector<2x32xf32>
    %389 = arith.mulf %388, %386 : vector<2x32xf32>
    %390 = arith.mulf %381, %360 : vector<2x32xf32>
    %391 = arith.addf %389, %390 : vector<2x32xf32>
    %c6_88 = arith.constant 6 : index
    %c0_89 = arith.constant 0 : index
    %392 = vector.load %arg10[%c6_88, %c0_89] : memref<16x32xf32, #tpu.memory_space<vmem>>, vector<2x32xf32>
    tpu.vector_store %arg10[%c6_88, %c0_89], %391 {strides = array<i32>} : memref<16x32xf32, #tpu.memory_space<vmem>>, vector<2x32xf32>,
    %393 = vector.extract_strided_slice %267 {offsets = [8, 0], sizes = [2, 96], strides = [1, 1]} : vector<16x96xf32> to vector<2x96xf32>
    %cst_90 = arith.constant dense<0.000000e+00> : vector<2x96xf32>
    %394 = tpu.matmul %391, %262, %cst_90 {dimension_numbers = #tpu.dot_dimension_numbers<[1], [0], [0], [1], [0, 0, 1, 1], [], []>} : vector<2x32xf32>, vector<32x96xf32>, vector<2x96xf32> -> vector<2x96xf32>
    %395 = vector.broadcast %264 : vector<1x96xf32> to vector<2x96xf32>
    %396 = arith.addf %394, %395 : vector<2x96xf32>
    %397 = vector.extract_strided_slice %393 {offsets = [0, 0], sizes = [2, 32], strides = [1, 1]} : vector<2x96xf32> to vector<2x32xf32>
    %398 = vector.extract_strided_slice %396 {offsets = [0, 0], sizes = [2, 32], strides = [1, 1]} : vector<2x96xf32> to vector<2x32xf32>
    %399 = arith.addf %397, %398 : vector<2x32xf32>
    %400 = arith.negf %399 : vector<2x32xf32>
    %401 = math.exp %400 : vector<2x32xf32>
    %cst_91 = arith.constant 1.000000e+00 : f32
    %402 = vector.broadcast %cst_91 : f32 to vector<2x32xf32>
    %403 = arith.addf %402, %401 : vector<2x32xf32>
    %404 = arith.divf %402, %403 : vector<2x32xf32>
    %405 = vector.extract_strided_slice %393 {offsets = [0, 32], sizes = [2, 32], strides = [1, 1]} : vector<2x96xf32> to vector<2x32xf32>
    %406 = vector.extract_strided_slice %396 {offsets = [0, 32], sizes = [2, 32], strides = [1, 1]} : vector<2x96xf32> to vector<2x32xf32>
    %407 = arith.addf %405, %406 : vector<2x32xf32>
    %408 = arith.negf %407 : vector<2x32xf32>
    %409 = math.exp %408 : vector<2x32xf32>
    %cst_92 = arith.constant 1.000000e+00 : f32
    %410 = vector.broadcast %cst_92 : f32 to vector<2x32xf32>
    %411 = arith.addf %410, %409 : vector<2x32xf32>
    %412 = arith.divf %410, %411 : vector<2x32xf32>
    %413 = vector.extract_strided_slice %393 {offsets = [0, 64], sizes = [2, 32], strides = [1, 1]} : vector<2x96xf32> to vector<2x32xf32>
    %414 = vector.extract_strided_slice %396 {offsets = [0, 64], sizes = [2, 32], strides = [1, 1]} : vector<2x96xf32> to vector<2x32xf32>
    %415 = arith.mulf %404, %414 : vector<2x32xf32>
    %416 = arith.addf %413, %415 : vector<2x32xf32>
    %417 = math.tanh %416 : vector<2x32xf32>
    %cst_93 = arith.constant 1.000000e+00 : f32
    %418 = vector.broadcast %cst_93 : f32 to vector<2x32xf32>
    %419 = arith.subf %418, %412 : vector<2x32xf32>
    %420 = arith.mulf %419, %417 : vector<2x32xf32>
    %421 = arith.mulf %412, %391 : vector<2x32xf32>
    %422 = arith.addf %420, %421 : vector<2x32xf32>
    %c8_94 = arith.constant 8 : index
    %c0_95 = arith.constant 0 : index
    %423 = vector.load %arg10[%c8_94, %c0_95] : memref<16x32xf32, #tpu.memory_space<vmem>>, vector<2x32xf32>
    tpu.vector_store %arg10[%c8_94, %c0_95], %422 {strides = array<i32>} : memref<16x32xf32, #tpu.memory_space<vmem>>, vector<2x32xf32>,
    %424 = vector.extract_strided_slice %267 {offsets = [10, 0], sizes = [2, 96], strides = [1, 1]} : vector<16x96xf32> to vector<2x96xf32>
    %cst_96 = arith.constant dense<0.000000e+00> : vector<2x96xf32>
    %425 = tpu.matmul %422, %262, %cst_96 {dimension_numbers = #tpu.dot_dimension_numbers<[1], [0], [0], [1], [0, 0, 1, 1], [], []>} : vector<2x32xf32>, vector<32x96xf32>, vector<2x96xf32> -> vector<2x96xf32>
    %426 = vector.broadcast %264 : vector<1x96xf32> to vector<2x96xf32>
    %427 = arith.addf %425, %426 : vector<2x96xf32>
    %428 = vector.extract_strided_slice %424 {offsets = [0, 0], sizes = [2, 32], strides = [1, 1]} : vector<2x96xf32> to vector<2x32xf32>
    %429 = vector.extract_strided_slice %427 {offsets = [0, 0], sizes = [2, 32], strides = [1, 1]} : vector<2x96xf32> to vector<2x32xf32>
    %430 = arith.addf %428, %429 : vector<2x32xf32>
    %431 = arith.negf %430 : vector<2x32xf32>
    %432 = math.exp %431 : vector<2x32xf32>
    %cst_97 = arith.constant 1.000000e+00 : f32
    %433 = vector.broadcast %cst_97 : f32 to vector<2x32xf32>
    %434 = arith.addf %433, %432 : vector<2x32xf32>
    %435 = arith.divf %433, %434 : vector<2x32xf32>
    %436 = vector.extract_strided_slice %424 {offsets = [0, 32], sizes = [2, 32], strides = [1, 1]} : vector<2x96xf32> to vector<2x32xf32>
    %437 = vector.extract_strided_slice %427 {offsets = [0, 32], sizes = [2, 32], strides = [1, 1]} : vector<2x96xf32> to vector<2x32xf32>
    %438 = arith.addf %436, %437 : vector<2x32xf32>
    %439 = arith.negf %438 : vector<2x32xf32>
    %440 = math.exp %439 : vector<2x32xf32>
    %cst_98 = arith.constant 1.000000e+00 : f32
    %441 = vector.broadcast %cst_98 : f32 to vector<2x32xf32>
    %442 = arith.addf %441, %440 : vector<2x32xf32>
    %443 = arith.divf %441, %442 : vector<2x32xf32>
    %444 = vector.extract_strided_slice %424 {offsets = [0, 64], sizes = [2, 32], strides = [1, 1]} : vector<2x96xf32> to vector<2x32xf32>
    %445 = vector.extract_strided_slice %427 {offsets = [0, 64], sizes = [2, 32], strides = [1, 1]} : vector<2x96xf32> to vector<2x32xf32>
    %446 = arith.mulf %435, %445 : vector<2x32xf32>
    %447 = arith.addf %444, %446 : vector<2x32xf32>
    %448 = math.tanh %447 : vector<2x32xf32>
    %cst_99 = arith.constant 1.000000e+00 : f32
    %449 = vector.broadcast %cst_99 : f32 to vector<2x32xf32>
    %450 = arith.subf %449, %443 : vector<2x32xf32>
    %451 = arith.mulf %450, %448 : vector<2x32xf32>
    %452 = arith.mulf %443, %422 : vector<2x32xf32>
    %453 = arith.addf %451, %452 : vector<2x32xf32>
    %c10_100 = arith.constant 10 : index
    %c0_101 = arith.constant 0 : index
    %454 = vector.load %arg10[%c10_100, %c0_101] : memref<16x32xf32, #tpu.memory_space<vmem>>, vector<2x32xf32>
    tpu.vector_store %arg10[%c10_100, %c0_101], %453 {strides = array<i32>} : memref<16x32xf32, #tpu.memory_space<vmem>>, vector<2x32xf32>,
    %455 = vector.extract_strided_slice %267 {offsets = [12, 0], sizes = [2, 96], strides = [1, 1]} : vector<16x96xf32> to vector<2x96xf32>
    %cst_102 = arith.constant dense<0.000000e+00> : vector<2x96xf32>
    %456 = tpu.matmul %453, %262, %cst_102 {dimension_numbers = #tpu.dot_dimension_numbers<[1], [0], [0], [1], [0, 0, 1, 1], [], []>} : vector<2x32xf32>, vector<32x96xf32>, vector<2x96xf32> -> vector<2x96xf32>
    %457 = vector.broadcast %264 : vector<1x96xf32> to vector<2x96xf32>
    %458 = arith.addf %456, %457 : vector<2x96xf32>
    %459 = vector.extract_strided_slice %455 {offsets = [0, 0], sizes = [2, 32], strides = [1, 1]} : vector<2x96xf32> to vector<2x32xf32>
    %460 = vector.extract_strided_slice %458 {offsets = [0, 0], sizes = [2, 32], strides = [1, 1]} : vector<2x96xf32> to vector<2x32xf32>
    %461 = arith.addf %459, %460 : vector<2x32xf32>
    %462 = arith.negf %461 : vector<2x32xf32>
    %463 = math.exp %462 : vector<2x32xf32>
    %cst_103 = arith.constant 1.000000e+00 : f32
    %464 = vector.broadcast %cst_103 : f32 to vector<2x32xf32>
    %465 = arith.addf %464, %463 : vector<2x32xf32>
    %466 = arith.divf %464, %465 : vector<2x32xf32>
    %467 = vector.extract_strided_slice %455 {offsets = [0, 32], sizes = [2, 32], strides = [1, 1]} : vector<2x96xf32> to vector<2x32xf32>
    %468 = vector.extract_strided_slice %458 {offsets = [0, 32], sizes = [2, 32], strides = [1, 1]} : vector<2x96xf32> to vector<2x32xf32>
    %469 = arith.addf %467, %468 : vector<2x32xf32>
    %470 = arith.negf %469 : vector<2x32xf32>
    %471 = math.exp %470 : vector<2x32xf32>
    %cst_104 = arith.constant 1.000000e+00 : f32
    %472 = vector.broadcast %cst_104 : f32 to vector<2x32xf32>
    %473 = arith.addf %472, %471 : vector<2x32xf32>
    %474 = arith.divf %472, %473 : vector<2x32xf32>
    %475 = vector.extract_strided_slice %455 {offsets = [0, 64], sizes = [2, 32], strides = [1, 1]} : vector<2x96xf32> to vector<2x32xf32>
    %476 = vector.extract_strided_slice %458 {offsets = [0, 64], sizes = [2, 32], strides = [1, 1]} : vector<2x96xf32> to vector<2x32xf32>
    %477 = arith.mulf %466, %476 : vector<2x32xf32>
    %478 = arith.addf %475, %477 : vector<2x32xf32>
    %479 = math.tanh %478 : vector<2x32xf32>
    %cst_105 = arith.constant 1.000000e+00 : f32
    %480 = vector.broadcast %cst_105 : f32 to vector<2x32xf32>
    %481 = arith.subf %480, %474 : vector<2x32xf32>
    %482 = arith.mulf %481, %479 : vector<2x32xf32>
    %483 = arith.mulf %474, %453 : vector<2x32xf32>
    %484 = arith.addf %482, %483 : vector<2x32xf32>
    %c12_106 = arith.constant 12 : index
    %c0_107 = arith.constant 0 : index
    %485 = vector.load %arg10[%c12_106, %c0_107] : memref<16x32xf32, #tpu.memory_space<vmem>>, vector<2x32xf32>
    tpu.vector_store %arg10[%c12_106, %c0_107], %484 {strides = array<i32>} : memref<16x32xf32, #tpu.memory_space<vmem>>, vector<2x32xf32>,
    %486 = vector.extract_strided_slice %267 {offsets = [14, 0], sizes = [2, 96], strides = [1, 1]} : vector<16x96xf32> to vector<2x96xf32>
    %cst_108 = arith.constant dense<0.000000e+00> : vector<2x96xf32>
    %487 = tpu.matmul %484, %262, %cst_108 {dimension_numbers = #tpu.dot_dimension_numbers<[1], [0], [0], [1], [0, 0, 1, 1], [], []>} : vector<2x32xf32>, vector<32x96xf32>, vector<2x96xf32> -> vector<2x96xf32>
    %488 = vector.broadcast %264 : vector<1x96xf32> to vector<2x96xf32>
    %489 = arith.addf %487, %488 : vector<2x96xf32>
    %490 = vector.extract_strided_slice %486 {offsets = [0, 0], sizes = [2, 32], strides = [1, 1]} : vector<2x96xf32> to vector<2x32xf32>
    %491 = vector.extract_strided_slice %489 {offsets = [0, 0], sizes = [2, 32], strides = [1, 1]} : vector<2x96xf32> to vector<2x32xf32>
    %492 = arith.addf %490, %491 : vector<2x32xf32>
    %493 = arith.negf %492 : vector<2x32xf32>
    %494 = math.exp %493 : vector<2x32xf32>
    %cst_109 = arith.constant 1.000000e+00 : f32
    %495 = vector.broadcast %cst_109 : f32 to vector<2x32xf32>
    %496 = arith.addf %495, %494 : vector<2x32xf32>
    %497 = arith.divf %495, %496 : vector<2x32xf32>
    %498 = vector.extract_strided_slice %486 {offsets = [0, 32], sizes = [2, 32], strides = [1, 1]} : vector<2x96xf32> to vector<2x32xf32>
    %499 = vector.extract_strided_slice %489 {offsets = [0, 32], sizes = [2, 32], strides = [1, 1]} : vector<2x96xf32> to vector<2x32xf32>
    %500 = arith.addf %498, %499 : vector<2x32xf32>
    %501 = arith.negf %500 : vector<2x32xf32>
    %502 = math.exp %501 : vector<2x32xf32>
    %cst_110 = arith.constant 1.000000e+00 : f32
    %503 = vector.broadcast %cst_110 : f32 to vector<2x32xf32>
    %504 = arith.addf %503, %502 : vector<2x32xf32>
    %505 = arith.divf %503, %504 : vector<2x32xf32>
    %506 = vector.extract_strided_slice %486 {offsets = [0, 64], sizes = [2, 32], strides = [1, 1]} : vector<2x96xf32> to vector<2x32xf32>
    %507 = vector.extract_strided_slice %489 {offsets = [0, 64], sizes = [2, 32], strides = [1, 1]} : vector<2x96xf32> to vector<2x32xf32>
    %508 = arith.mulf %497, %507 : vector<2x32xf32>
    %509 = arith.addf %506, %508 : vector<2x32xf32>
    %510 = math.tanh %509 : vector<2x32xf32>
    %cst_111 = arith.constant 1.000000e+00 : f32
    %511 = vector.broadcast %cst_111 : f32 to vector<2x32xf32>
    %512 = arith.subf %511, %505 : vector<2x32xf32>
    %513 = arith.mulf %512, %510 : vector<2x32xf32>
    %514 = arith.mulf %505, %484 : vector<2x32xf32>
    %515 = arith.addf %513, %514 : vector<2x32xf32>
    %c14_112 = arith.constant 14 : index
    %c0_113 = arith.constant 0 : index
    %516 = vector.load %arg10[%c14_112, %c0_113] : memref<16x32xf32, #tpu.memory_space<vmem>>, vector<2x32xf32>
    tpu.vector_store %arg10[%c14_112, %c0_113], %515 {strides = array<i32>} : memref<16x32xf32, #tpu.memory_space<vmem>>, vector<2x32xf32>,
    %c1 = arith.constant 1 : index
    %c0_114 = arith.constant 0 : index
    %c0_115 = arith.constant 0 : index
    %517 = vector.load %arg9[%c1, %c0_114, %c0_115] : memref<2x2x32xf32, #tpu.memory_space<vmem>>, vector<1x2x32xf32>
    %518 = vector.shape_cast %517 : vector<1x2x32xf32> to vector<2x32xf32>
    %519 = vector.shape_cast %515 : vector<2x32xf32> to vector<1x2x32xf32>
    tpu.vector_store %arg9[%c1, %c0_114, %c0_115], %519 {strides = array<i32>} : memref<2x2x32xf32, #tpu.memory_space<vmem>>, vector<1x2x32xf32>,
    return
  }
}

module attributes {stable_mosaic.version = 11 : i64} {
  func.func @kernel(%arg0: memref<16x16xf32, #tpu.memory_space<vmem>>, %arg1: memref<2x2x32xf32, #tpu.memory_space<vmem>>, %arg2: memref<16x96xf32, #tpu.memory_space<vmem>>, %arg3: memref<32x96xf32, #tpu.memory_space<vmem>>, %arg4: memref<1x96xf32, #tpu.memory_space<vmem>>, %arg5: memref<1x96xf32, #tpu.memory_space<vmem>>, %arg6: memref<32x96xf32, #tpu.memory_space<vmem>>, %arg7: memref<32x96xf32, #tpu.memory_space<vmem>>, %arg8: memref<1x96xf32, #tpu.memory_space<vmem>>, %arg9: memref<1x96xf32, #tpu.memory_space<vmem>>, %arg10: memref<32x64xf32, #tpu.memory_space<vmem>>, %arg11: memref<1x64xf32, #tpu.memory_space<vmem>>, %arg12: memref<16x64xf32, #tpu.memory_space<vmem>>, %arg13: memref<16x32xf32, #tpu.memory_space<vmem>>) attributes {dimension_semantics = [], scalar_prefetch = 0 : i64, scratch_operands = 1 : i64, tpu.core_type = #tpu.core_type<tc>} {
    %c0 = arith.constant 0 : index
    %c0_0 = arith.constant 0 : index
    %0 = vector.load %arg0[%c0, %c0_0] : memref<16x16xf32, #tpu.memory_space<vmem>>, vector<16x16xf32>
    %c0_1 = arith.constant 0 : index
    %c0_2 = arith.constant 0 : index
    %1 = vector.load %arg2[%c0_1, %c0_2] : memref<16x96xf32, #tpu.memory_space<vmem>>, vector<16x96xf32>
    %c0_3 = arith.constant 0 : index
    %c0_4 = arith.constant 0 : index
    %2 = vector.load %arg3[%c0_3, %c0_4] : memref<32x96xf32, #tpu.memory_space<vmem>>, vector<32x96xf32>
    %c0_5 = arith.constant 0 : index
    %c0_6 = arith.constant 0 : index
    %3 = vector.load %arg4[%c0_5, %c0_6] : memref<1x96xf32, #tpu.memory_space<vmem>>, vector<1x96xf32>
    %c0_7 = arith.constant 0 : index
    %c0_8 = arith.constant 0 : index
    %4 = vector.load %arg5[%c0_7, %c0_8] : memref<1x96xf32, #tpu.memory_space<vmem>>, vector<1x96xf32>
    %cst = arith.constant dense<0.000000e+00> : vector<16x96xf32>
    %5 = tpu.matmul %0, %1, %cst {dimension_numbers = #tpu.dot_dimension_numbers<[1], [0], [0], [1], [0, 0, 1, 1], [], []>} : vector<16x16xf32>, vector<16x96xf32>, vector<16x96xf32> -> vector<16x96xf32>
    %6 = vector.broadcast %3 : vector<1x96xf32> to vector<16x96xf32>
    %7 = arith.addf %5, %6 : vector<16x96xf32>
    %c0_9 = arith.constant 0 : index
    %c0_10 = arith.constant 0 : index
    %c0_11 = arith.constant 0 : index
    %8 = vector.load %arg1[%c0_9, %c0_10, %c0_11] : memref<2x2x32xf32, #tpu.memory_space<vmem>>, vector<1x2x32xf32>
    %9 = vector.shape_cast %8 : vector<1x2x32xf32> to vector<2x32xf32>
    %10 = vector.extract_strided_slice %7 {offsets = [0, 0], sizes = [2, 96], strides = [1, 1]} : vector<16x96xf32> to vector<2x96xf32>
    %cst_12 = arith.constant dense<0.000000e+00> : vector<2x96xf32>
    %11 = tpu.matmul %9, %2, %cst_12 {dimension_numbers = #tpu.dot_dimension_numbers<[1], [0], [0], [1], [0, 0, 1, 1], [], []>} : vector<2x32xf32>, vector<32x96xf32>, vector<2x96xf32> -> vector<2x96xf32>
    %12 = vector.broadcast %4 : vector<1x96xf32> to vector<2x96xf32>
    %13 = arith.addf %11, %12 : vector<2x96xf32>
    %14 = vector.extract_strided_slice %10 {offsets = [0, 0], sizes = [2, 32], strides = [1, 1]} : vector<2x96xf32> to vector<2x32xf32>
    %15 = vector.extract_strided_slice %13 {offsets = [0, 0], sizes = [2, 32], strides = [1, 1]} : vector<2x96xf32> to vector<2x32xf32>
    %16 = arith.addf %14, %15 : vector<2x32xf32>
    %17 = arith.negf %16 : vector<2x32xf32>
    %18 = math.exp %17 : vector<2x32xf32>
    %cst_13 = arith.constant 1.000000e+00 : f32
    %19 = vector.broadcast %cst_13 : f32 to vector<2x32xf32>
    %20 = arith.addf %19, %18 : vector<2x32xf32>
    %21 = arith.divf %19, %20 : vector<2x32xf32>
    %22 = vector.extract_strided_slice %10 {offsets = [0, 32], sizes = [2, 32], strides = [1, 1]} : vector<2x96xf32> to vector<2x32xf32>
    %23 = vector.extract_strided_slice %13 {offsets = [0, 32], sizes = [2, 32], strides = [1, 1]} : vector<2x96xf32> to vector<2x32xf32>
    %24 = arith.addf %22, %23 : vector<2x32xf32>
    %25 = arith.negf %24 : vector<2x32xf32>
    %26 = math.exp %25 : vector<2x32xf32>
    %cst_14 = arith.constant 1.000000e+00 : f32
    %27 = vector.broadcast %cst_14 : f32 to vector<2x32xf32>
    %28 = arith.addf %27, %26 : vector<2x32xf32>
    %29 = arith.divf %27, %28 : vector<2x32xf32>
    %30 = vector.extract_strided_slice %10 {offsets = [0, 64], sizes = [2, 32], strides = [1, 1]} : vector<2x96xf32> to vector<2x32xf32>
    %31 = vector.extract_strided_slice %13 {offsets = [0, 64], sizes = [2, 32], strides = [1, 1]} : vector<2x96xf32> to vector<2x32xf32>
    %32 = arith.mulf %21, %31 : vector<2x32xf32>
    %33 = arith.addf %30, %32 : vector<2x32xf32>
    %34 = math.tanh %33 : vector<2x32xf32>
    %cst_15 = arith.constant 1.000000e+00 : f32
    %35 = vector.broadcast %cst_15 : f32 to vector<2x32xf32>
    %36 = arith.subf %35, %29 : vector<2x32xf32>
    %37 = arith.mulf %36, %34 : vector<2x32xf32>
    %38 = arith.mulf %29, %9 : vector<2x32xf32>
    %39 = arith.addf %37, %38 : vector<2x32xf32>
    %c0_16 = arith.constant 0 : index
    %c0_17 = arith.constant 0 : index
    %40 = vector.load %arg13[%c0_16, %c0_17] : memref<16x32xf32, #tpu.memory_space<vmem>>, vector<2x32xf32>
    tpu.vector_store %arg13[%c0_16, %c0_17], %39 {strides = array<i32>} : memref<16x32xf32, #tpu.memory_space<vmem>>, vector<2x32xf32>,
    %41 = vector.extract_strided_slice %7 {offsets = [2, 0], sizes = [2, 96], strides = [1, 1]} : vector<16x96xf32> to vector<2x96xf32>
    %cst_18 = arith.constant dense<0.000000e+00> : vector<2x96xf32>
    %42 = tpu.matmul %39, %2, %cst_18 {dimension_numbers = #tpu.dot_dimension_numbers<[1], [0], [0], [1], [0, 0, 1, 1], [], []>} : vector<2x32xf32>, vector<32x96xf32>, vector<2x96xf32> -> vector<2x96xf32>
    %43 = vector.broadcast %4 : vector<1x96xf32> to vector<2x96xf32>
    %44 = arith.addf %42, %43 : vector<2x96xf32>
    %45 = vector.extract_strided_slice %41 {offsets = [0, 0], sizes = [2, 32], strides = [1, 1]} : vector<2x96xf32> to vector<2x32xf32>
    %46 = vector.extract_strided_slice %44 {offsets = [0, 0], sizes = [2, 32], strides = [1, 1]} : vector<2x96xf32> to vector<2x32xf32>
    %47 = arith.addf %45, %46 : vector<2x32xf32>
    %48 = arith.negf %47 : vector<2x32xf32>
    %49 = math.exp %48 : vector<2x32xf32>
    %cst_19 = arith.constant 1.000000e+00 : f32
    %50 = vector.broadcast %cst_19 : f32 to vector<2x32xf32>
    %51 = arith.addf %50, %49 : vector<2x32xf32>
    %52 = arith.divf %50, %51 : vector<2x32xf32>
    %53 = vector.extract_strided_slice %41 {offsets = [0, 32], sizes = [2, 32], strides = [1, 1]} : vector<2x96xf32> to vector<2x32xf32>
    %54 = vector.extract_strided_slice %44 {offsets = [0, 32], sizes = [2, 32], strides = [1, 1]} : vector<2x96xf32> to vector<2x32xf32>
    %55 = arith.addf %53, %54 : vector<2x32xf32>
    %56 = arith.negf %55 : vector<2x32xf32>
    %57 = math.exp %56 : vector<2x32xf32>
    %cst_20 = arith.constant 1.000000e+00 : f32
    %58 = vector.broadcast %cst_20 : f32 to vector<2x32xf32>
    %59 = arith.addf %58, %57 : vector<2x32xf32>
    %60 = arith.divf %58, %59 : vector<2x32xf32>
    %61 = vector.extract_strided_slice %41 {offsets = [0, 64], sizes = [2, 32], strides = [1, 1]} : vector<2x96xf32> to vector<2x32xf32>
    %62 = vector.extract_strided_slice %44 {offsets = [0, 64], sizes = [2, 32], strides = [1, 1]} : vector<2x96xf32> to vector<2x32xf32>
    %63 = arith.mulf %52, %62 : vector<2x32xf32>
    %64 = arith.addf %61, %63 : vector<2x32xf32>
    %65 = math.tanh %64 : vector<2x32xf32>
    %cst_21 = arith.constant 1.000000e+00 : f32
    %66 = vector.broadcast %cst_21 : f32 to vector<2x32xf32>
    %67 = arith.subf %66, %60 : vector<2x32xf32>
    %68 = arith.mulf %67, %65 : vector<2x32xf32>
    %69 = arith.mulf %60, %39 : vector<2x32xf32>
    %70 = arith.addf %68, %69 : vector<2x32xf32>
    %c2 = arith.constant 2 : index
    %c0_22 = arith.constant 0 : index
    %71 = vector.load %arg13[%c2, %c0_22] : memref<16x32xf32, #tpu.memory_space<vmem>>, vector<2x32xf32>
    tpu.vector_store %arg13[%c2, %c0_22], %70 {strides = array<i32>} : memref<16x32xf32, #tpu.memory_space<vmem>>, vector<2x32xf32>,
    %72 = vector.extract_strided_slice %7 {offsets = [4, 0], sizes = [2, 96], strides = [1, 1]} : vector<16x96xf32> to vector<2x96xf32>
    %cst_23 = arith.constant dense<0.000000e+00> : vector<2x96xf32>
    %73 = tpu.matmul %70, %2, %cst_23 {dimension_numbers = #tpu.dot_dimension_numbers<[1], [0], [0], [1], [0, 0, 1, 1], [], []>} : vector<2x32xf32>, vector<32x96xf32>, vector<2x96xf32> -> vector<2x96xf32>
    %74 = vector.broadcast %4 : vector<1x96xf32> to vector<2x96xf32>
    %75 = arith.addf %73, %74 : vector<2x96xf32>
    %76 = vector.extract_strided_slice %72 {offsets = [0, 0], sizes = [2, 32], strides = [1, 1]} : vector<2x96xf32> to vector<2x32xf32>
    %77 = vector.extract_strided_slice %75 {offsets = [0, 0], sizes = [2, 32], strides = [1, 1]} : vector<2x96xf32> to vector<2x32xf32>
    %78 = arith.addf %76, %77 : vector<2x32xf32>
    %79 = arith.negf %78 : vector<2x32xf32>
    %80 = math.exp %79 : vector<2x32xf32>
    %cst_24 = arith.constant 1.000000e+00 : f32
    %81 = vector.broadcast %cst_24 : f32 to vector<2x32xf32>
    %82 = arith.addf %81, %80 : vector<2x32xf32>
    %83 = arith.divf %81, %82 : vector<2x32xf32>
    %84 = vector.extract_strided_slice %72 {offsets = [0, 32], sizes = [2, 32], strides = [1, 1]} : vector<2x96xf32> to vector<2x32xf32>
    %85 = vector.extract_strided_slice %75 {offsets = [0, 32], sizes = [2, 32], strides = [1, 1]} : vector<2x96xf32> to vector<2x32xf32>
    %86 = arith.addf %84, %85 : vector<2x32xf32>
    %87 = arith.negf %86 : vector<2x32xf32>
    %88 = math.exp %87 : vector<2x32xf32>
    %cst_25 = arith.constant 1.000000e+00 : f32
    %89 = vector.broadcast %cst_25 : f32 to vector<2x32xf32>
    %90 = arith.addf %89, %88 : vector<2x32xf32>
    %91 = arith.divf %89, %90 : vector<2x32xf32>
    %92 = vector.extract_strided_slice %72 {offsets = [0, 64], sizes = [2, 32], strides = [1, 1]} : vector<2x96xf32> to vector<2x32xf32>
    %93 = vector.extract_strided_slice %75 {offsets = [0, 64], sizes = [2, 32], strides = [1, 1]} : vector<2x96xf32> to vector<2x32xf32>
    %94 = arith.mulf %83, %93 : vector<2x32xf32>
    %95 = arith.addf %92, %94 : vector<2x32xf32>
    %96 = math.tanh %95 : vector<2x32xf32>
    %cst_26 = arith.constant 1.000000e+00 : f32
    %97 = vector.broadcast %cst_26 : f32 to vector<2x32xf32>
    %98 = arith.subf %97, %91 : vector<2x32xf32>
    %99 = arith.mulf %98, %96 : vector<2x32xf32>
    %100 = arith.mulf %91, %70 : vector<2x32xf32>
    %101 = arith.addf %99, %100 : vector<2x32xf32>
    %c4 = arith.constant 4 : index
    %c0_27 = arith.constant 0 : index
    %102 = vector.load %arg13[%c4, %c0_27] : memref<16x32xf32, #tpu.memory_space<vmem>>, vector<2x32xf32>
    tpu.vector_store %arg13[%c4, %c0_27], %101 {strides = array<i32>} : memref<16x32xf32, #tpu.memory_space<vmem>>, vector<2x32xf32>,
    %103 = vector.extract_strided_slice %7 {offsets = [6, 0], sizes = [2, 96], strides = [1, 1]} : vector<16x96xf32> to vector<2x96xf32>
    %cst_28 = arith.constant dense<0.000000e+00> : vector<2x96xf32>
    %104 = tpu.matmul %101, %2, %cst_28 {dimension_numbers = #tpu.dot_dimension_numbers<[1], [0], [0], [1], [0, 0, 1, 1], [], []>} : vector<2x32xf32>, vector<32x96xf32>, vector<2x96xf32> -> vector<2x96xf32>
    %105 = vector.broadcast %4 : vector<1x96xf32> to vector<2x96xf32>
    %106 = arith.addf %104, %105 : vector<2x96xf32>
    %107 = vector.extract_strided_slice %103 {offsets = [0, 0], sizes = [2, 32], strides = [1, 1]} : vector<2x96xf32> to vector<2x32xf32>
    %108 = vector.extract_strided_slice %106 {offsets = [0, 0], sizes = [2, 32], strides = [1, 1]} : vector<2x96xf32> to vector<2x32xf32>
    %109 = arith.addf %107, %108 : vector<2x32xf32>
    %110 = arith.negf %109 : vector<2x32xf32>
    %111 = math.exp %110 : vector<2x32xf32>
    %cst_29 = arith.constant 1.000000e+00 : f32
    %112 = vector.broadcast %cst_29 : f32 to vector<2x32xf32>
    %113 = arith.addf %112, %111 : vector<2x32xf32>
    %114 = arith.divf %112, %113 : vector<2x32xf32>
    %115 = vector.extract_strided_slice %103 {offsets = [0, 32], sizes = [2, 32], strides = [1, 1]} : vector<2x96xf32> to vector<2x32xf32>
    %116 = vector.extract_strided_slice %106 {offsets = [0, 32], sizes = [2, 32], strides = [1, 1]} : vector<2x96xf32> to vector<2x32xf32>
    %117 = arith.addf %115, %116 : vector<2x32xf32>
    %118 = arith.negf %117 : vector<2x32xf32>
    %119 = math.exp %118 : vector<2x32xf32>
    %cst_30 = arith.constant 1.000000e+00 : f32
    %120 = vector.broadcast %cst_30 : f32 to vector<2x32xf32>
    %121 = arith.addf %120, %119 : vector<2x32xf32>
    %122 = arith.divf %120, %121 : vector<2x32xf32>
    %123 = vector.extract_strided_slice %103 {offsets = [0, 64], sizes = [2, 32], strides = [1, 1]} : vector<2x96xf32> to vector<2x32xf32>
    %124 = vector.extract_strided_slice %106 {offsets = [0, 64], sizes = [2, 32], strides = [1, 1]} : vector<2x96xf32> to vector<2x32xf32>
    %125 = arith.mulf %114, %124 : vector<2x32xf32>
    %126 = arith.addf %123, %125 : vector<2x32xf32>
    %127 = math.tanh %126 : vector<2x32xf32>
    %cst_31 = arith.constant 1.000000e+00 : f32
    %128 = vector.broadcast %cst_31 : f32 to vector<2x32xf32>
    %129 = arith.subf %128, %122 : vector<2x32xf32>
    %130 = arith.mulf %129, %127 : vector<2x32xf32>
    %131 = arith.mulf %122, %101 : vector<2x32xf32>
    %132 = arith.addf %130, %131 : vector<2x32xf32>
    %c6 = arith.constant 6 : index
    %c0_32 = arith.constant 0 : index
    %133 = vector.load %arg13[%c6, %c0_32] : memref<16x32xf32, #tpu.memory_space<vmem>>, vector<2x32xf32>
    tpu.vector_store %arg13[%c6, %c0_32], %132 {strides = array<i32>} : memref<16x32xf32, #tpu.memory_space<vmem>>, vector<2x32xf32>,
    %134 = vector.extract_strided_slice %7 {offsets = [8, 0], sizes = [2, 96], strides = [1, 1]} : vector<16x96xf32> to vector<2x96xf32>
    %cst_33 = arith.constant dense<0.000000e+00> : vector<2x96xf32>
    %135 = tpu.matmul %132, %2, %cst_33 {dimension_numbers = #tpu.dot_dimension_numbers<[1], [0], [0], [1], [0, 0, 1, 1], [], []>} : vector<2x32xf32>, vector<32x96xf32>, vector<2x96xf32> -> vector<2x96xf32>
    %136 = vector.broadcast %4 : vector<1x96xf32> to vector<2x96xf32>
    %137 = arith.addf %135, %136 : vector<2x96xf32>
    %138 = vector.extract_strided_slice %134 {offsets = [0, 0], sizes = [2, 32], strides = [1, 1]} : vector<2x96xf32> to vector<2x32xf32>
    %139 = vector.extract_strided_slice %137 {offsets = [0, 0], sizes = [2, 32], strides = [1, 1]} : vector<2x96xf32> to vector<2x32xf32>
    %140 = arith.addf %138, %139 : vector<2x32xf32>
    %141 = arith.negf %140 : vector<2x32xf32>
    %142 = math.exp %141 : vector<2x32xf32>
    %cst_34 = arith.constant 1.000000e+00 : f32
    %143 = vector.broadcast %cst_34 : f32 to vector<2x32xf32>
    %144 = arith.addf %143, %142 : vector<2x32xf32>
    %145 = arith.divf %143, %144 : vector<2x32xf32>
    %146 = vector.extract_strided_slice %134 {offsets = [0, 32], sizes = [2, 32], strides = [1, 1]} : vector<2x96xf32> to vector<2x32xf32>
    %147 = vector.extract_strided_slice %137 {offsets = [0, 32], sizes = [2, 32], strides = [1, 1]} : vector<2x96xf32> to vector<2x32xf32>
    %148 = arith.addf %146, %147 : vector<2x32xf32>
    %149 = arith.negf %148 : vector<2x32xf32>
    %150 = math.exp %149 : vector<2x32xf32>
    %cst_35 = arith.constant 1.000000e+00 : f32
    %151 = vector.broadcast %cst_35 : f32 to vector<2x32xf32>
    %152 = arith.addf %151, %150 : vector<2x32xf32>
    %153 = arith.divf %151, %152 : vector<2x32xf32>
    %154 = vector.extract_strided_slice %134 {offsets = [0, 64], sizes = [2, 32], strides = [1, 1]} : vector<2x96xf32> to vector<2x32xf32>
    %155 = vector.extract_strided_slice %137 {offsets = [0, 64], sizes = [2, 32], strides = [1, 1]} : vector<2x96xf32> to vector<2x32xf32>
    %156 = arith.mulf %145, %155 : vector<2x32xf32>
    %157 = arith.addf %154, %156 : vector<2x32xf32>
    %158 = math.tanh %157 : vector<2x32xf32>
    %cst_36 = arith.constant 1.000000e+00 : f32
    %159 = vector.broadcast %cst_36 : f32 to vector<2x32xf32>
    %160 = arith.subf %159, %153 : vector<2x32xf32>
    %161 = arith.mulf %160, %158 : vector<2x32xf32>
    %162 = arith.mulf %153, %132 : vector<2x32xf32>
    %163 = arith.addf %161, %162 : vector<2x32xf32>
    %c8 = arith.constant 8 : index
    %c0_37 = arith.constant 0 : index
    %164 = vector.load %arg13[%c8, %c0_37] : memref<16x32xf32, #tpu.memory_space<vmem>>, vector<2x32xf32>
    tpu.vector_store %arg13[%c8, %c0_37], %163 {strides = array<i32>} : memref<16x32xf32, #tpu.memory_space<vmem>>, vector<2x32xf32>,
    %165 = vector.extract_strided_slice %7 {offsets = [10, 0], sizes = [2, 96], strides = [1, 1]} : vector<16x96xf32> to vector<2x96xf32>
    %cst_38 = arith.constant dense<0.000000e+00> : vector<2x96xf32>
    %166 = tpu.matmul %163, %2, %cst_38 {dimension_numbers = #tpu.dot_dimension_numbers<[1], [0], [0], [1], [0, 0, 1, 1], [], []>} : vector<2x32xf32>, vector<32x96xf32>, vector<2x96xf32> -> vector<2x96xf32>
    %167 = vector.broadcast %4 : vector<1x96xf32> to vector<2x96xf32>
    %168 = arith.addf %166, %167 : vector<2x96xf32>
    %169 = vector.extract_strided_slice %165 {offsets = [0, 0], sizes = [2, 32], strides = [1, 1]} : vector<2x96xf32> to vector<2x32xf32>
    %170 = vector.extract_strided_slice %168 {offsets = [0, 0], sizes = [2, 32], strides = [1, 1]} : vector<2x96xf32> to vector<2x32xf32>
    %171 = arith.addf %169, %170 : vector<2x32xf32>
    %172 = arith.negf %171 : vector<2x32xf32>
    %173 = math.exp %172 : vector<2x32xf32>
    %cst_39 = arith.constant 1.000000e+00 : f32
    %174 = vector.broadcast %cst_39 : f32 to vector<2x32xf32>
    %175 = arith.addf %174, %173 : vector<2x32xf32>
    %176 = arith.divf %174, %175 : vector<2x32xf32>
    %177 = vector.extract_strided_slice %165 {offsets = [0, 32], sizes = [2, 32], strides = [1, 1]} : vector<2x96xf32> to vector<2x32xf32>
    %178 = vector.extract_strided_slice %168 {offsets = [0, 32], sizes = [2, 32], strides = [1, 1]} : vector<2x96xf32> to vector<2x32xf32>
    %179 = arith.addf %177, %178 : vector<2x32xf32>
    %180 = arith.negf %179 : vector<2x32xf32>
    %181 = math.exp %180 : vector<2x32xf32>
    %cst_40 = arith.constant 1.000000e+00 : f32
    %182 = vector.broadcast %cst_40 : f32 to vector<2x32xf32>
    %183 = arith.addf %182, %181 : vector<2x32xf32>
    %184 = arith.divf %182, %183 : vector<2x32xf32>
    %185 = vector.extract_strided_slice %165 {offsets = [0, 64], sizes = [2, 32], strides = [1, 1]} : vector<2x96xf32> to vector<2x32xf32>
    %186 = vector.extract_strided_slice %168 {offsets = [0, 64], sizes = [2, 32], strides = [1, 1]} : vector<2x96xf32> to vector<2x32xf32>
    %187 = arith.mulf %176, %186 : vector<2x32xf32>
    %188 = arith.addf %185, %187 : vector<2x32xf32>
    %189 = math.tanh %188 : vector<2x32xf32>
    %cst_41 = arith.constant 1.000000e+00 : f32
    %190 = vector.broadcast %cst_41 : f32 to vector<2x32xf32>
    %191 = arith.subf %190, %184 : vector<2x32xf32>
    %192 = arith.mulf %191, %189 : vector<2x32xf32>
    %193 = arith.mulf %184, %163 : vector<2x32xf32>
    %194 = arith.addf %192, %193 : vector<2x32xf32>
    %c10 = arith.constant 10 : index
    %c0_42 = arith.constant 0 : index
    %195 = vector.load %arg13[%c10, %c0_42] : memref<16x32xf32, #tpu.memory_space<vmem>>, vector<2x32xf32>
    tpu.vector_store %arg13[%c10, %c0_42], %194 {strides = array<i32>} : memref<16x32xf32, #tpu.memory_space<vmem>>, vector<2x32xf32>,
    %196 = vector.extract_strided_slice %7 {offsets = [12, 0], sizes = [2, 96], strides = [1, 1]} : vector<16x96xf32> to vector<2x96xf32>
    %cst_43 = arith.constant dense<0.000000e+00> : vector<2x96xf32>
    %197 = tpu.matmul %194, %2, %cst_43 {dimension_numbers = #tpu.dot_dimension_numbers<[1], [0], [0], [1], [0, 0, 1, 1], [], []>} : vector<2x32xf32>, vector<32x96xf32>, vector<2x96xf32> -> vector<2x96xf32>
    %198 = vector.broadcast %4 : vector<1x96xf32> to vector<2x96xf32>
    %199 = arith.addf %197, %198 : vector<2x96xf32>
    %200 = vector.extract_strided_slice %196 {offsets = [0, 0], sizes = [2, 32], strides = [1, 1]} : vector<2x96xf32> to vector<2x32xf32>
    %201 = vector.extract_strided_slice %199 {offsets = [0, 0], sizes = [2, 32], strides = [1, 1]} : vector<2x96xf32> to vector<2x32xf32>
    %202 = arith.addf %200, %201 : vector<2x32xf32>
    %203 = arith.negf %202 : vector<2x32xf32>
    %204 = math.exp %203 : vector<2x32xf32>
    %cst_44 = arith.constant 1.000000e+00 : f32
    %205 = vector.broadcast %cst_44 : f32 to vector<2x32xf32>
    %206 = arith.addf %205, %204 : vector<2x32xf32>
    %207 = arith.divf %205, %206 : vector<2x32xf32>
    %208 = vector.extract_strided_slice %196 {offsets = [0, 32], sizes = [2, 32], strides = [1, 1]} : vector<2x96xf32> to vector<2x32xf32>
    %209 = vector.extract_strided_slice %199 {offsets = [0, 32], sizes = [2, 32], strides = [1, 1]} : vector<2x96xf32> to vector<2x32xf32>
    %210 = arith.addf %208, %209 : vector<2x32xf32>
    %211 = arith.negf %210 : vector<2x32xf32>
    %212 = math.exp %211 : vector<2x32xf32>
    %cst_45 = arith.constant 1.000000e+00 : f32
    %213 = vector.broadcast %cst_45 : f32 to vector<2x32xf32>
    %214 = arith.addf %213, %212 : vector<2x32xf32>
    %215 = arith.divf %213, %214 : vector<2x32xf32>
    %216 = vector.extract_strided_slice %196 {offsets = [0, 64], sizes = [2, 32], strides = [1, 1]} : vector<2x96xf32> to vector<2x32xf32>
    %217 = vector.extract_strided_slice %199 {offsets = [0, 64], sizes = [2, 32], strides = [1, 1]} : vector<2x96xf32> to vector<2x32xf32>
    %218 = arith.mulf %207, %217 : vector<2x32xf32>
    %219 = arith.addf %216, %218 : vector<2x32xf32>
    %220 = math.tanh %219 : vector<2x32xf32>
    %cst_46 = arith.constant 1.000000e+00 : f32
    %221 = vector.broadcast %cst_46 : f32 to vector<2x32xf32>
    %222 = arith.subf %221, %215 : vector<2x32xf32>
    %223 = arith.mulf %222, %220 : vector<2x32xf32>
    %224 = arith.mulf %215, %194 : vector<2x32xf32>
    %225 = arith.addf %223, %224 : vector<2x32xf32>
    %c12 = arith.constant 12 : index
    %c0_47 = arith.constant 0 : index
    %226 = vector.load %arg13[%c12, %c0_47] : memref<16x32xf32, #tpu.memory_space<vmem>>, vector<2x32xf32>
    tpu.vector_store %arg13[%c12, %c0_47], %225 {strides = array<i32>} : memref<16x32xf32, #tpu.memory_space<vmem>>, vector<2x32xf32>,
    %227 = vector.extract_strided_slice %7 {offsets = [14, 0], sizes = [2, 96], strides = [1, 1]} : vector<16x96xf32> to vector<2x96xf32>
    %cst_48 = arith.constant dense<0.000000e+00> : vector<2x96xf32>
    %228 = tpu.matmul %225, %2, %cst_48 {dimension_numbers = #tpu.dot_dimension_numbers<[1], [0], [0], [1], [0, 0, 1, 1], [], []>} : vector<2x32xf32>, vector<32x96xf32>, vector<2x96xf32> -> vector<2x96xf32>
    %229 = vector.broadcast %4 : vector<1x96xf32> to vector<2x96xf32>
    %230 = arith.addf %228, %229 : vector<2x96xf32>
    %231 = vector.extract_strided_slice %227 {offsets = [0, 0], sizes = [2, 32], strides = [1, 1]} : vector<2x96xf32> to vector<2x32xf32>
    %232 = vector.extract_strided_slice %230 {offsets = [0, 0], sizes = [2, 32], strides = [1, 1]} : vector<2x96xf32> to vector<2x32xf32>
    %233 = arith.addf %231, %232 : vector<2x32xf32>
    %234 = arith.negf %233 : vector<2x32xf32>
    %235 = math.exp %234 : vector<2x32xf32>
    %cst_49 = arith.constant 1.000000e+00 : f32
    %236 = vector.broadcast %cst_49 : f32 to vector<2x32xf32>
    %237 = arith.addf %236, %235 : vector<2x32xf32>
    %238 = arith.divf %236, %237 : vector<2x32xf32>
    %239 = vector.extract_strided_slice %227 {offsets = [0, 32], sizes = [2, 32], strides = [1, 1]} : vector<2x96xf32> to vector<2x32xf32>
    %240 = vector.extract_strided_slice %230 {offsets = [0, 32], sizes = [2, 32], strides = [1, 1]} : vector<2x96xf32> to vector<2x32xf32>
    %241 = arith.addf %239, %240 : vector<2x32xf32>
    %242 = arith.negf %241 : vector<2x32xf32>
    %243 = math.exp %242 : vector<2x32xf32>
    %cst_50 = arith.constant 1.000000e+00 : f32
    %244 = vector.broadcast %cst_50 : f32 to vector<2x32xf32>
    %245 = arith.addf %244, %243 : vector<2x32xf32>
    %246 = arith.divf %244, %245 : vector<2x32xf32>
    %247 = vector.extract_strided_slice %227 {offsets = [0, 64], sizes = [2, 32], strides = [1, 1]} : vector<2x96xf32> to vector<2x32xf32>
    %248 = vector.extract_strided_slice %230 {offsets = [0, 64], sizes = [2, 32], strides = [1, 1]} : vector<2x96xf32> to vector<2x32xf32>
    %249 = arith.mulf %238, %248 : vector<2x32xf32>
    %250 = arith.addf %247, %249 : vector<2x32xf32>
    %251 = math.tanh %250 : vector<2x32xf32>
    %cst_51 = arith.constant 1.000000e+00 : f32
    %252 = vector.broadcast %cst_51 : f32 to vector<2x32xf32>
    %253 = arith.subf %252, %246 : vector<2x32xf32>
    %254 = arith.mulf %253, %251 : vector<2x32xf32>
    %255 = arith.mulf %246, %225 : vector<2x32xf32>
    %256 = arith.addf %254, %255 : vector<2x32xf32>
    %c14 = arith.constant 14 : index
    %c0_52 = arith.constant 0 : index
    %257 = vector.load %arg13[%c14, %c0_52] : memref<16x32xf32, #tpu.memory_space<vmem>>, vector<2x32xf32>
    tpu.vector_store %arg13[%c14, %c0_52], %256 {strides = array<i32>} : memref<16x32xf32, #tpu.memory_space<vmem>>, vector<2x32xf32>,
    %c0_53 = arith.constant 0 : index
    %c0_54 = arith.constant 0 : index
    %258 = vector.load %arg13[%c0_53, %c0_54] : memref<16x32xf32, #tpu.memory_space<vmem>>, vector<16x32xf32>
    %c0_55 = arith.constant 0 : index
    %c0_56 = arith.constant 0 : index
    %259 = vector.load %arg6[%c0_55, %c0_56] : memref<32x96xf32, #tpu.memory_space<vmem>>, vector<32x96xf32>
    %c0_57 = arith.constant 0 : index
    %c0_58 = arith.constant 0 : index
    %260 = vector.load %arg7[%c0_57, %c0_58] : memref<32x96xf32, #tpu.memory_space<vmem>>, vector<32x96xf32>
    %c0_59 = arith.constant 0 : index
    %c0_60 = arith.constant 0 : index
    %261 = vector.load %arg8[%c0_59, %c0_60] : memref<1x96xf32, #tpu.memory_space<vmem>>, vector<1x96xf32>
    %c0_61 = arith.constant 0 : index
    %c0_62 = arith.constant 0 : index
    %262 = vector.load %arg9[%c0_61, %c0_62] : memref<1x96xf32, #tpu.memory_space<vmem>>, vector<1x96xf32>
    %cst_63 = arith.constant dense<0.000000e+00> : vector<16x96xf32>
    %263 = tpu.matmul %258, %259, %cst_63 {dimension_numbers = #tpu.dot_dimension_numbers<[1], [0], [0], [1], [0, 0, 1, 1], [], []>} : vector<16x32xf32>, vector<32x96xf32>, vector<16x96xf32> -> vector<16x96xf32>
    %264 = vector.broadcast %261 : vector<1x96xf32> to vector<16x96xf32>
    %265 = arith.addf %263, %264 : vector<16x96xf32>
    %c1 = arith.constant 1 : index
    %c0_64 = arith.constant 0 : index
    %c0_65 = arith.constant 0 : index
    %266 = vector.load %arg1[%c1, %c0_64, %c0_65] : memref<2x2x32xf32, #tpu.memory_space<vmem>>, vector<1x2x32xf32>
    %267 = vector.shape_cast %266 : vector<1x2x32xf32> to vector<2x32xf32>
    %268 = vector.extract_strided_slice %265 {offsets = [0, 0], sizes = [2, 96], strides = [1, 1]} : vector<16x96xf32> to vector<2x96xf32>
    %cst_66 = arith.constant dense<0.000000e+00> : vector<2x96xf32>
    %269 = tpu.matmul %267, %260, %cst_66 {dimension_numbers = #tpu.dot_dimension_numbers<[1], [0], [0], [1], [0, 0, 1, 1], [], []>} : vector<2x32xf32>, vector<32x96xf32>, vector<2x96xf32> -> vector<2x96xf32>
    %270 = vector.broadcast %262 : vector<1x96xf32> to vector<2x96xf32>
    %271 = arith.addf %269, %270 : vector<2x96xf32>
    %272 = vector.extract_strided_slice %268 {offsets = [0, 0], sizes = [2, 32], strides = [1, 1]} : vector<2x96xf32> to vector<2x32xf32>
    %273 = vector.extract_strided_slice %271 {offsets = [0, 0], sizes = [2, 32], strides = [1, 1]} : vector<2x96xf32> to vector<2x32xf32>
    %274 = arith.addf %272, %273 : vector<2x32xf32>
    %275 = arith.negf %274 : vector<2x32xf32>
    %276 = math.exp %275 : vector<2x32xf32>
    %cst_67 = arith.constant 1.000000e+00 : f32
    %277 = vector.broadcast %cst_67 : f32 to vector<2x32xf32>
    %278 = arith.addf %277, %276 : vector<2x32xf32>
    %279 = arith.divf %277, %278 : vector<2x32xf32>
    %280 = vector.extract_strided_slice %268 {offsets = [0, 32], sizes = [2, 32], strides = [1, 1]} : vector<2x96xf32> to vector<2x32xf32>
    %281 = vector.extract_strided_slice %271 {offsets = [0, 32], sizes = [2, 32], strides = [1, 1]} : vector<2x96xf32> to vector<2x32xf32>
    %282 = arith.addf %280, %281 : vector<2x32xf32>
    %283 = arith.negf %282 : vector<2x32xf32>
    %284 = math.exp %283 : vector<2x32xf32>
    %cst_68 = arith.constant 1.000000e+00 : f32
    %285 = vector.broadcast %cst_68 : f32 to vector<2x32xf32>
    %286 = arith.addf %285, %284 : vector<2x32xf32>
    %287 = arith.divf %285, %286 : vector<2x32xf32>
    %288 = vector.extract_strided_slice %268 {offsets = [0, 64], sizes = [2, 32], strides = [1, 1]} : vector<2x96xf32> to vector<2x32xf32>
    %289 = vector.extract_strided_slice %271 {offsets = [0, 64], sizes = [2, 32], strides = [1, 1]} : vector<2x96xf32> to vector<2x32xf32>
    %290 = arith.mulf %279, %289 : vector<2x32xf32>
    %291 = arith.addf %288, %290 : vector<2x32xf32>
    %292 = math.tanh %291 : vector<2x32xf32>
    %cst_69 = arith.constant 1.000000e+00 : f32
    %293 = vector.broadcast %cst_69 : f32 to vector<2x32xf32>
    %294 = arith.subf %293, %287 : vector<2x32xf32>
    %295 = arith.mulf %294, %292 : vector<2x32xf32>
    %296 = arith.mulf %287, %267 : vector<2x32xf32>
    %297 = arith.addf %295, %296 : vector<2x32xf32>
    %c0_70 = arith.constant 0 : index
    %c0_71 = arith.constant 0 : index
    %298 = vector.load %arg13[%c0_70, %c0_71] : memref<16x32xf32, #tpu.memory_space<vmem>>, vector<2x32xf32>
    tpu.vector_store %arg13[%c0_70, %c0_71], %297 {strides = array<i32>} : memref<16x32xf32, #tpu.memory_space<vmem>>, vector<2x32xf32>,
    %299 = vector.extract_strided_slice %265 {offsets = [2, 0], sizes = [2, 96], strides = [1, 1]} : vector<16x96xf32> to vector<2x96xf32>
    %cst_72 = arith.constant dense<0.000000e+00> : vector<2x96xf32>
    %300 = tpu.matmul %297, %260, %cst_72 {dimension_numbers = #tpu.dot_dimension_numbers<[1], [0], [0], [1], [0, 0, 1, 1], [], []>} : vector<2x32xf32>, vector<32x96xf32>, vector<2x96xf32> -> vector<2x96xf32>
    %301 = vector.broadcast %262 : vector<1x96xf32> to vector<2x96xf32>
    %302 = arith.addf %300, %301 : vector<2x96xf32>
    %303 = vector.extract_strided_slice %299 {offsets = [0, 0], sizes = [2, 32], strides = [1, 1]} : vector<2x96xf32> to vector<2x32xf32>
    %304 = vector.extract_strided_slice %302 {offsets = [0, 0], sizes = [2, 32], strides = [1, 1]} : vector<2x96xf32> to vector<2x32xf32>
    %305 = arith.addf %303, %304 : vector<2x32xf32>
    %306 = arith.negf %305 : vector<2x32xf32>
    %307 = math.exp %306 : vector<2x32xf32>
    %cst_73 = arith.constant 1.000000e+00 : f32
    %308 = vector.broadcast %cst_73 : f32 to vector<2x32xf32>
    %309 = arith.addf %308, %307 : vector<2x32xf32>
    %310 = arith.divf %308, %309 : vector<2x32xf32>
    %311 = vector.extract_strided_slice %299 {offsets = [0, 32], sizes = [2, 32], strides = [1, 1]} : vector<2x96xf32> to vector<2x32xf32>
    %312 = vector.extract_strided_slice %302 {offsets = [0, 32], sizes = [2, 32], strides = [1, 1]} : vector<2x96xf32> to vector<2x32xf32>
    %313 = arith.addf %311, %312 : vector<2x32xf32>
    %314 = arith.negf %313 : vector<2x32xf32>
    %315 = math.exp %314 : vector<2x32xf32>
    %cst_74 = arith.constant 1.000000e+00 : f32
    %316 = vector.broadcast %cst_74 : f32 to vector<2x32xf32>
    %317 = arith.addf %316, %315 : vector<2x32xf32>
    %318 = arith.divf %316, %317 : vector<2x32xf32>
    %319 = vector.extract_strided_slice %299 {offsets = [0, 64], sizes = [2, 32], strides = [1, 1]} : vector<2x96xf32> to vector<2x32xf32>
    %320 = vector.extract_strided_slice %302 {offsets = [0, 64], sizes = [2, 32], strides = [1, 1]} : vector<2x96xf32> to vector<2x32xf32>
    %321 = arith.mulf %310, %320 : vector<2x32xf32>
    %322 = arith.addf %319, %321 : vector<2x32xf32>
    %323 = math.tanh %322 : vector<2x32xf32>
    %cst_75 = arith.constant 1.000000e+00 : f32
    %324 = vector.broadcast %cst_75 : f32 to vector<2x32xf32>
    %325 = arith.subf %324, %318 : vector<2x32xf32>
    %326 = arith.mulf %325, %323 : vector<2x32xf32>
    %327 = arith.mulf %318, %297 : vector<2x32xf32>
    %328 = arith.addf %326, %327 : vector<2x32xf32>
    %c2_76 = arith.constant 2 : index
    %c0_77 = arith.constant 0 : index
    %329 = vector.load %arg13[%c2_76, %c0_77] : memref<16x32xf32, #tpu.memory_space<vmem>>, vector<2x32xf32>
    tpu.vector_store %arg13[%c2_76, %c0_77], %328 {strides = array<i32>} : memref<16x32xf32, #tpu.memory_space<vmem>>, vector<2x32xf32>,
    %330 = vector.extract_strided_slice %265 {offsets = [4, 0], sizes = [2, 96], strides = [1, 1]} : vector<16x96xf32> to vector<2x96xf32>
    %cst_78 = arith.constant dense<0.000000e+00> : vector<2x96xf32>
    %331 = tpu.matmul %328, %260, %cst_78 {dimension_numbers = #tpu.dot_dimension_numbers<[1], [0], [0], [1], [0, 0, 1, 1], [], []>} : vector<2x32xf32>, vector<32x96xf32>, vector<2x96xf32> -> vector<2x96xf32>
    %332 = vector.broadcast %262 : vector<1x96xf32> to vector<2x96xf32>
    %333 = arith.addf %331, %332 : vector<2x96xf32>
    %334 = vector.extract_strided_slice %330 {offsets = [0, 0], sizes = [2, 32], strides = [1, 1]} : vector<2x96xf32> to vector<2x32xf32>
    %335 = vector.extract_strided_slice %333 {offsets = [0, 0], sizes = [2, 32], strides = [1, 1]} : vector<2x96xf32> to vector<2x32xf32>
    %336 = arith.addf %334, %335 : vector<2x32xf32>
    %337 = arith.negf %336 : vector<2x32xf32>
    %338 = math.exp %337 : vector<2x32xf32>
    %cst_79 = arith.constant 1.000000e+00 : f32
    %339 = vector.broadcast %cst_79 : f32 to vector<2x32xf32>
    %340 = arith.addf %339, %338 : vector<2x32xf32>
    %341 = arith.divf %339, %340 : vector<2x32xf32>
    %342 = vector.extract_strided_slice %330 {offsets = [0, 32], sizes = [2, 32], strides = [1, 1]} : vector<2x96xf32> to vector<2x32xf32>
    %343 = vector.extract_strided_slice %333 {offsets = [0, 32], sizes = [2, 32], strides = [1, 1]} : vector<2x96xf32> to vector<2x32xf32>
    %344 = arith.addf %342, %343 : vector<2x32xf32>
    %345 = arith.negf %344 : vector<2x32xf32>
    %346 = math.exp %345 : vector<2x32xf32>
    %cst_80 = arith.constant 1.000000e+00 : f32
    %347 = vector.broadcast %cst_80 : f32 to vector<2x32xf32>
    %348 = arith.addf %347, %346 : vector<2x32xf32>
    %349 = arith.divf %347, %348 : vector<2x32xf32>
    %350 = vector.extract_strided_slice %330 {offsets = [0, 64], sizes = [2, 32], strides = [1, 1]} : vector<2x96xf32> to vector<2x32xf32>
    %351 = vector.extract_strided_slice %333 {offsets = [0, 64], sizes = [2, 32], strides = [1, 1]} : vector<2x96xf32> to vector<2x32xf32>
    %352 = arith.mulf %341, %351 : vector<2x32xf32>
    %353 = arith.addf %350, %352 : vector<2x32xf32>
    %354 = math.tanh %353 : vector<2x32xf32>
    %cst_81 = arith.constant 1.000000e+00 : f32
    %355 = vector.broadcast %cst_81 : f32 to vector<2x32xf32>
    %356 = arith.subf %355, %349 : vector<2x32xf32>
    %357 = arith.mulf %356, %354 : vector<2x32xf32>
    %358 = arith.mulf %349, %328 : vector<2x32xf32>
    %359 = arith.addf %357, %358 : vector<2x32xf32>
    %c4_82 = arith.constant 4 : index
    %c0_83 = arith.constant 0 : index
    %360 = vector.load %arg13[%c4_82, %c0_83] : memref<16x32xf32, #tpu.memory_space<vmem>>, vector<2x32xf32>
    tpu.vector_store %arg13[%c4_82, %c0_83], %359 {strides = array<i32>} : memref<16x32xf32, #tpu.memory_space<vmem>>, vector<2x32xf32>,
    %361 = vector.extract_strided_slice %265 {offsets = [6, 0], sizes = [2, 96], strides = [1, 1]} : vector<16x96xf32> to vector<2x96xf32>
    %cst_84 = arith.constant dense<0.000000e+00> : vector<2x96xf32>
    %362 = tpu.matmul %359, %260, %cst_84 {dimension_numbers = #tpu.dot_dimension_numbers<[1], [0], [0], [1], [0, 0, 1, 1], [], []>} : vector<2x32xf32>, vector<32x96xf32>, vector<2x96xf32> -> vector<2x96xf32>
    %363 = vector.broadcast %262 : vector<1x96xf32> to vector<2x96xf32>
    %364 = arith.addf %362, %363 : vector<2x96xf32>
    %365 = vector.extract_strided_slice %361 {offsets = [0, 0], sizes = [2, 32], strides = [1, 1]} : vector<2x96xf32> to vector<2x32xf32>
    %366 = vector.extract_strided_slice %364 {offsets = [0, 0], sizes = [2, 32], strides = [1, 1]} : vector<2x96xf32> to vector<2x32xf32>
    %367 = arith.addf %365, %366 : vector<2x32xf32>
    %368 = arith.negf %367 : vector<2x32xf32>
    %369 = math.exp %368 : vector<2x32xf32>
    %cst_85 = arith.constant 1.000000e+00 : f32
    %370 = vector.broadcast %cst_85 : f32 to vector<2x32xf32>
    %371 = arith.addf %370, %369 : vector<2x32xf32>
    %372 = arith.divf %370, %371 : vector<2x32xf32>
    %373 = vector.extract_strided_slice %361 {offsets = [0, 32], sizes = [2, 32], strides = [1, 1]} : vector<2x96xf32> to vector<2x32xf32>
    %374 = vector.extract_strided_slice %364 {offsets = [0, 32], sizes = [2, 32], strides = [1, 1]} : vector<2x96xf32> to vector<2x32xf32>
    %375 = arith.addf %373, %374 : vector<2x32xf32>
    %376 = arith.negf %375 : vector<2x32xf32>
    %377 = math.exp %376 : vector<2x32xf32>
    %cst_86 = arith.constant 1.000000e+00 : f32
    %378 = vector.broadcast %cst_86 : f32 to vector<2x32xf32>
    %379 = arith.addf %378, %377 : vector<2x32xf32>
    %380 = arith.divf %378, %379 : vector<2x32xf32>
    %381 = vector.extract_strided_slice %361 {offsets = [0, 64], sizes = [2, 32], strides = [1, 1]} : vector<2x96xf32> to vector<2x32xf32>
    %382 = vector.extract_strided_slice %364 {offsets = [0, 64], sizes = [2, 32], strides = [1, 1]} : vector<2x96xf32> to vector<2x32xf32>
    %383 = arith.mulf %372, %382 : vector<2x32xf32>
    %384 = arith.addf %381, %383 : vector<2x32xf32>
    %385 = math.tanh %384 : vector<2x32xf32>
    %cst_87 = arith.constant 1.000000e+00 : f32
    %386 = vector.broadcast %cst_87 : f32 to vector<2x32xf32>
    %387 = arith.subf %386, %380 : vector<2x32xf32>
    %388 = arith.mulf %387, %385 : vector<2x32xf32>
    %389 = arith.mulf %380, %359 : vector<2x32xf32>
    %390 = arith.addf %388, %389 : vector<2x32xf32>
    %c6_88 = arith.constant 6 : index
    %c0_89 = arith.constant 0 : index
    %391 = vector.load %arg13[%c6_88, %c0_89] : memref<16x32xf32, #tpu.memory_space<vmem>>, vector<2x32xf32>
    tpu.vector_store %arg13[%c6_88, %c0_89], %390 {strides = array<i32>} : memref<16x32xf32, #tpu.memory_space<vmem>>, vector<2x32xf32>,
    %392 = vector.extract_strided_slice %265 {offsets = [8, 0], sizes = [2, 96], strides = [1, 1]} : vector<16x96xf32> to vector<2x96xf32>
    %cst_90 = arith.constant dense<0.000000e+00> : vector<2x96xf32>
    %393 = tpu.matmul %390, %260, %cst_90 {dimension_numbers = #tpu.dot_dimension_numbers<[1], [0], [0], [1], [0, 0, 1, 1], [], []>} : vector<2x32xf32>, vector<32x96xf32>, vector<2x96xf32> -> vector<2x96xf32>
    %394 = vector.broadcast %262 : vector<1x96xf32> to vector<2x96xf32>
    %395 = arith.addf %393, %394 : vector<2x96xf32>
    %396 = vector.extract_strided_slice %392 {offsets = [0, 0], sizes = [2, 32], strides = [1, 1]} : vector<2x96xf32> to vector<2x32xf32>
    %397 = vector.extract_strided_slice %395 {offsets = [0, 0], sizes = [2, 32], strides = [1, 1]} : vector<2x96xf32> to vector<2x32xf32>
    %398 = arith.addf %396, %397 : vector<2x32xf32>
    %399 = arith.negf %398 : vector<2x32xf32>
    %400 = math.exp %399 : vector<2x32xf32>
    %cst_91 = arith.constant 1.000000e+00 : f32
    %401 = vector.broadcast %cst_91 : f32 to vector<2x32xf32>
    %402 = arith.addf %401, %400 : vector<2x32xf32>
    %403 = arith.divf %401, %402 : vector<2x32xf32>
    %404 = vector.extract_strided_slice %392 {offsets = [0, 32], sizes = [2, 32], strides = [1, 1]} : vector<2x96xf32> to vector<2x32xf32>
    %405 = vector.extract_strided_slice %395 {offsets = [0, 32], sizes = [2, 32], strides = [1, 1]} : vector<2x96xf32> to vector<2x32xf32>
    %406 = arith.addf %404, %405 : vector<2x32xf32>
    %407 = arith.negf %406 : vector<2x32xf32>
    %408 = math.exp %407 : vector<2x32xf32>
    %cst_92 = arith.constant 1.000000e+00 : f32
    %409 = vector.broadcast %cst_92 : f32 to vector<2x32xf32>
    %410 = arith.addf %409, %408 : vector<2x32xf32>
    %411 = arith.divf %409, %410 : vector<2x32xf32>
    %412 = vector.extract_strided_slice %392 {offsets = [0, 64], sizes = [2, 32], strides = [1, 1]} : vector<2x96xf32> to vector<2x32xf32>
    %413 = vector.extract_strided_slice %395 {offsets = [0, 64], sizes = [2, 32], strides = [1, 1]} : vector<2x96xf32> to vector<2x32xf32>
    %414 = arith.mulf %403, %413 : vector<2x32xf32>
    %415 = arith.addf %412, %414 : vector<2x32xf32>
    %416 = math.tanh %415 : vector<2x32xf32>
    %cst_93 = arith.constant 1.000000e+00 : f32
    %417 = vector.broadcast %cst_93 : f32 to vector<2x32xf32>
    %418 = arith.subf %417, %411 : vector<2x32xf32>
    %419 = arith.mulf %418, %416 : vector<2x32xf32>
    %420 = arith.mulf %411, %390 : vector<2x32xf32>
    %421 = arith.addf %419, %420 : vector<2x32xf32>
    %c8_94 = arith.constant 8 : index
    %c0_95 = arith.constant 0 : index
    %422 = vector.load %arg13[%c8_94, %c0_95] : memref<16x32xf32, #tpu.memory_space<vmem>>, vector<2x32xf32>
    tpu.vector_store %arg13[%c8_94, %c0_95], %421 {strides = array<i32>} : memref<16x32xf32, #tpu.memory_space<vmem>>, vector<2x32xf32>,
    %423 = vector.extract_strided_slice %265 {offsets = [10, 0], sizes = [2, 96], strides = [1, 1]} : vector<16x96xf32> to vector<2x96xf32>
    %cst_96 = arith.constant dense<0.000000e+00> : vector<2x96xf32>
    %424 = tpu.matmul %421, %260, %cst_96 {dimension_numbers = #tpu.dot_dimension_numbers<[1], [0], [0], [1], [0, 0, 1, 1], [], []>} : vector<2x32xf32>, vector<32x96xf32>, vector<2x96xf32> -> vector<2x96xf32>
    %425 = vector.broadcast %262 : vector<1x96xf32> to vector<2x96xf32>
    %426 = arith.addf %424, %425 : vector<2x96xf32>
    %427 = vector.extract_strided_slice %423 {offsets = [0, 0], sizes = [2, 32], strides = [1, 1]} : vector<2x96xf32> to vector<2x32xf32>
    %428 = vector.extract_strided_slice %426 {offsets = [0, 0], sizes = [2, 32], strides = [1, 1]} : vector<2x96xf32> to vector<2x32xf32>
    %429 = arith.addf %427, %428 : vector<2x32xf32>
    %430 = arith.negf %429 : vector<2x32xf32>
    %431 = math.exp %430 : vector<2x32xf32>
    %cst_97 = arith.constant 1.000000e+00 : f32
    %432 = vector.broadcast %cst_97 : f32 to vector<2x32xf32>
    %433 = arith.addf %432, %431 : vector<2x32xf32>
    %434 = arith.divf %432, %433 : vector<2x32xf32>
    %435 = vector.extract_strided_slice %423 {offsets = [0, 32], sizes = [2, 32], strides = [1, 1]} : vector<2x96xf32> to vector<2x32xf32>
    %436 = vector.extract_strided_slice %426 {offsets = [0, 32], sizes = [2, 32], strides = [1, 1]} : vector<2x96xf32> to vector<2x32xf32>
    %437 = arith.addf %435, %436 : vector<2x32xf32>
    %438 = arith.negf %437 : vector<2x32xf32>
    %439 = math.exp %438 : vector<2x32xf32>
    %cst_98 = arith.constant 1.000000e+00 : f32
    %440 = vector.broadcast %cst_98 : f32 to vector<2x32xf32>
    %441 = arith.addf %440, %439 : vector<2x32xf32>
    %442 = arith.divf %440, %441 : vector<2x32xf32>
    %443 = vector.extract_strided_slice %423 {offsets = [0, 64], sizes = [2, 32], strides = [1, 1]} : vector<2x96xf32> to vector<2x32xf32>
    %444 = vector.extract_strided_slice %426 {offsets = [0, 64], sizes = [2, 32], strides = [1, 1]} : vector<2x96xf32> to vector<2x32xf32>
    %445 = arith.mulf %434, %444 : vector<2x32xf32>
    %446 = arith.addf %443, %445 : vector<2x32xf32>
    %447 = math.tanh %446 : vector<2x32xf32>
    %cst_99 = arith.constant 1.000000e+00 : f32
    %448 = vector.broadcast %cst_99 : f32 to vector<2x32xf32>
    %449 = arith.subf %448, %442 : vector<2x32xf32>
    %450 = arith.mulf %449, %447 : vector<2x32xf32>
    %451 = arith.mulf %442, %421 : vector<2x32xf32>
    %452 = arith.addf %450, %451 : vector<2x32xf32>
    %c10_100 = arith.constant 10 : index
    %c0_101 = arith.constant 0 : index
    %453 = vector.load %arg13[%c10_100, %c0_101] : memref<16x32xf32, #tpu.memory_space<vmem>>, vector<2x32xf32>
    tpu.vector_store %arg13[%c10_100, %c0_101], %452 {strides = array<i32>} : memref<16x32xf32, #tpu.memory_space<vmem>>, vector<2x32xf32>,
    %454 = vector.extract_strided_slice %265 {offsets = [12, 0], sizes = [2, 96], strides = [1, 1]} : vector<16x96xf32> to vector<2x96xf32>
    %cst_102 = arith.constant dense<0.000000e+00> : vector<2x96xf32>
    %455 = tpu.matmul %452, %260, %cst_102 {dimension_numbers = #tpu.dot_dimension_numbers<[1], [0], [0], [1], [0, 0, 1, 1], [], []>} : vector<2x32xf32>, vector<32x96xf32>, vector<2x96xf32> -> vector<2x96xf32>
    %456 = vector.broadcast %262 : vector<1x96xf32> to vector<2x96xf32>
    %457 = arith.addf %455, %456 : vector<2x96xf32>
    %458 = vector.extract_strided_slice %454 {offsets = [0, 0], sizes = [2, 32], strides = [1, 1]} : vector<2x96xf32> to vector<2x32xf32>
    %459 = vector.extract_strided_slice %457 {offsets = [0, 0], sizes = [2, 32], strides = [1, 1]} : vector<2x96xf32> to vector<2x32xf32>
    %460 = arith.addf %458, %459 : vector<2x32xf32>
    %461 = arith.negf %460 : vector<2x32xf32>
    %462 = math.exp %461 : vector<2x32xf32>
    %cst_103 = arith.constant 1.000000e+00 : f32
    %463 = vector.broadcast %cst_103 : f32 to vector<2x32xf32>
    %464 = arith.addf %463, %462 : vector<2x32xf32>
    %465 = arith.divf %463, %464 : vector<2x32xf32>
    %466 = vector.extract_strided_slice %454 {offsets = [0, 32], sizes = [2, 32], strides = [1, 1]} : vector<2x96xf32> to vector<2x32xf32>
    %467 = vector.extract_strided_slice %457 {offsets = [0, 32], sizes = [2, 32], strides = [1, 1]} : vector<2x96xf32> to vector<2x32xf32>
    %468 = arith.addf %466, %467 : vector<2x32xf32>
    %469 = arith.negf %468 : vector<2x32xf32>
    %470 = math.exp %469 : vector<2x32xf32>
    %cst_104 = arith.constant 1.000000e+00 : f32
    %471 = vector.broadcast %cst_104 : f32 to vector<2x32xf32>
    %472 = arith.addf %471, %470 : vector<2x32xf32>
    %473 = arith.divf %471, %472 : vector<2x32xf32>
    %474 = vector.extract_strided_slice %454 {offsets = [0, 64], sizes = [2, 32], strides = [1, 1]} : vector<2x96xf32> to vector<2x32xf32>
    %475 = vector.extract_strided_slice %457 {offsets = [0, 64], sizes = [2, 32], strides = [1, 1]} : vector<2x96xf32> to vector<2x32xf32>
    %476 = arith.mulf %465, %475 : vector<2x32xf32>
    %477 = arith.addf %474, %476 : vector<2x32xf32>
    %478 = math.tanh %477 : vector<2x32xf32>
    %cst_105 = arith.constant 1.000000e+00 : f32
    %479 = vector.broadcast %cst_105 : f32 to vector<2x32xf32>
    %480 = arith.subf %479, %473 : vector<2x32xf32>
    %481 = arith.mulf %480, %478 : vector<2x32xf32>
    %482 = arith.mulf %473, %452 : vector<2x32xf32>
    %483 = arith.addf %481, %482 : vector<2x32xf32>
    %c12_106 = arith.constant 12 : index
    %c0_107 = arith.constant 0 : index
    %484 = vector.load %arg13[%c12_106, %c0_107] : memref<16x32xf32, #tpu.memory_space<vmem>>, vector<2x32xf32>
    tpu.vector_store %arg13[%c12_106, %c0_107], %483 {strides = array<i32>} : memref<16x32xf32, #tpu.memory_space<vmem>>, vector<2x32xf32>,
    %485 = vector.extract_strided_slice %265 {offsets = [14, 0], sizes = [2, 96], strides = [1, 1]} : vector<16x96xf32> to vector<2x96xf32>
    %cst_108 = arith.constant dense<0.000000e+00> : vector<2x96xf32>
    %486 = tpu.matmul %483, %260, %cst_108 {dimension_numbers = #tpu.dot_dimension_numbers<[1], [0], [0], [1], [0, 0, 1, 1], [], []>} : vector<2x32xf32>, vector<32x96xf32>, vector<2x96xf32> -> vector<2x96xf32>
    %487 = vector.broadcast %262 : vector<1x96xf32> to vector<2x96xf32>
    %488 = arith.addf %486, %487 : vector<2x96xf32>
    %489 = vector.extract_strided_slice %485 {offsets = [0, 0], sizes = [2, 32], strides = [1, 1]} : vector<2x96xf32> to vector<2x32xf32>
    %490 = vector.extract_strided_slice %488 {offsets = [0, 0], sizes = [2, 32], strides = [1, 1]} : vector<2x96xf32> to vector<2x32xf32>
    %491 = arith.addf %489, %490 : vector<2x32xf32>
    %492 = arith.negf %491 : vector<2x32xf32>
    %493 = math.exp %492 : vector<2x32xf32>
    %cst_109 = arith.constant 1.000000e+00 : f32
    %494 = vector.broadcast %cst_109 : f32 to vector<2x32xf32>
    %495 = arith.addf %494, %493 : vector<2x32xf32>
    %496 = arith.divf %494, %495 : vector<2x32xf32>
    %497 = vector.extract_strided_slice %485 {offsets = [0, 32], sizes = [2, 32], strides = [1, 1]} : vector<2x96xf32> to vector<2x32xf32>
    %498 = vector.extract_strided_slice %488 {offsets = [0, 32], sizes = [2, 32], strides = [1, 1]} : vector<2x96xf32> to vector<2x32xf32>
    %499 = arith.addf %497, %498 : vector<2x32xf32>
    %500 = arith.negf %499 : vector<2x32xf32>
    %501 = math.exp %500 : vector<2x32xf32>
    %cst_110 = arith.constant 1.000000e+00 : f32
    %502 = vector.broadcast %cst_110 : f32 to vector<2x32xf32>
    %503 = arith.addf %502, %501 : vector<2x32xf32>
    %504 = arith.divf %502, %503 : vector<2x32xf32>
    %505 = vector.extract_strided_slice %485 {offsets = [0, 64], sizes = [2, 32], strides = [1, 1]} : vector<2x96xf32> to vector<2x32xf32>
    %506 = vector.extract_strided_slice %488 {offsets = [0, 64], sizes = [2, 32], strides = [1, 1]} : vector<2x96xf32> to vector<2x32xf32>
    %507 = arith.mulf %496, %506 : vector<2x32xf32>
    %508 = arith.addf %505, %507 : vector<2x32xf32>
    %509 = math.tanh %508 : vector<2x32xf32>
    %cst_111 = arith.constant 1.000000e+00 : f32
    %510 = vector.broadcast %cst_111 : f32 to vector<2x32xf32>
    %511 = arith.subf %510, %504 : vector<2x32xf32>
    %512 = arith.mulf %511, %509 : vector<2x32xf32>
    %513 = arith.mulf %504, %483 : vector<2x32xf32>
    %514 = arith.addf %512, %513 : vector<2x32xf32>
    %c14_112 = arith.constant 14 : index
    %c0_113 = arith.constant 0 : index
    %515 = vector.load %arg13[%c14_112, %c0_113] : memref<16x32xf32, #tpu.memory_space<vmem>>, vector<2x32xf32>
    tpu.vector_store %arg13[%c14_112, %c0_113], %514 {strides = array<i32>} : memref<16x32xf32, #tpu.memory_space<vmem>>, vector<2x32xf32>,
    %c0_114 = arith.constant 0 : index
    %c0_115 = arith.constant 0 : index
    %516 = vector.load %arg13[%c0_114, %c0_115] : memref<16x32xf32, #tpu.memory_space<vmem>>, vector<16x32xf32>
    %c0_116 = arith.constant 0 : index
    %c0_117 = arith.constant 0 : index
    %517 = vector.load %arg10[%c0_116, %c0_117] : memref<32x64xf32, #tpu.memory_space<vmem>>, vector<32x64xf32>
    %cst_118 = arith.constant dense<0.000000e+00> : vector<16x64xf32>
    %518 = tpu.matmul %516, %517, %cst_118 {dimension_numbers = #tpu.dot_dimension_numbers<[1], [0], [0], [1], [0, 0, 1, 1], [], []>} : vector<16x32xf32>, vector<32x64xf32>, vector<16x64xf32> -> vector<16x64xf32>
    %c0_119 = arith.constant 0 : index
    %c0_120 = arith.constant 0 : index
    %519 = vector.load %arg11[%c0_119, %c0_120] : memref<1x64xf32, #tpu.memory_space<vmem>>, vector<1x64xf32>
    %520 = vector.broadcast %519 : vector<1x64xf32> to vector<16x64xf32>
    %521 = arith.addf %518, %520 : vector<16x64xf32>
    %c0_121 = arith.constant 0 : index
    %c0_122 = arith.constant 0 : index
    %522 = vector.load %arg12[%c0_121, %c0_122] : memref<16x64xf32, #tpu.memory_space<vmem>>, vector<16x64xf32>
    tpu.vector_store %arg12[%c0_121, %c0_122], %521 {strides = array<i32>} : memref<16x64xf32, #tpu.memory_space<vmem>>, vector<16x64xf32>,
    return
  }
}

</mosaic_0001>

<llo_original>
// kernel: baseline_forward.2
$region0: #{baseline_forward.2}
  #allocation0 [shape = 'u32[]', space=smem, size = 0x4, offset = 0x4, fixed_abs, tag = 'smem constant byte address 0x4 - core index']
  #allocation1 [shape = 'u32[144,128]{1,0:T(1,128)}', space=vmem, size = 0x12000, scoped, tag = 'internal scratch']
  #allocation2 [shape = 'f32[16,32]{1,0:T(8,128)}', space=vmem, size = 0x2000, scoped, tag = 'scratch operand']
  %s0 = inlined_call_operand.vmem [shape: f32[16,16], index: 0, kind: input, shape index: {}]
  %s1 = inlined_call_operand.vmem [shape: f32[16,96], index: 1, kind: input, shape index: {}]
  %s2 = inlined_call_operand.vmem [shape: f32[32,96], index: 2, kind: input, shape index: {}]
  %s3 = inlined_call_operand.vmem [shape: f32[1,96], index: 3, kind: input, shape index: {}]
  %s4 = inlined_call_operand.vmem [shape: f32[1,96], index: 4, kind: input, shape index: {}]
  %s5 = inlined_call_operand.vmem [shape: f32[32,96], index: 5, kind: input, shape index: {}]
  %s6 = inlined_call_operand.vmem [shape: f32[32,96], index: 6, kind: input, shape index: {}]
  %s7 = inlined_call_operand.vmem [shape: f32[1,96], index: 7, kind: input, shape index: {}]
  %s8 = inlined_call_operand.vmem [shape: f32[1,96], index: 8, kind: input, shape index: {}]
  %s9 = inlined_call_operand.vmem [shape: f32[2,2,32], index: 9, kind: output, shape index: {}]
  %s10 = sld [smem:[#allocation0]]
  $region46: #{baseline_forward.2} parent=0
    _
  %s12 = ssub.s32 1, %s10
  %s13 = scalar_select 0, %s12, %s10
  // Predicated region
  $region2: #{baseline_forward.2} parent=0 // pred_check
    _
  $region3: #{baseline_forward.2} parent=0 // pred_check_branch
    %15 = sbr.rel (0) target = $region5
  $region4: #{baseline_forward.2} parent=0 // pred_region
    _
  $region5: #{baseline_forward.2} parent=0 // pred_fallthru
    _
  // Predicated region
  $region6: #{baseline_forward.2} parent=0 // pred_check
    _
  $region7: #{baseline_forward.2} parent=0 // pred_check_branch
    %17 = sbr.rel (0) target = $region9
  $region8: #{baseline_forward.2} parent=0 // pred_region
    _
  $region9: #{baseline_forward.2} parent=0 // pred_fallthru
    _
  // Predicated region
  $region10: #{baseline_forward.2} parent=0 // pred_check
    _
  $region11: #{baseline_forward.2} parent=0 // pred_check_branch
    %19 = sbr.rel (0) target = $region13
  $region12: #{baseline_forward.2} parent=0 // pred_region
    _
  $region13: #{baseline_forward.2} parent=0 // pred_fallthru
    _
  // Predicated region
  $region14: #{baseline_forward.2} parent=0 // pred_check
    _
  $region15: #{baseline_forward.2} parent=0 // pred_check_branch
    %21 = sbr.rel (0) target = $region17
  $region16: #{baseline_forward.2} parent=0 // pred_region
    _
  $region17: #{baseline_forward.2} parent=0 // pred_fallthru
    _
  // Predicated region
  $region18: #{baseline_forward.2} parent=0 // pred_check
    _
  $region19: #{baseline_forward.2} parent=0 // pred_check_branch
    %23 = sbr.rel (0) target = $region21
  $region20: #{baseline_forward.2} parent=0 // pred_region
    _
  $region21: #{baseline_forward.2} parent=0 // pred_fallthru
    _
  // Predicated region
  $region22: #{baseline_forward.2} parent=0 // pred_check
    _
  $region23: #{baseline_forward.2} parent=0 // pred_check_branch
    %25 = sbr.rel (0) target = $region25
  $region24: #{baseline_forward.2} parent=0 // pred_region
    _
  $region25: #{baseline_forward.2} parent=0 // pred_fallthru
    _
  // Predicated region
  $region26: #{baseline_forward.2} parent=0 // pred_check
    _
  $region27: #{baseline_forward.2} parent=0 // pred_check_branch
    %27 = sbr.rel (0) target = $region29
  $region28: #{baseline_forward.2} parent=0 // pred_region
    _
  $region29: #{baseline_forward.2} parent=0 // pred_fallthru
    _
  // Predicated region
  $region30: #{baseline_forward.2} parent=0 // pred_check
    _
  $region31: #{baseline_forward.2} parent=0 // pred_check_branch
    %29 = sbr.rel (0) target = $region33
  $region32: #{baseline_forward.2} parent=0 // pred_region
    _
  $region33: #{baseline_forward.2} parent=0 // pred_fallthru
    _
  // Predicated region
  $region34: #{baseline_forward.2} parent=0 // pred_check
    _
  $region35: #{baseline_forward.2} parent=0 // pred_check_branch
    %31 = sbr.rel (0) target = $region37
  $region36: #{baseline_forward.2} parent=0 // pred_region
    _
  $region37: #{baseline_forward.2} parent=0 // pred_fallthru
    _
  %v32 = vld [vmem:[%s0] sm:$0xff]
  %v33 = vld [vmem:[%s0 + $0x8] sm:$0xff]
  %v34 = vld [vmem:[%s1] sm:$0xff]
  %v35 = vld [vmem:[%s1 + $0x8] sm:$0xff]
  %v36 = vld [vmem:[%s2] sm:$0xff]
  %v37 = vld [vmem:[%s2 + $0x8] sm:$0xff]
  %v38 = vld [vmem:[%s2 + $0x10] sm:$0xff]
  %v39 = vld [vmem:[%s2 + $0x18] sm:$0xff]
  %v40 = vld [vmem:[%s3] sm:$0x1]
  %v41 = vld [vmem:[%s4] sm:$0x1]
  %v43 = vlaneseq
  %v44 = vshrl.u32 %v43, 7
  %v45 = vsub.s32 0, %v44
  %v46 = vrot.slane %v40, %v45
  %vm48 = vcmask 130048
  %v50 = vsel %vm48, %v32, 0
  %v53 = vsel %vm48, %v33, 0
  %55 = vmatprep.subr.mxu0 0.0
  %56 = vmatpush1.msra.mxu0 0.0
  %57 = vmatprep.subr.mxu0 0.0
  %58 = vmatpush1.msra.mxu0 0.0
  %59 = vmatprep.subr.mxu0 0.0
  %60 = vmatpush1.msra.mxu0 0.0
  %61 = vmatprep.subr.mxu0 0.0
  %62 = vmatpush1.msra.mxu0 0.0
  %63 = vmatprep.subr.mxu0 0.0
  %64 = vmatpush1.msra.mxu0 0.0
  %65 = vmatprep.subr.mxu0 0.0
  %66 = vmatpush1.msra.mxu0 0.0
  %67 = vmatprep.subr.mxu0 0.0
  %68 = vmatpush1.msra.mxu0 0.0
  %69 = vmatprep.subr.mxu0 0.0
  %70 = vmatpush1.msra.mxu0 0.0
  %71 = vmatprep.subr.mxu0 0.0
  %72 = vmatpush1.msra.mxu0 0.0
  %73 = vmatprep.subr.mxu0 0.0
  %74 = vmatpush1.msra.mxu0 0.0
  %75 = vmatprep.subr.mxu0 0.0
  %76 = vmatpush1.msra.mxu0 0.0
  %77 = vmatprep.subr.mxu0 0.0
  %78 = vmatpush1.msra.mxu0 0.0
  %79 = vmatprep.subr.mxu0 0.0
  %80 = vmatpush1.msra.mxu0 0.0
  %81 = vmatprep.subr.mxu0 0.0
  %82 = vmatpush1.msra.mxu0 0.0
  %83 = vmatprep.subr.mxu0 0.0
  %84 = vmatpush1.msra.mxu0 %v35
  %85 = vmatprep.subr.mxu0 0.0
  %86 = vmatpush1.msra.mxu0 %v34
  %87 = vmatprep.subr.mxu0 0.0
  %88 = vmatpush2.msra.mxu0 0.0
  %89 = vmatprep.subr.mxu0 0.0
  %90 = vmatpush2.msra.mxu0 0.0
  %91 = vmatprep.subr.mxu0 0.0
  %92 = vmatpush2.msra.mxu0 0.0
  %93 = vmatprep.subr.mxu0 0.0
  %94 = vmatpush2.msra.mxu0 0.0
  %95 = vmatprep.subr.mxu0 0.0
  %96 = vmatpush2.msra.mxu0 0.0
  %97 = vmatprep.subr.mxu0 0.0
  %98 = vmatpush2.msra.mxu0 0.0
  %99 = vmatprep.subr.mxu0 0.0
  %100 = vmatpush2.msra.mxu0 0.0
  %101 = vmatprep.subr.mxu0 0.0
  %102 = vmatpush2.msra.mxu0 0.0
  %103 = vmatprep.subr.mxu0 0.0
  %104 = vmatpush2.msra.mxu0 0.0
  %105 = vmatprep.subr.mxu0 0.0
  %106 = vmatpush2.msra.mxu0 0.0
  %107 = vmatprep.subr.mxu0 0.0
  %108 = vmatpush2.msra.mxu0 0.0
  %109 = vmatprep.subr.mxu0 0.0
  %110 = vmatpush2.msra.mxu0 0.0
  %111 = vmatprep.subr.mxu0 0.0
  %112 = vmatpush2.msra.mxu0 0.0
  %113 = vmatprep.subr.mxu0 0.0
  %114 = vmatpush2.msra.mxu0 0.0
  %115 = vmatprep.subr.mxu0 0.0
  %116 = vmatpush2.msra.mxu0 0.0
  %117 = vmatprep.subr.mxu0 0.0
  %118 = vmatpush2.msra.mxu0 0.0
  %119 = vmatprep.mubr.f32.mxu0 0.0
  %120 = vmatmul.mubr.f32.gmra.mxu0 %v50
  %v121 = vpop.f32.mrf.mxu0
  %v122 = vadd.f32 %v46, %v121
  %v123 = vpop.f32.mrf.mxu0
  %124 = vmatprep.mubr.f32.mxu0 0.0
  %125 = vmatmul.mubr.f32.gmra.mxu0 %v53
  %v126 = vpop.f32.mrf.mxu0
  %v127 = vadd.f32 %v46, %v126
  %v128 = vpop.f32.mrf.mxu0
  %129 = vdwg.mxu0
  %v131 = vlaneseq
  %v132 = vshrl.u32 %v131, 7
  %v133 = vsub.s32 0, %v132
  %v134 = vrot.slane %v41, %v133
  %vm136 = vcmask 261120
  %v138 = vsel %vm136, 0.0, 0
  %140 = vmatprep.subr.mxu0 0.0
  %141 = vmatpush1.msra.mxu0 0.0
  %142 = vmatprep.subr.mxu0 0.0
  %143 = vmatpush1.msra.mxu0 0.0
  %144 = vmatprep.subr.mxu0 0.0
  %145 = vmatpush1.msra.mxu0 0.0
  %146 = vmatprep.subr.mxu0 0.0
  %147 = vmatpush1.msra.mxu0 0.0
  %148 = vmatprep.subr.mxu0 0.0
  %149 = vmatpush1.msra.mxu0 0.0
  %150 = vmatprep.subr.mxu0 0.0
  %151 = vmatpush1.msra.mxu0 0.0
  %152 = vmatprep.subr.mxu0 0.0
  %153 = vmatpush1.msra.mxu0 0.0
  %154 = vmatprep.subr.mxu0 0.0
  %155 = vmatpush1.msra.mxu0 0.0
  %156 = vmatprep.subr.mxu0 0.0
  %157 = vmatpush1.msra.mxu0 0.0
  %158 = vmatprep.subr.mxu0 0.0
  %159 = vmatpush1.msra.mxu0 0.0
  %160 = vmatprep.subr.mxu0 0.0
  %161 = vmatpush1.msra.mxu0 0.0
  %162 = vmatprep.subr.mxu0 0.0
  %163 = vmatpush1.msra.mxu0 0.0
  %164 = vmatprep.subr.mxu0 0.0
  %165 = vmatpush1.msra.mxu0 %v39
  %166 = vmatprep.subr.mxu0 0.0
  %167 = vmatpush1.msra.mxu0 %v38
  %168 = vmatprep.subr.mxu0 0.0
  %169 = vmatpush1.msra.mxu0 %v37
  %170 = vmatprep.subr.mxu0 0.0
  %171 = vmatpush1.msra.mxu0 %v36
  %172 = vmatprep.subr.mxu0 0.0
  %173 = vmatpush2.msra.mxu0 0.0
  %174 = vmatprep.subr.mxu0 0.0
  %175 = vmatpush2.msra.mxu0 0.0
  %176 = vmatprep.subr.mxu0 0.0
  %177 = vmatpush2.msra.mxu0 0.0
  %178 = vmatprep.subr.mxu0 0.0
  %179 = vmatpush2.msra.mxu0 0.0
  %180 = vmatprep.subr.mxu0 0.0
  %181 = vmatpush2.msra.mxu0 0.0
  %182 = vmatprep.subr.mxu0 0.0
  %183 = vmatpush2.msra.mxu0 0.0
  %184 = vmatprep.subr.mxu0 0.0
  %185 = vmatpush2.msra.mxu0 0.0
  %186 = vmatprep.subr.mxu0 0.0
  %187 = vmatpush2.msra.mxu0 0.0
  %188 = vmatprep.subr.mxu0 0.0
  %189 = vmatpush2.msra.mxu0 0.0
  %190 = vmatprep.subr.mxu0 0.0
  %191 = vmatpush2.msra.mxu0 0.0
  %192 = vmatprep.subr.mxu0 0.0
  %193 = vmatpush2.msra.mxu0 0.0
  %194 = vmatprep.subr.mxu0 0.0
  %195 = vmatpush2.msra.mxu0 0.0
  %196 = vmatprep.subr.mxu0 0.0
  %197 = vmatpush2.msra.mxu0 0.0
  %198 = vmatprep.subr.mxu0 0.0
  %199 = vmatpush2.msra.mxu0 0.0
  %200 = vmatprep.subr.mxu0 0.0
  %201 = vmatpush2.msra.mxu0 0.0
  %202 = vmatprep.subr.mxu0 0.0
  %203 = vmatpush2.msra.mxu0 0.0
  %204 = vmatprep.mubr.f32.mxu0 0.0
  %205 = vmatmul.mubr.f32.gmra.mxu0 %v138
  %v206 = vpop.f32.mrf.mxu0
  %v207 = vadd.f32 %v134, %v206
  %v208 = vpop.f32.mrf.mxu0
  %209 = vdwg.mxu0
  %v210 = vadd.f32 %v122, %v207
  %v211 = vxor.u32 %v210, 2147483648
  %v212 = vmul.f32 %v211, 1.442695
  %v213 = vpow.pop %v212
  %v214 = vadd.f32 %v213, 1.0
  %v215 = vrcp.pop %v214
  %v216 = vmul.f32 1.0, %v215
  %218 = vrot.lane.b32.xlu0 %v207, 64
  %v219 = vpop.permute.xlu0 %218
  %v221 = vmul.f32 %v216, %v219
  %223 = vrot.lane.b32.xlu0 %v221, 64
  %v224 = vpop.permute.xlu0 %223
  %v226 = vadd.f32 %v122, %v224
  %v227 = vtanh.pop %v226
  %v228 = vsub.f32 1.0, %v216
  %230 = vrot.lane.b32.xlu0 %v227, 96
  %v231 = vpop.permute.xlu0 %230
  %v233 = vmul.f32 %v228, %v231
  %v234 = vmul.f32 %v216, 0.0
  %v235 = vadd.f32 %v233, %v234
  %237 = vrot.lane.b32.xlu0 %v235, 96
  %v238 = vpop.permute.xlu0 %237
  %vm240 = vcmask 254976
  %241 = vst.msk [vmem:[#allocation2] sm:$0x3] %vm240, %v238
  %v242 = vsel %vm136, %v238, 0
  %244 = vmatprep.subr.mxu0 0.0
  %245 = vmatpush1.msra.mxu0 0.0
  %246 = vmatprep.subr.mxu0 0.0
  %247 = vmatpush1.msra.mxu0 0.0
  %248 = vmatprep.subr.mxu0 0.0
  %249 = vmatpush1.msra.mxu0 0.0
  %250 = vmatprep.subr.mxu0 0.0
  %251 = vmatpush1.msra.mxu0 0.0
  %252 = vmatprep.subr.mxu0 0.0
  %253 = vmatpush1.msra.mxu0 0.0
  %254 = vmatprep.subr.mxu0 0.0
  %255 = vmatpush1.msra.mxu0 0.0
  %256 = vmatprep.subr.mxu0 0.0
  %257 = vmatpush1.msra.mxu0 0.0
  %258 = vmatprep.subr.mxu0 0.0
  %259 = vmatpush1.msra.mxu0 0.0
  %260 = vmatprep.subr.mxu0 0.0
  %261 = vmatpush1.msra.mxu0 0.0
  %262 = vmatprep.subr.mxu0 0.0
  %263 = vmatpush1.msra.mxu0 0.0
  %264 = vmatprep.subr.mxu0 0.0
  %265 = vmatpush1.msra.mxu0 0.0
  %266 = vmatprep.subr.mxu0 0.0
  %267 = vmatpush1.msra.mxu0 0.0
  %268 = vmatprep.subr.mxu0 0.0
  %269 = vmatpush1.msra.mxu0 %v39
  %270 = vmatprep.subr.mxu0 0.0
  %271 = vmatpush1.msra.mxu0 %v38
  %272 = vmatprep.subr.mxu0 0.0
  %273 = vmatpush1.msra.mxu0 %v37
  %274 = vmatprep.subr.mxu0 0.0
  %275 = vmatpush1.msra.mxu0 %v36
  %276 = vmatprep.subr.mxu0 0.0
  %277 = vmatpush2.msra.mxu0 0.0
  %278 = vmatprep.subr.mxu0 0.0
  %279 = vmatpush2.msra.mxu0 0.0
  %280 = vmatprep.subr.mxu0 0.0
  %281 = vmatpush2.msra.mxu0 0.0
  %282 = vmatprep.subr.mxu0 0.0
  %283 = vmatpush2.msra.mxu0 0.0
  %284 = vmatprep.subr.mxu0 0.0
  %285 = vmatpush2.msra.mxu0 0.0
  %286 = vmatprep.subr.mxu0 0.0
  %287 = vmatpush2.msra.mxu0 0.0
  %288 = vmatprep.subr.mxu0 0.0
  %289 = vmatpush2.msra.mxu0 0.0
  %290 = vmatprep.subr.mxu0 0.0
  %291 = vmatpush2.msra.mxu0 0.0
  %292 = vmatprep.subr.mxu0 0.0
  %293 = vmatpush2.msra.mxu0 0.0
  %294 = vmatprep.subr.mxu0 0.0
  %295 = vmatpush2.msra.mxu0 0.0
  %296 = vmatprep.subr.mxu0 0.0
  %297 = vmatpush2.msra.mxu0 0.0
  %298 = vmatprep.subr.mxu0 0.0
  %299 = vmatpush2.msra.mxu0 0.0
  %300 = vmatprep.subr.mxu0 0.0
  %301 = vmatpush2.msra.mxu0 0.0
  %302 = vmatprep.subr.mxu0 0.0
  %303 = vmatpush2.msra.mxu0 0.0
  %304 = vmatprep.subr.mxu0 0.0
  %305 = vmatpush2.msra.mxu0 0.0
  %306 = vmatprep.subr.mxu0 0.0
  %307 = vmatpush2.msra.mxu0 0.0
  %308 = vmatprep.mubr.f32.mxu0 0.0
  %309 = vmatmul.mubr.f32.gmra.mxu0 %v242
  %v310 = vpop.f32.mrf.mxu0
  %v311 = vadd.f32 %v134, %v310
  %v312 = vpop.f32.mrf.mxu0
  %313 = vdwg.mxu0
  %v315 = vrot.slane %v311, 6
  %v317 = vadd.f32 %v122, %v315
  %v318 = vxor.u32 %v317, 2147483648
  %v319 = vmul.f32 %v318, 1.442695
  %v320 = vpow.pop %v319
  %v321 = vadd.f32 %v320, 1.0
  %v322 = vrcp.pop %v321
  %v323 = vmul.f32 1.0, %v322
  %324 = vrot.lane.b32.xlu0 %v315, 64
  %v325 = vpop.permute.xlu0 %324
  %v327 = vmul.f32 %v323, %v325
  %329 = vrot.lane.b32.xlu0 %v327, 64
  %v330 = vpop.permute.xlu0 %329
  %v332 = vadd.f32 %v122, %v330
  %v333 = vtanh.pop %v332
  %v334 = vsub.f32 1.0, %v323
  %336 = vrot.lane.b32.xlu0 %v333, 96
  %v337 = vpop.permute.xlu0 %336
  %v339 = vmul.f32 %v334, %v337
  %v340 = vrot.slane %v235, 6
  %v342 = vmul.f32 %v323, %v340
  %v343 = vadd.f32 %v339, %v342
  %345 = vrot.lane.b32.xlu0 %v343, 96
  %v346 = vpop.permute.xlu0 %345
  %vm348 = vcmask 257026
  %349 = vst.msk [vmem:[#allocation2] sm:$0xc] %vm348, %v346
  %v350 = vrot.slane %v343, 2
  %351 = vrot.lane.b32.xlu0 %v350, 96
  %v352 = vpop.permute.xlu0 %351
  %v353 = vsel %vm136, %v352, 0
  %355 = vmatprep.subr.mxu0 0.0
  %356 = vmatpush1.msra.mxu0 0.0
  %357 = vmatprep.subr.mxu0 0.0
  %358 = vmatpush1.msra.mxu0 0.0
  %359 = vmatprep.subr.mxu0 0.0
  %360 = vmatpush1.msra.mxu0 0.0
  %361 = vmatprep.subr.mxu0 0.0
  %362 = vmatpush1.msra.mxu0 0.0
  %363 = vmatprep.subr.mxu0 0.0
  %364 = vmatpush1.msra.mxu0 0.0
  %365 = vmatprep.subr.mxu0 0.0
  %366 = vmatpush1.msra.mxu0 0.0
  %367 = vmatprep.subr.mxu0 0.0
  %368 = vmatpush1.msra.mxu0 0.0
  %369 = vmatprep.subr.mxu0 0.0
  %370 = vmatpush1.msra.mxu0 0.0
  %371 = vmatprep.subr.mxu0 0.0
  %372 = vmatpush1.msra.mxu0 0.0
  %373 = vmatprep.subr.mxu0 0.0
  %374 = vmatpush1.msra.mxu0 0.0
  %375 = vmatprep.subr.mxu0 0.0
  %376 = vmatpush1.msra.mxu0 0.0
  %377 = vmatprep.subr.mxu0 0.0
  %378 = vmatpush1.msra.mxu0 0.0
  %379 = vmatprep.subr.mxu0 0.0
  %380 = vmatpush1.msra.mxu0 %v39
  %381 = vmatprep.subr.mxu0 0.0
  %382 = vmatpush1.msra.mxu0 %v38
  %383 = vmatprep.subr.mxu0 0.0
  %384 = vmatpush1.msra.mxu0 %v37
  %385 = vmatprep.subr.mxu0 0.0
  %386 = vmatpush1.msra.mxu0 %v36
  %387 = vmatprep.subr.mxu0 0.0
  %388 = vmatpush2.msra.mxu0 0.0
  %389 = vmatprep.subr.mxu0 0.0
  %390 = vmatpush2.msra.mxu0 0.0
  %391 = vmatprep.subr.mxu0 0.0
  %392 = vmatpush2.msra.mxu0 0.0
  %393 = vmatprep.subr.mxu0 0.0
  %394 = vmatpush2.msra.mxu0 0.0
  %395 = vmatprep.subr.mxu0 0.0
  %396 = vmatpush2.msra.mxu0 0.0
  %397 = vmatprep.subr.mxu0 0.0
  %398 = vmatpush2.msra.mxu0 0.0
  %399 = vmatprep.subr.mxu0 0.0
  %400 = vmatpush2.msra.mxu0 0.0
  %401 = vmatprep.subr.mxu0 0.0
  %402 = vmatpush2.msra.mxu0 0.0
  %403 = vmatprep.subr.mxu0 0.0
  %404 = vmatpush2.msra.mxu0 0.0
  %405 = vmatprep.subr.mxu0 0.0
  %406 = vmatpush2.msra.mxu0 0.0
  %407 = vmatprep.subr.mxu0 0.0
  %408 = vmatpush2.msra.mxu0 0.0
  %409 = vmatprep.subr.mxu0 0.0
  %410 = vmatpush2.msra.mxu0 0.0
  %411 = vmatprep.subr.mxu0 0.0
  %412 = vmatpush2.msra.mxu0 0.0
  %413 = vmatprep.subr.mxu0 0.0
  %414 = vmatpush2.msra.mxu0 0.0
  %415 = vmatprep.subr.mxu0 0.0
  %416 = vmatpush2.msra.mxu0 0.0
  %417 = vmatprep.subr.mxu0 0.0
  %418 = vmatpush2.msra.mxu0 0.0
  %419 = vmatprep.mubr.f32.mxu0 0.0
  %420 = vmatmul.mubr.f32.gmra.mxu0 %v353
  %v421 = vpop.f32.mrf.mxu0
  %v422 = vadd.f32 %v134, %v421
  %v423 = vpop.f32.mrf.mxu0
  %424 = vdwg.mxu0
  %v426 = vrot.slane %v422, 4
  %v428 = vadd.f32 %v122, %v426
  %v429 = vxor.u32 %v428, 2147483648
  %v430 = vmul.f32 %v429, 1.442695
  %v431 = vpow.pop %v430
  %v432 = vadd.f32 %v431, 1.0
  %v433 = vrcp.pop %v432
  %v434 = vmul.f32 1.0, %v433
  %435 = vrot.lane.b32.xlu0 %v426, 64
  %v436 = vpop.permute.xlu0 %435
  %v438 = vmul.f32 %v434, %v436
  %440 = vrot.lane.b32.xlu0 %v438, 64
  %v441 = vpop.permute.xlu0 %440
  %v443 = vadd.f32 %v122, %v441
  %v444 = vtanh.pop %v443
  %v445 = vsub.f32 1.0, %v434
  %447 = vrot.lane.b32.xlu0 %v444, 96
  %v448 = vpop.permute.xlu0 %447
  %v450 = vmul.f32 %v445, %v448
  %v451 = vrot.slane %v343, 6
  %v453 = vmul.f32 %v434, %v451
  %v454 = vadd.f32 %v450, %v453
  %456 = vrot.lane.b32.xlu0 %v454, 96
  %v457 = vpop.permute.xlu0 %456
  %vm459 = vcmask 259076
  %460 = vst.msk [vmem:[#allocation2] sm:$0x30] %vm459, %v457
  %v461 = vrot.slane %v454, 4
  %462 = vrot.lane.b32.xlu0 %v461, 96
  %v463 = vpop.permute.xlu0 %462
  %v464 = vsel %vm136, %v463, 0
  %466 = vmatprep.subr.mxu0 0.0
  %467 = vmatpush1.msra.mxu0 0.0
  %468 = vmatprep.subr.mxu0 0.0
  %469 = vmatpush1.msra.mxu0 0.0
  %470 = vmatprep.subr.mxu0 0.0
  %471 = vmatpush1.msra.mxu0 0.0
  %472 = vmatprep.subr.mxu0 0.0
  %473 = vmatpush1.msra.mxu0 0.0
  %474 = vmatprep.subr.mxu0 0.0
  %475 = vmatpush1.msra.mxu0 0.0
  %476 = vmatprep.subr.mxu0 0.0
  %477 = vmatpush1.msra.mxu0 0.0
  %478 = vmatprep.subr.mxu0 0.0
  %479 = vmatpush1.msra.mxu0 0.0
  %480 = vmatprep.subr.mxu0 0.0
  %481 = vmatpush1.msra.mxu0 0.0
  %482 = vmatprep.subr.mxu0 0.0
  %483 = vmatpush1.msra.mxu0 0.0
  %484 = vmatprep.subr.mxu0 0.0
  %485 = vmatpush1.msra.mxu0 0.0
  %486 = vmatprep.subr.mxu0 0.0
  %487 = vmatpush1.msra.mxu0 0.0
  %488 = vmatprep.subr.mxu0 0.0
  %489 = vmatpush1.msra.mxu0 0.0
  %490 = vmatprep.subr.mxu0 0.0
  %491 = vmatpush1.msra.mxu0 %v39
  %492 = vmatprep.subr.mxu0 0.0
  %493 = vmatpush1.msra.mxu0 %v38
  %494 = vmatprep.subr.mxu0 0.0
  %495 = vmatpush1.msra.mxu0 %v37
  %496 = vmatprep.subr.mxu0 0.0
  %497 = vmatpush1.msra.mxu0 %v36
  %498 = vmatprep.subr.mxu0 0.0
  %499 = vmatpush2.msra.mxu0 0.0
  %500 = vmatprep.subr.mxu0 0.0
  %501 = vmatpush2.msra.mxu0 0.0
  %502 = vmatprep.subr.mxu0 0.0
  %503 = vmatpush2.msra.mxu0 0.0
  %504 = vmatprep.subr.mxu0 0.0
  %505 = vmatpush2.msra.mxu0 0.0
  %506 = vmatprep.subr.mxu0 0.0
  %507 = vmatpush2.msra.mxu0 0.0
  %508 = vmatprep.subr.mxu0 0.0
  %509 = vmatpush2.msra.mxu0 0.0
  %510 = vmatprep.subr.mxu0 0.0
  %511 = vmatpush2.msra.mxu0 0.0
  %512 = vmatprep.subr.mxu0 0.0
  %513 = vmatpush2.msra.mxu0 0.0
  %514 = vmatprep.subr.mxu0 0.0
  %515 = vmatpush2.msra.mxu0 0.0
  %516 = vmatprep.subr.mxu0 0.0
  %517 = vmatpush2.msra.mxu0 0.0
  %518 = vmatprep.subr.mxu0 0.0
  %519 = vmatpush2.msra.mxu0 0.0
  %520 = vmatprep.subr.mxu0 0.0
  %521 = vmatpush2.msra.mxu0 0.0
  %522 = vmatprep.subr.mxu0 0.0
  %523 = vmatpush2.msra.mxu0 0.0
  %524 = vmatprep.subr.mxu0 0.0
  %525 = vmatpush2.msra.mxu0 0.0
  %526 = vmatprep.subr.mxu0 0.0
  %527 = vmatpush2.msra.mxu0 0.0
  %528 = vmatprep.subr.mxu0 0.0
  %529 = vmatpush2.msra.mxu0 0.0
  %530 = vmatprep.mubr.f32.mxu0 0.0
  %531 = vmatmul.mubr.f32.gmra.mxu0 %v464
  %v532 = vpop.f32.mrf.mxu0
  %v533 = vadd.f32 %v134, %v532
  %v534 = vpop.f32.mrf.mxu0
  %535 = vdwg.mxu0
  %v537 = vrot.slane %v533, 2
  %v539 = vadd.f32 %v122, %v537
  %v540 = vxor.u32 %v539, 2147483648
  %v541 = vmul.f32 %v540, 1.442695
  %v542 = vpow.pop %v541
  %v543 = vadd.f32 %v542, 1.0
  %v544 = vrcp.pop %v543
  %v545 = vmul.f32 1.0, %v544
  %546 = vrot.lane.b32.xlu0 %v537, 64
  %v547 = vpop.permute.xlu0 %546
  %v549 = vmul.f32 %v545, %v547
  %551 = vrot.lane.b32.xlu0 %v549, 64
  %v552 = vpop.permute.xlu0 %551
  %v554 = vadd.f32 %v122, %v552
  %v555 = vtanh.pop %v554
  %v556 = vsub.f32 1.0, %v545
  %558 = vrot.lane.b32.xlu0 %v555, 96
  %v559 = vpop.permute.xlu0 %558
  %v561 = vmul.f32 %v556, %v559
  %v562 = vrot.slane %v454, 6
  %v564 = vmul.f32 %v545, %v562
  %v565 = vadd.f32 %v561, %v564
  %567 = vrot.lane.b32.xlu0 %v565, 96
  %v568 = vpop.permute.xlu0 %567
  %vm570 = vcmask 261126
  %571 = vst.msk [vmem:[#allocation2] sm:$0xc0] %vm570, %v568
  %v572 = vrot.slane %v565, 6
  %573 = vrot.lane.b32.xlu0 %v572, 96
  %v574 = vpop.permute.xlu0 %573
  %v575 = vsel %vm136, %v574, 0
  %577 = vmatprep.subr.mxu0 0.0
  %578 = vmatpush1.msra.mxu0 0.0
  %579 = vmatprep.subr.mxu0 0.0
  %580 = vmatpush1.msra.mxu0 0.0
  %581 = vmatprep.subr.mxu0 0.0
  %582 = vmatpush1.msra.mxu0 0.0
  %583 = vmatprep.subr.mxu0 0.0
  %584 = vmatpush1.msra.mxu0 0.0
  %585 = vmatprep.subr.mxu0 0.0
  %586 = vmatpush1.msra.mxu0 0.0
  %587 = vmatprep.subr.mxu0 0.0
  %588 = vmatpush1.msra.mxu0 0.0
  %589 = vmatprep.subr.mxu0 0.0
  %590 = vmatpush1.msra.mxu0 0.0
  %591 = vmatprep.subr.mxu0 0.0
  %592 = vmatpush1.msra.mxu0 0.0
  %593 = vmatprep.subr.mxu0 0.0
  %594 = vmatpush1.msra.mxu0 0.0
  %595 = vmatprep.subr.mxu0 0.0
  %596 = vmatpush1.msra.mxu0 0.0
  %597 = vmatprep.subr.mxu0 0.0
  %598 = vmatpush1.msra.mxu0 0.0
  %599 = vmatprep.subr.mxu0 0.0
  %600 = vmatpush1.msra.mxu0 0.0
  %601 = vmatprep.subr.mxu0 0.0
  %602 = vmatpush1.msra.mxu0 %v39
  %603 = vmatprep.subr.mxu0 0.0
  %604 = vmatpush1.msra.mxu0 %v38
  %605 = vmatprep.subr.mxu0 0.0
  %606 = vmatpush1.msra.mxu0 %v37
  %607 = vmatprep.subr.mxu0 0.0
  %608 = vmatpush1.msra.mxu0 %v36
  %609 = vmatprep.subr.mxu0 0.0
  %610 = vmatpush2.msra.mxu0 0.0
  %611 = vmatprep.subr.mxu0 0.0
  %612 = vmatpush2.msra.mxu0 0.0
  %613 = vmatprep.subr.mxu0 0.0
  %614 = vmatpush2.msra.mxu0 0.0
  %615 = vmatprep.subr.mxu0 0.0
  %616 = vmatpush2.msra.mxu0 0.0
  %617 = vmatprep.subr.mxu0 0.0
  %618 = vmatpush2.msra.mxu0 0.0
  %619 = vmatprep.subr.mxu0 0.0
  %620 = vmatpush2.msra.mxu0 0.0
  %621 = vmatprep.subr.mxu0 0.0
  %622 = vmatpush2.msra.mxu0 0.0
  %623 = vmatprep.subr.mxu0 0.0
  %624 = vmatpush2.msra.mxu0 0.0
  %625 = vmatprep.subr.mxu0 0.0
  %626 = vmatpush2.msra.mxu0 0.0
  %627 = vmatprep.subr.mxu0 0.0
  %628 = vmatpush2.msra.mxu0 0.0
  %629 = vmatprep.subr.mxu0 0.0
  %630 = vmatpush2.msra.mxu0 0.0
  %631 = vmatprep.subr.mxu0 0.0
  %632 = vmatpush2.msra.mxu0 0.0
  %633 = vmatprep.subr.mxu0 0.0
  %634 = vmatpush2.msra.mxu0 0.0
  %635 = vmatprep.subr.mxu0 0.0
  %636 = vmatpush2.msra.mxu0 0.0
  %637 = vmatprep.subr.mxu0 0.0
  %638 = vmatpush2.msra.mxu0 0.0
  %639 = vmatprep.subr.mxu0 0.0
  %640 = vmatpush2.msra.mxu0 0.0
  %641 = vmatprep.mubr.f32.mxu0 0.0
  %642 = vmatmul.mubr.f32.gmra.mxu0 %v575
  %v643 = vpop.f32.mrf.mxu0
  %v644 = vadd.f32 %v134, %v643
  %v645 = vpop.f32.mrf.mxu0
  %646 = vdwg.mxu0
  %v647 = vadd.f32 %v127, %v644
  %v648 = vxor.u32 %v647, 2147483648
  %v649 = vmul.f32 %v648, 1.442695
  %v650 = vpow.pop %v649
  %v651 = vadd.f32 %v650, 1.0
  %v652 = vrcp.pop %v651
  %v653 = vmul.f32 1.0, %v652
  %655 = vrot.lane.b32.xlu0 %v644, 64
  %v656 = vpop.permute.xlu0 %655
  %v658 = vmul.f32 %v653, %v656
  %660 = vrot.lane.b32.xlu0 %v658, 64
  %v661 = vpop.permute.xlu0 %660
  %v663 = vadd.f32 %v127, %v661
  %v664 = vtanh.pop %v663
  %v665 = vsub.f32 1.0, %v653
  %667 = vrot.lane.b32.xlu0 %v664, 96
  %v668 = vpop.permute.xlu0 %667
  %v670 = vmul.f32 %v665, %v668
  %v672 = vmul.f32 %v653, %v572
  %v673 = vadd.f32 %v670, %v672
  %675 = vrot.lane.b32.xlu0 %v673, 96
  %v676 = vpop.permute.xlu0 %675
  %678 = vst.msk [vmem:[#allocation2 + $0x8] sm:$0x3] %vm240, %v676
  %v679 = vsel %vm136, %v676, 0
  %681 = vmatprep.subr.mxu0 0.0
  %682 = vmatpush1.msra.mxu0 0.0
  %683 = vmatprep.subr.mxu0 0.0
  %684 = vmatpush1.msra.mxu0 0.0
  %685 = vmatprep.subr.mxu0 0.0
  %686 = vmatpush1.msra.mxu0 0.0
  %687 = vmatprep.subr.mxu0 0.0
  %688 = vmatpush1.msra.mxu0 0.0
  %689 = vmatprep.subr.mxu0 0.0
  %690 = vmatpush1.msra.mxu0 0.0
  %691 = vmatprep.subr.mxu0 0.0
  %692 = vmatpush1.msra.mxu0 0.0
  %693 = vmatprep.subr.mxu0 0.0
  %694 = vmatpush1.msra.mxu0 0.0
  %695 = vmatprep.subr.mxu0 0.0
  %696 = vmatpush1.msra.mxu0 0.0
  %697 = vmatprep.subr.mxu0 0.0
  %698 = vmatpush1.msra.mxu0 0.0
  %699 = vmatprep.subr.mxu0 0.0
  %700 = vmatpush1.msra.mxu0 0.0
  %701 = vmatprep.subr.mxu0 0.0
  %702 = vmatpush1.msra.mxu0 0.0
  %703 = vmatprep.subr.mxu0 0.0
  %704 = vmatpush1.msra.mxu0 0.0
  %705 = vmatprep.subr.mxu0 0.0
  %706 = vmatpush1.msra.mxu0 %v39
  %707 = vmatprep.subr.mxu0 0.0
  %708 = vmatpush1.msra.mxu0 %v38
  %709 = vmatprep.subr.mxu0 0.0
  %710 = vmatpush1.msra.mxu0 %v37
  %711 = vmatprep.subr.mxu0 0.0
  %712 = vmatpush1.msra.mxu0 %v36
  %713 = vmatprep.subr.mxu0 0.0
  %714 = vmatpush2.msra.mxu0 0.0
  %715 = vmatprep.subr.mxu0 0.0
  %716 = vmatpush2.msra.mxu0 0.0
  %717 = vmatprep.subr.mxu0 0.0
  %718 = vmatpush2.msra.mxu0 0.0
  %719 = vmatprep.subr.mxu0 0.0
  %720 = vmatpush2.msra.mxu0 0.0
  %721 = vmatprep.subr.mxu0 0.0
  %722 = vmatpush2.msra.mxu0 0.0
  %723 = vmatprep.subr.mxu0 0.0
  %724 = vmatpush2.msra.mxu0 0.0
  %725 = vmatprep.subr.mxu0 0.0
  %726 = vmatpush2.msra.mxu0 0.0
  %727 = vmatprep.subr.mxu0 0.0
  %728 = vmatpush2.msra.mxu0 0.0
  %729 = vmatprep.subr.mxu0 0.0
  %730 = vmatpush2.msra.mxu0 0.0
  %731 = vmatprep.subr.mxu0 0.0
  %732 = vmatpush2.msra.mxu0 0.0
  %733 = vmatprep.subr.mxu0 0.0
  %734 = vmatpush2.msra.mxu0 0.0
  %735 = vmatprep.subr.mxu0 0.0
  %736 = vmatpush2.msra.mxu0 0.0
  %737 = vmatprep.subr.mxu0 0.0
  %738 = vmatpush2.msra.mxu0 0.0
  %739 = vmatprep.subr.mxu0 0.0
  %740 = vmatpush2.msra.mxu0 0.0
  %741 = vmatprep.subr.mxu0 0.0
  %742 = vmatpush2.msra.mxu0 0.0
  %743 = vmatprep.subr.mxu0 0.0
  %744 = vmatpush2.msra.mxu0 0.0
  %745 = vmatprep.mubr.f32.mxu0 0.0
  %746 = vmatmul.mubr.f32.gmra.mxu0 %v679
  %v747 = vpop.f32.mrf.mxu0
  %v748 = vadd.f32 %v134, %v747
  %v749 = vpop.f32.mrf.mxu0
  %750 = vdwg.mxu0
  %v752 = vrot.slane %v748, 6
  %v754 = vadd.f32 %v127, %v752
  %v755 = vxor.u32 %v754, 2147483648
  %v756 = vmul.f32 %v755, 1.442695
  %v757 = vpow.pop %v756
  %v758 = vadd.f32 %v757, 1.0
  %v759 = vrcp.pop %v758
  %v760 = vmul.f32 1.0, %v759
  %761 = vrot.lane.b32.xlu0 %v752, 64
  %v762 = vpop.permute.xlu0 %761
  %v764 = vmul.f32 %v760, %v762
  %766 = vrot.lane.b32.xlu0 %v764, 64
  %v767 = vpop.permute.xlu0 %766
  %v769 = vadd.f32 %v127, %v767
  %v770 = vtanh.pop %v769
  %v771 = vsub.f32 1.0, %v760
  %773 = vrot.lane.b32.xlu0 %v770, 96
  %v774 = vpop.permute.xlu0 %773
  %v776 = vmul.f32 %v771, %v774
  %v777 = vrot.slane %v673, 6
  %v779 = vmul.f32 %v760, %v777
  %v780 = vadd.f32 %v776, %v779
  %782 = vrot.lane.b32.xlu0 %v780, 96
  %v783 = vpop.permute.xlu0 %782
  %785 = vst.msk [vmem:[#allocation2 + $0x8] sm:$0xc] %vm348, %v783
  %v786 = vrot.slane %v780, 2
  %787 = vrot.lane.b32.xlu0 %v786, 96
  %v788 = vpop.permute.xlu0 %787
  %v789 = vsel %vm136, %v788, 0
  %791 = vmatprep.subr.mxu0 0.0
  %792 = vmatpush1.msra.mxu0 0.0
  %793 = vmatprep.subr.mxu0 0.0
  %794 = vmatpush1.msra.mxu0 0.0
  %795 = vmatprep.subr.mxu0 0.0
  %796 = vmatpush1.msra.mxu0 0.0
  %797 = vmatprep.subr.mxu0 0.0
  %798 = vmatpush1.msra.mxu0 0.0
  %799 = vmatprep.subr.mxu0 0.0
  %800 = vmatpush1.msra.mxu0 0.0
  %801 = vmatprep.subr.mxu0 0.0
  %802 = vmatpush1.msra.mxu0 0.0
  %803 = vmatprep.subr.mxu0 0.0
  %804 = vmatpush1.msra.mxu0 0.0
  %805 = vmatprep.subr.mxu0 0.0
  %806 = vmatpush1.msra.mxu0 0.0
  %807 = vmatprep.subr.mxu0 0.0
  %808 = vmatpush1.msra.mxu0 0.0
  %809 = vmatprep.subr.mxu0 0.0
  %810 = vmatpush1.msra.mxu0 0.0
  %811 = vmatprep.subr.mxu0 0.0
  %812 = vmatpush1.msra.mxu0 0.0
  %813 = vmatprep.subr.mxu0 0.0
  %814 = vmatpush1.msra.mxu0 0.0
  %815 = vmatprep.subr.mxu0 0.0
  %816 = vmatpush1.msra.mxu0 %v39
  %817 = vmatprep.subr.mxu0 0.0
  %818 = vmatpush1.msra.mxu0 %v38
  %819 = vmatprep.subr.mxu0 0.0
  %820 = vmatpush1.msra.mxu0 %v37
  %821 = vmatprep.subr.mxu0 0.0
  %822 = vmatpush1.msra.mxu0 %v36
  %823 = vmatprep.subr.mxu0 0.0
  %824 = vmatpush2.msra.mxu0 0.0
  %825 = vmatprep.subr.mxu0 0.0
  %826 = vmatpush2.msra.mxu0 0.0
  %827 = vmatprep.subr.mxu0 0.0
  %828 = vmatpush2.msra.mxu0 0.0
  %829 = vmatprep.subr.mxu0 0.0
  %830 = vmatpush2.msra.mxu0 0.0
  %831 = vmatprep.subr.mxu0 0.0
  %832 = vmatpush2.msra.mxu0 0.0
  %833 = vmatprep.subr.mxu0 0.0
  %834 = vmatpush2.msra.mxu0 0.0
  %835 = vmatprep.subr.mxu0 0.0
  %836 = vmatpush2.msra.mxu0 0.0
  %837 = vmatprep.subr.mxu0 0.0
  %838 = vmatpush2.msra.mxu0 0.0
  %839 = vmatprep.subr.mxu0 0.0
  %840 = vmatpush2.msra.mxu0 0.0
  %841 = vmatprep.subr.mxu0 0.0
  %842 = vmatpush2.msra.mxu0 0.0
  %843 = vmatprep.subr.mxu0 0.0
  %844 = vmatpush2.msra.mxu0 0.0
  %845 = vmatprep.subr.mxu0 0.0
  %846 = vmatpush2.msra.mxu0 0.0
  %847 = vmatprep.subr.mxu0 0.0
  %848 = vmatpush2.msra.mxu0 0.0
  %849 = vmatprep.subr.mxu0 0.0
  %850 = vmatpush2.msra.mxu0 0.0
  %851 = vmatprep.subr.mxu0 0.0
  %852 = vmatpush2.msra.mxu0 0.0
  %853 = vmatprep.subr.mxu0 0.0
  %854 = vmatpush2.msra.mxu0 0.0
  %855 = vmatprep.mubr.f32.mxu0 0.0
  %856 = vmatmul.mubr.f32.gmra.mxu0 %v789
  %v857 = vpop.f32.mrf.mxu0
  %v858 = vadd.f32 %v134, %v857
  %v859 = vpop.f32.mrf.mxu0
  %860 = vdwg.mxu0
  %v862 = vrot.slane %v858, 4
  %v864 = vadd.f32 %v127, %v862
  %v865 = vxor.u32 %v864, 2147483648
  %v866 = vmul.f32 %v865, 1.442695
  %v867 = vpow.pop %v866
  %v868 = vadd.f32 %v867, 1.0
  %v869 = vrcp.pop %v868
  %v870 = vmul.f32 1.0, %v869
  %871 = vrot.lane.b32.xlu0 %v862, 64
  %v872 = vpop.permute.xlu0 %871
  %v874 = vmul.f32 %v870, %v872
  %876 = vrot.lane.b32.xlu0 %v874, 64
  %v877 = vpop.permute.xlu0 %876
  %v879 = vadd.f32 %v127, %v877
  %v880 = vtanh.pop %v879
  %v881 = vsub.f32 1.0, %v870
  %883 = vrot.lane.b32.xlu0 %v880, 96
  %v884 = vpop.permute.xlu0 %883
  %v886 = vmul.f32 %v881, %v884
  %v887 = vrot.slane %v780, 6
  %v889 = vmul.f32 %v870, %v887
  %v890 = vadd.f32 %v886, %v889
  %892 = vrot.lane.b32.xlu0 %v890, 96
  %v893 = vpop.permute.xlu0 %892
  %895 = vst.msk [vmem:[#allocation2 + $0x8] sm:$0x30] %vm459, %v893
  %v896 = vrot.slane %v890, 4
  %897 = vrot.lane.b32.xlu0 %v896, 96
  %v898 = vpop.permute.xlu0 %897
  %v899 = vsel %vm136, %v898, 0
  %901 = vmatprep.subr.mxu0 0.0
  %902 = vmatpush1.msra.mxu0 0.0
  %903 = vmatprep.subr.mxu0 0.0
  %904 = vmatpush1.msra.mxu0 0.0
  %905 = vmatprep.subr.mxu0 0.0
  %906 = vmatpush1.msra.mxu0 0.0
  %907 = vmatprep.subr.mxu0 0.0
  %908 = vmatpush1.msra.mxu0 0.0
  %909 = vmatprep.subr.mxu0 0.0
  %910 = vmatpush1.msra.mxu0 0.0
  %911 = vmatprep.subr.mxu0 0.0
  %912 = vmatpush1.msra.mxu0 0.0
  %913 = vmatprep.subr.mxu0 0.0
  %914 = vmatpush1.msra.mxu0 0.0
  %915 = vmatprep.subr.mxu0 0.0
  %916 = vmatpush1.msra.mxu0 0.0
  %917 = vmatprep.subr.mxu0 0.0
  %918 = vmatpush1.msra.mxu0 0.0
  %919 = vmatprep.subr.mxu0 0.0
  %920 = vmatpush1.msra.mxu0 0.0
  %921 = vmatprep.subr.mxu0 0.0
  %922 = vmatpush1.msra.mxu0 0.0
  %923 = vmatprep.subr.mxu0 0.0
  %924 = vmatpush1.msra.mxu0 0.0
  %925 = vmatprep.subr.mxu0 0.0
  %926 = vmatpush1.msra.mxu0 %v39
  %927 = vmatprep.subr.mxu0 0.0
  %928 = vmatpush1.msra.mxu0 %v38
  %929 = vmatprep.subr.mxu0 0.0
  %930 = vmatpush1.msra.mxu0 %v37
  %931 = vmatprep.subr.mxu0 0.0
  %932 = vmatpush1.msra.mxu0 %v36
  %933 = vmatprep.subr.mxu0 0.0
  %934 = vmatpush2.msra.mxu0 0.0
  %935 = vmatprep.subr.mxu0 0.0
  %936 = vmatpush2.msra.mxu0 0.0
  %937 = vmatprep.subr.mxu0 0.0
  %938 = vmatpush2.msra.mxu0 0.0
  %939 = vmatprep.subr.mxu0 0.0
  %940 = vmatpush2.msra.mxu0 0.0
  %941 = vmatprep.subr.mxu0 0.0
  %942 = vmatpush2.msra.mxu0 0.0
  %943 = vmatprep.subr.mxu0 0.0
  %944 = vmatpush2.msra.mxu0 0.0
  %945 = vmatprep.subr.mxu0 0.0
  %946 = vmatpush2.msra.mxu0 0.0
  %947 = vmatprep.subr.mxu0 0.0
  %948 = vmatpush2.msra.mxu0 0.0
  %949 = vmatprep.subr.mxu0 0.0
  %950 = vmatpush2.msra.mxu0 0.0
  %951 = vmatprep.subr.mxu0 0.0
  %952 = vmatpush2.msra.mxu0 0.0
  %953 = vmatprep.subr.mxu0 0.0
  %954 = vmatpush2.msra.mxu0 0.0
  %955 = vmatprep.subr.mxu0 0.0
  %956 = vmatpush2.msra.mxu0 0.0
  %957 = vmatprep.subr.mxu0 0.0
  %958 = vmatpush2.msra.mxu0 0.0
  %959 = vmatprep.subr.mxu0 0.0
  %960 = vmatpush2.msra.mxu0 0.0
  %961 = vmatprep.subr.mxu0 0.0
  %962 = vmatpush2.msra.mxu0 0.0
  %963 = vmatprep.subr.mxu0 0.0
  %964 = vmatpush2.msra.mxu0 0.0
  %965 = vmatprep.mubr.f32.mxu0 0.0
  %966 = vmatmul.mubr.f32.gmra.mxu0 %v899
  %v967 = vpop.f32.mrf.mxu0
  %v968 = vadd.f32 %v134, %v967
  %v969 = vpop.f32.mrf.mxu0
  %970 = vdwg.mxu0
  %v972 = vrot.slane %v968, 2
  %v974 = vadd.f32 %v127, %v972
  %v975 = vxor.u32 %v974, 2147483648
  %v976 = vmul.f32 %v975, 1.442695
  %v977 = vpow.pop %v976
  %v978 = vadd.f32 %v977, 1.0
  %v979 = vrcp.pop %v978
  %v980 = vmul.f32 1.0, %v979
  %981 = vrot.lane.b32.xlu0 %v972, 64
  %v982 = vpop.permute.xlu0 %981
  %v984 = vmul.f32 %v980, %v982
  %986 = vrot.lane.b32.xlu0 %v984, 64
  %v987 = vpop.permute.xlu0 %986
  %v989 = vadd.f32 %v127, %v987
  %v990 = vtanh.pop %v989
  %v991 = vsub.f32 1.0, %v980
  %993 = vrot.lane.b32.xlu0 %v990, 96
  %v994 = vpop.permute.xlu0 %993
  %v996 = vmul.f32 %v991, %v994
  %v997 = vrot.slane %v890, 6
  %v999 = vmul.f32 %v980, %v997
  %v1000 = vadd.f32 %v996, %v999
  %1002 = vrot.lane.b32.xlu0 %v1000, 96
  %v1003 = vpop.permute.xlu0 %1002
  %1005 = vst.msk [vmem:[#allocation2 + $0x8] sm:$0xc0] %vm570, %v1003
  %1006 = vst.msk [vmem:[%s9 - $0x6] sm:$0xc0] %vm570, %v1003
  %v1007 = vld [vmem:[#allocation2] sm:$0xff]
  %v1008 = vld [vmem:[#allocation2 + $0x8] sm:$0xff]
  %v1009 = vld [vmem:[%s5] sm:$0xff]
  %v1010 = vld [vmem:[%s5 + $0x8] sm:$0xff]
  %v1011 = vld [vmem:[%s5 + $0x10] sm:$0xff]
  %v1012 = vld [vmem:[%s5 + $0x18] sm:$0xff]
  %v1013 = vld [vmem:[%s6] sm:$0xff]
  %v1014 = vld [vmem:[%s6 + $0x8] sm:$0xff]
  %v1015 = vld [vmem:[%s6 + $0x10] sm:$0xff]
  %v1016 = vld [vmem:[%s6 + $0x18] sm:$0xff]
  %v1017 = vld [vmem:[%s7] sm:$0x1]
  %v1018 = vld [vmem:[%s8] sm:$0x1]
  %v1020 = vlaneseq
  %v1021 = vshrl.u32 %v1020, 7
  %v1022 = vsub.s32 0, %v1021
  %v1023 = vrot.slane %v1017, %v1022
  %v1026 = vsel %vm136, %v1007, 0
  %v1029 = vsel %vm136, %v1008, 0
  %1031 = vmatprep.subr.mxu0 0.0
  %1032 = vmatpush1.msra.mxu0 0.0
  %1033 = vmatprep.subr.mxu0 0.0
  %1034 = vmatpush1.msra.mxu0 0.0
  %1035 = vmatprep.subr.mxu0 0.0
  %1036 = vmatpush1.msra.mxu0 0.0
  %1037 = vmatprep.subr.mxu0 0.0
  %1038 = vmatpush1.msra.mxu0 0.0
  %1039 = vmatprep.subr.mxu0 0.0
  %1040 = vmatpush1.msra.mxu0 0.0
  %1041 = vmatprep.subr.mxu0 0.0
  %1042 = vmatpush1.msra.mxu0 0.0
  %1043 = vmatprep.subr.mxu0 0.0
  %1044 = vmatpush1.msra.mxu0 0.0
  %1045 = vmatprep.subr.mxu0 0.0
  %1046 = vmatpush1.msra.mxu0 0.0
  %1047 = vmatprep.subr.mxu0 0.0
  %1048 = vmatpush1.msra.mxu0 0.0
  %1049 = vmatprep.subr.mxu0 0.0
  %1050 = vmatpush1.msra.mxu0 0.0
  %1051 = vmatprep.subr.mxu0 0.0
  %1052 = vmatpush1.msra.mxu0 0.0
  %1053 = vmatprep.subr.mxu0 0.0
  %1054 = vmatpush1.msra.mxu0 0.0
  %1055 = vmatprep.subr.mxu0 0.0
  %1056 = vmatpush1.msra.mxu0 %v1012
  %1057 = vmatprep.subr.mxu0 0.0
  %1058 = vmatpush1.msra.mxu0 %v1011
  %1059 = vmatprep.subr.mxu0 0.0
  %1060 = vmatpush1.msra.mxu0 %v1010
  %1061 = vmatprep.subr.mxu0 0.0
  %1062 = vmatpush1.msra.mxu0 %v1009
  %1063 = vmatprep.subr.mxu0 0.0
  %1064 = vmatpush2.msra.mxu0 0.0
  %1065 = vmatprep.subr.mxu0 0.0
  %1066 = vmatpush2.msra.mxu0 0.0
  %1067 = vmatprep.subr.mxu0 0.0
  %1068 = vmatpush2.msra.mxu0 0.0
  %1069 = vmatprep.subr.mxu0 0.0
  %1070 = vmatpush2.msra.mxu0 0.0
  %1071 = vmatprep.subr.mxu0 0.0
  %1072 = vmatpush2.msra.mxu0 0.0
  %1073 = vmatprep.subr.mxu0 0.0
  %1074 = vmatpush2.msra.mxu0 0.0
  %1075 = vmatprep.subr.mxu0 0.0
  %1076 = vmatpush2.msra.mxu0 0.0
  %1077 = vmatprep.subr.mxu0 0.0
  %1078 = vmatpush2.msra.mxu0 0.0
  %1079 = vmatprep.subr.mxu0 0.0
  %1080 = vmatpush2.msra.mxu0 0.0
  %1081 = vmatprep.subr.mxu0 0.0
  %1082 = vmatpush2.msra.mxu0 0.0
  %1083 = vmatprep.subr.mxu0 0.0
  %1084 = vmatpush2.msra.mxu0 0.0
  %1085 = vmatprep.subr.mxu0 0.0
  %1086 = vmatpush2.msra.mxu0 0.0
  %1087 = vmatprep.subr.mxu0 0.0
  %1088 = vmatpush2.msra.mxu0 0.0
  %1089 = vmatprep.subr.mxu0 0.0
  %1090 = vmatpush2.msra.mxu0 0.0
  %1091 = vmatprep.subr.mxu0 0.0
  %1092 = vmatpush2.msra.mxu0 0.0
  %1093 = vmatprep.subr.mxu0 0.0
  %1094 = vmatpush2.msra.mxu0 0.0
  %1095 = vmatprep.mubr.f32.mxu0 0.0
  %1096 = vmatmul.mubr.f32.gmra.mxu0 %v1026
  %v1097 = vpop.f32.mrf.mxu0
  %v1098 = vadd.f32 %v1023, %v1097
  %v1099 = vpop.f32.mrf.mxu0
  %1100 = vmatprep.mubr.f32.mxu0 0.0
  %1101 = vmatmul.mubr.f32.gmra.mxu0 %v1029
  %v1102 = vpop.f32.mrf.mxu0
  %v1103 = vadd.f32 %v1023, %v1102
  %v1104 = vpop.f32.mrf.mxu0
  %1105 = vdwg.mxu0
  %v1107 = vlaneseq
  %v1108 = vshrl.u32 %v1107, 7
  %v1109 = vsub.s32 0, %v1108
  %v1110 = vrot.slane %v1018, %v1109
  %1112 = vmatprep.subr.mxu0 0.0
  %1113 = vmatpush1.msra.mxu0 0.0
  %1114 = vmatprep.subr.mxu0 0.0
  %1115 = vmatpush1.msra.mxu0 0.0
  %1116 = vmatprep.subr.mxu0 0.0
  %1117 = vmatpush1.msra.mxu0 0.0
  %1118 = vmatprep.subr.mxu0 0.0
  %1119 = vmatpush1.msra.mxu0 0.0
  %1120 = vmatprep.subr.mxu0 0.0
  %1121 = vmatpush1.msra.mxu0 0.0
  %1122 = vmatprep.subr.mxu0 0.0
  %1123 = vmatpush1.msra.mxu0 0.0
  %1124 = vmatprep.subr.mxu0 0.0
  %1125 = vmatpush1.msra.mxu0 0.0
  %1126 = vmatprep.subr.mxu0 0.0
  %1127 = vmatpush1.msra.mxu0 0.0
  %1128 = vmatprep.subr.mxu0 0.0
  %1129 = vmatpush1.msra.mxu0 0.0
  %1130 = vmatprep.subr.mxu0 0.0
  %1131 = vmatpush1.msra.mxu0 0.0
  %1132 = vmatprep.subr.mxu0 0.0
  %1133 = vmatpush1.msra.mxu0 0.0
  %1134 = vmatprep.subr.mxu0 0.0
  %1135 = vmatpush1.msra.mxu0 0.0
  %1136 = vmatprep.subr.mxu0 0.0
  %1137 = vmatpush1.msra.mxu0 %v1016
  %1138 = vmatprep.subr.mxu0 0.0
  %1139 = vmatpush1.msra.mxu0 %v1015
  %1140 = vmatprep.subr.mxu0 0.0
  %1141 = vmatpush1.msra.mxu0 %v1014
  %1142 = vmatprep.subr.mxu0 0.0
  %1143 = vmatpush1.msra.mxu0 %v1013
  %1144 = vmatprep.subr.mxu0 0.0
  %1145 = vmatpush2.msra.mxu0 0.0
  %1146 = vmatprep.subr.mxu0 0.0
  %1147 = vmatpush2.msra.mxu0 0.0
  %1148 = vmatprep.subr.mxu0 0.0
  %1149 = vmatpush2.msra.mxu0 0.0
  %1150 = vmatprep.subr.mxu0 0.0
  %1151 = vmatpush2.msra.mxu0 0.0
  %1152 = vmatprep.subr.mxu0 0.0
  %1153 = vmatpush2.msra.mxu0 0.0
  %1154 = vmatprep.subr.mxu0 0.0
  %1155 = vmatpush2.msra.mxu0 0.0
  %1156 = vmatprep.subr.mxu0 0.0
  %1157 = vmatpush2.msra.mxu0 0.0
  %1158 = vmatprep.subr.mxu0 0.0
  %1159 = vmatpush2.msra.mxu0 0.0
  %1160 = vmatprep.subr.mxu0 0.0
  %1161 = vmatpush2.msra.mxu0 0.0
  %1162 = vmatprep.subr.mxu0 0.0
  %1163 = vmatpush2.msra.mxu0 0.0
  %1164 = vmatprep.subr.mxu0 0.0
  %1165 = vmatpush2.msra.mxu0 0.0
  %1166 = vmatprep.subr.mxu0 0.0
  %1167 = vmatpush2.msra.mxu0 0.0
  %1168 = vmatprep.subr.mxu0 0.0
  %1169 = vmatpush2.msra.mxu0 0.0
  %1170 = vmatprep.subr.mxu0 0.0
  %1171 = vmatpush2.msra.mxu0 0.0
  %1172 = vmatprep.subr.mxu0 0.0
  %1173 = vmatpush2.msra.mxu0 0.0
  %1174 = vmatprep.subr.mxu0 0.0
  %1175 = vmatpush2.msra.mxu0 0.0
  %1176 = vmatprep.mubr.f32.mxu0 0.0
  %1177 = vmatmul.mubr.f32.gmra.mxu0 %v138
  %v1178 = vpop.f32.mrf.mxu0
  %v1179 = vadd.f32 %v1110, %v1178
  %v1180 = vpop.f32.mrf.mxu0
  %1181 = vdwg.mxu0
  %v1182 = vadd.f32 %v1098, %v1179
  %v1183 = vxor.u32 %v1182, 2147483648
  %v1184 = vmul.f32 %v1183, 1.442695
  %v1185 = vpow.pop %v1184
  %v1186 = vadd.f32 %v1185, 1.0
  %v1187 = vrcp.pop %v1186
  %v1188 = vmul.f32 1.0, %v1187
  %1190 = vrot.lane.b32.xlu0 %v1179, 64
  %v1191 = vpop.permute.xlu0 %1190
  %v1193 = vmul.f32 %v1188, %v1191
  %1195 = vrot.lane.b32.xlu0 %v1193, 64
  %v1196 = vpop.permute.xlu0 %1195
  %v1198 = vadd.f32 %v1098, %v1196
  %v1199 = vtanh.pop %v1198
  %v1200 = vsub.f32 1.0, %v1188
  %1202 = vrot.lane.b32.xlu0 %v1199, 96
  %v1203 = vpop.permute.xlu0 %1202
  %v1205 = vmul.f32 %v1200, %v1203
  %v1206 = vmul.f32 %v1188, 0.0
  %v1207 = vadd.f32 %v1205, %v1206
  %1209 = vrot.lane.b32.xlu0 %v1207, 96
  %v1210 = vpop.permute.xlu0 %1209
  %1212 = vst.msk [vmem:[#allocation2] sm:$0x3] %vm240, %v1210
  %v1213 = vsel %vm136, %v1210, 0
  %1215 = vmatprep.subr.mxu0 0.0
  %1216 = vmatpush1.msra.mxu0 0.0
  %1217 = vmatprep.subr.mxu0 0.0
  %1218 = vmatpush1.msra.mxu0 0.0
  %1219 = vmatprep.subr.mxu0 0.0
  %1220 = vmatpush1.msra.mxu0 0.0
  %1221 = vmatprep.subr.mxu0 0.0
  %1222 = vmatpush1.msra.mxu0 0.0
  %1223 = vmatprep.subr.mxu0 0.0
  %1224 = vmatpush1.msra.mxu0 0.0
  %1225 = vmatprep.subr.mxu0 0.0
  %1226 = vmatpush1.msra.mxu0 0.0
  %1227 = vmatprep.subr.mxu0 0.0
  %1228 = vmatpush1.msra.mxu0 0.0
  %1229 = vmatprep.subr.mxu0 0.0
  %1230 = vmatpush1.msra.mxu0 0.0
  %1231 = vmatprep.subr.mxu0 0.0
  %1232 = vmatpush1.msra.mxu0 0.0
  %1233 = vmatprep.subr.mxu0 0.0
  %1234 = vmatpush1.msra.mxu0 0.0
  %1235 = vmatprep.subr.mxu0 0.0
  %1236 = vmatpush1.msra.mxu0 0.0
  %1237 = vmatprep.subr.mxu0 0.0
  %1238 = vmatpush1.msra.mxu0 0.0
  %1239 = vmatprep.subr.mxu0 0.0
  %1240 = vmatpush1.msra.mxu0 %v1016
  %1241 = vmatprep.subr.mxu0 0.0
  %1242 = vmatpush1.msra.mxu0 %v1015
  %1243 = vmatprep.subr.mxu0 0.0
  %1244 = vmatpush1.msra.mxu0 %v1014
  %1245 = vmatprep.subr.mxu0 0.0
  %1246 = vmatpush1.msra.mxu0 %v1013
  %1247 = vmatprep.subr.mxu0 0.0
  %1248 = vmatpush2.msra.mxu0 0.0
  %1249 = vmatprep.subr.mxu0 0.0
  %1250 = vmatpush2.msra.mxu0 0.0
  %1251 = vmatprep.subr.mxu0 0.0
  %1252 = vmatpush2.msra.mxu0 0.0
  %1253 = vmatprep.subr.mxu0 0.0
  %1254 = vmatpush2.msra.mxu0 0.0
  %1255 = vmatprep.subr.mxu0 0.0
  %1256 = vmatpush2.msra.mxu0 0.0
  %1257 = vmatprep.subr.mxu0 0.0
  %1258 = vmatpush2.msra.mxu0 0.0
  %1259 = vmatprep.subr.mxu0 0.0
  %1260 = vmatpush2.msra.mxu0 0.0
  %1261 = vmatprep.subr.mxu0 0.0
  %1262 = vmatpush2.msra.mxu0 0.0
  %1263 = vmatprep.subr.mxu0 0.0
  %1264 = vmatpush2.msra.mxu0 0.0
  %1265 = vmatprep.subr.mxu0 0.0
  %1266 = vmatpush2.msra.mxu0 0.0
  %1267 = vmatprep.subr.mxu0 0.0
  %1268 = vmatpush2.msra.mxu0 0.0
  %1269 = vmatprep.subr.mxu0 0.0
  %1270 = vmatpush2.msra.mxu0 0.0
  %1271 = vmatprep.subr.mxu0 0.0
  %1272 = vmatpush2.msra.mxu0 0.0
  %1273 = vmatprep.subr.mxu0 0.0
  %1274 = vmatpush2.msra.mxu0 0.0
  %1275 = vmatprep.subr.mxu0 0.0
  %1276 = vmatpush2.msra.mxu0 0.0
  %1277 = vmatprep.subr.mxu0 0.0
  %1278 = vmatpush2.msra.mxu0 0.0
  %1279 = vmatprep.mubr.f32.mxu0 0.0
  %1280 = vmatmul.mubr.f32.gmra.mxu0 %v1213
  %v1281 = vpop.f32.mrf.mxu0
  %v1282 = vadd.f32 %v1110, %v1281
  %v1283 = vpop.f32.mrf.mxu0
  %1284 = vdwg.mxu0
  %v1286 = vrot.slane %v1282, 6
  %v1288 = vadd.f32 %v1098, %v1286
  %v1289 = vxor.u32 %v1288, 2147483648
  %v1290 = vmul.f32 %v1289, 1.442695
  %v1291 = vpow.pop %v1290
  %v1292 = vadd.f32 %v1291, 1.0
  %v1293 = vrcp.pop %v1292
  %v1294 = vmul.f32 1.0, %v1293
  %1295 = vrot.lane.b32.xlu0 %v1286, 64
  %v1296 = vpop.permute.xlu0 %1295
  %v1298 = vmul.f32 %v1294, %v1296
  %1300 = vrot.lane.b32.xlu0 %v1298, 64
  %v1301 = vpop.permute.xlu0 %1300
  %v1303 = vadd.f32 %v1098, %v1301
  %v1304 = vtanh.pop %v1303
  %v1305 = vsub.f32 1.0, %v1294
  %1307 = vrot.lane.b32.xlu0 %v1304, 96
  %v1308 = vpop.permute.xlu0 %1307
  %v1310 = vmul.f32 %v1305, %v1308
  %v1311 = vrot.slane %v1207, 6
  %v1313 = vmul.f32 %v1294, %v1311
  %v1314 = vadd.f32 %v1310, %v1313
  %1316 = vrot.lane.b32.xlu0 %v1314, 96
  %v1317 = vpop.permute.xlu0 %1316
  %1319 = vst.msk [vmem:[#allocation2] sm:$0xc] %vm348, %v1317
  %v1320 = vrot.slane %v1314, 2
  %1321 = vrot.lane.b32.xlu0 %v1320, 96
  %v1322 = vpop.permute.xlu0 %1321
  %v1323 = vsel %vm136, %v1322, 0
  %1325 = vmatprep.subr.mxu0 0.0
  %1326 = vmatpush1.msra.mxu0 0.0
  %1327 = vmatprep.subr.mxu0 0.0
  %1328 = vmatpush1.msra.mxu0 0.0
  %1329 = vmatprep.subr.mxu0 0.0
  %1330 = vmatpush1.msra.mxu0 0.0
  %1331 = vmatprep.subr.mxu0 0.0
  %1332 = vmatpush1.msra.mxu0 0.0
  %1333 = vmatprep.subr.mxu0 0.0
  %1334 = vmatpush1.msra.mxu0 0.0
  %1335 = vmatprep.subr.mxu0 0.0
  %1336 = vmatpush1.msra.mxu0 0.0
  %1337 = vmatprep.subr.mxu0 0.0
  %1338 = vmatpush1.msra.mxu0 0.0
  %1339 = vmatprep.subr.mxu0 0.0
  %1340 = vmatpush1.msra.mxu0 0.0
  %1341 = vmatprep.subr.mxu0 0.0
  %1342 = vmatpush1.msra.mxu0 0.0
  %1343 = vmatprep.subr.mxu0 0.0
  %1344 = vmatpush1.msra.mxu0 0.0
  %1345 = vmatprep.subr.mxu0 0.0
  %1346 = vmatpush1.msra.mxu0 0.0
  %1347 = vmatprep.subr.mxu0 0.0
  %1348 = vmatpush1.msra.mxu0 0.0
  %1349 = vmatprep.subr.mxu0 0.0
  %1350 = vmatpush1.msra.mxu0 %v1016
  %1351 = vmatprep.subr.mxu0 0.0
  %1352 = vmatpush1.msra.mxu0 %v1015
  %1353 = vmatprep.subr.mxu0 0.0
  %1354 = vmatpush1.msra.mxu0 %v1014
  %1355 = vmatprep.subr.mxu0 0.0
  %1356 = vmatpush1.msra.mxu0 %v1013
  %1357 = vmatprep.subr.mxu0 0.0
  %1358 = vmatpush2.msra.mxu0 0.0
  %1359 = vmatprep.subr.mxu0 0.0
  %1360 = vmatpush2.msra.mxu0 0.0
  %1361 = vmatprep.subr.mxu0 0.0
  %1362 = vmatpush2.msra.mxu0 0.0
  %1363 = vmatprep.subr.mxu0 0.0
  %1364 = vmatpush2.msra.mxu0 0.0
  %1365 = vmatprep.subr.mxu0 0.0
  %1366 = vmatpush2.msra.mxu0 0.0
  %1367 = vmatprep.subr.mxu0 0.0
  %1368 = vmatpush2.msra.mxu0 0.0
  %1369 = vmatprep.subr.mxu0 0.0
  %1370 = vmatpush2.msra.mxu0 0.0
  %1371 = vmatprep.subr.mxu0 0.0
  %1372 = vmatpush2.msra.mxu0 0.0
  %1373 = vmatprep.subr.mxu0 0.0
  %1374 = vmatpush2.msra.mxu0 0.0
  %1375 = vmatprep.subr.mxu0 0.0
  %1376 = vmatpush2.msra.mxu0 0.0
  %1377 = vmatprep.subr.mxu0 0.0
  %1378 = vmatpush2.msra.mxu0 0.0
  %1379 = vmatprep.subr.mxu0 0.0
  %1380 = vmatpush2.msra.mxu0 0.0
  %1381 = vmatprep.subr.mxu0 0.0
  %1382 = vmatpush2.msra.mxu0 0.0
  %1383 = vmatprep.subr.mxu0 0.0
  %1384 = vmatpush2.msra.mxu0 0.0
  %1385 = vmatprep.subr.mxu0 0.0
  %1386 = vmatpush2.msra.mxu0 0.0
  %1387 = vmatprep.subr.mxu0 0.0
  %1388 = vmatpush2.msra.mxu0 0.0
  %1389 = vmatprep.mubr.f32.mxu0 0.0
  %1390 = vmatmul.mubr.f32.gmra.mxu0 %v1323
  %v1391 = vpop.f32.mrf.mxu0
  %v1392 = vadd.f32 %v1110, %v1391
  %v1393 = vpop.f32.mrf.mxu0
  %1394 = vdwg.mxu0
  %v1396 = vrot.slane %v1392, 4
  %v1398 = vadd.f32 %v1098, %v1396
  %v1399 = vxor.u32 %v1398, 2147483648
  %v1400 = vmul.f32 %v1399, 1.442695
  %v1401 = vpow.pop %v1400
  %v1402 = vadd.f32 %v1401, 1.0
  %v1403 = vrcp.pop %v1402
  %v1404 = vmul.f32 1.0, %v1403
  %1405 = vrot.lane.b32.xlu0 %v1396, 64
  %v1406 = vpop.permute.xlu0 %1405
  %v1408 = vmul.f32 %v1404, %v1406
  %1410 = vrot.lane.b32.xlu0 %v1408, 64
  %v1411 = vpop.permute.xlu0 %1410
  %v1413 = vadd.f32 %v1098, %v1411
  %v1414 = vtanh.pop %v1413
  %v1415 = vsub.f32 1.0, %v1404
  %1417 = vrot.lane.b32.xlu0 %v1414, 96
  %v1418 = vpop.permute.xlu0 %1417
  %v1420 = vmul.f32 %v1415, %v1418
  %v1421 = vrot.slane %v1314, 6
  %v1423 = vmul.f32 %v1404, %v1421
  %v1424 = vadd.f32 %v1420, %v1423
  %1426 = vrot.lane.b32.xlu0 %v1424, 96
  %v1427 = vpop.permute.xlu0 %1426
  %1429 = vst.msk [vmem:[#allocation2] sm:$0x30] %vm459, %v1427
  %v1430 = vrot.slane %v1424, 4
  %1431 = vrot.lane.b32.xlu0 %v1430, 96
  %v1432 = vpop.permute.xlu0 %1431
  %v1433 = vsel %vm136, %v1432, 0
  %1435 = vmatprep.subr.mxu0 0.0
  %1436 = vmatpush1.msra.mxu0 0.0
  %1437 = vmatprep.subr.mxu0 0.0
  %1438 = vmatpush1.msra.mxu0 0.0
  %1439 = vmatprep.subr.mxu0 0.0
  %1440 = vmatpush1.msra.mxu0 0.0
  %1441 = vmatprep.subr.mxu0 0.0
  %1442 = vmatpush1.msra.mxu0 0.0
  %1443 = vmatprep.subr.mxu0 0.0
  %1444 = vmatpush1.msra.mxu0 0.0
  %1445 = vmatprep.subr.mxu0 0.0
  %1446 = vmatpush1.msra.mxu0 0.0
  %1447 = vmatprep.subr.mxu0 0.0
  %1448 = vmatpush1.msra.mxu0 0.0
  %1449 = vmatprep.subr.mxu0 0.0
  %1450 = vmatpush1.msra.mxu0 0.0
  %1451 = vmatprep.subr.mxu0 0.0
  %1452 = vmatpush1.msra.mxu0 0.0
  %1453 = vmatprep.subr.mxu0 0.0
  %1454 = vmatpush1.msra.mxu0 0.0
  %1455 = vmatprep.subr.mxu0 0.0
  %1456 = vmatpush1.msra.mxu0 0.0
  %1457 = vmatprep.subr.mxu0 0.0
  %1458 = vmatpush1.msra.mxu0 0.0
  %1459 = vmatprep.subr.mxu0 0.0
  %1460 = vmatpush1.msra.mxu0 %v1016
  %1461 = vmatprep.subr.mxu0 0.0
  %1462 = vmatpush1.msra.mxu0 %v1015
  %1463 = vmatprep.subr.mxu0 0.0
  %1464 = vmatpush1.msra.mxu0 %v1014
  %1465 = vmatprep.subr.mxu0 0.0
  %1466 = vmatpush1.msra.mxu0 %v1013
  %1467 = vmatprep.subr.mxu0 0.0
  %1468 = vmatpush2.msra.mxu0 0.0
  %1469 = vmatprep.subr.mxu0 0.0
  %1470 = vmatpush2.msra.mxu0 0.0
  %1471 = vmatprep.subr.mxu0 0.0
  %1472 = vmatpush2.msra.mxu0 0.0
  %1473 = vmatprep.subr.mxu0 0.0
  %1474 = vmatpush2.msra.mxu0 0.0
  %1475 = vmatprep.subr.mxu0 0.0
  %1476 = vmatpush2.msra.mxu0 0.0
  %1477 = vmatprep.subr.mxu0 0.0
  %1478 = vmatpush2.msra.mxu0 0.0
  %1479 = vmatprep.subr.mxu0 0.0
  %1480 = vmatpush2.msra.mxu0 0.0
  %1481 = vmatprep.subr.mxu0 0.0
  %1482 = vmatpush2.msra.mxu0 0.0
  %1483 = vmatprep.subr.mxu0 0.0
  %1484 = vmatpush2.msra.mxu0 0.0
  %1485 = vmatprep.subr.mxu0 0.0
  %1486 = vmatpush2.msra.mxu0 0.0
  %1487 = vmatprep.subr.mxu0 0.0
  %1488 = vmatpush2.msra.mxu0 0.0
  %1489 = vmatprep.subr.mxu0 0.0
  %1490 = vmatpush2.msra.mxu0 0.0
  %1491 = vmatprep.subr.mxu0 0.0
  %1492 = vmatpush2.msra.mxu0 0.0
  %1493 = vmatprep.subr.mxu0 0.0
  %1494 = vmatpush2.msra.mxu0 0.0
  %1495 = vmatprep.subr.mxu0 0.0
  %1496 = vmatpush2.msra.mxu0 0.0
  %1497 = vmatprep.subr.mxu0 0.0
  %1498 = vmatpush2.msra.mxu0 0.0
  %1499 = vmatprep.mubr.f32.mxu0 0.0
  %1500 = vmatmul.mubr.f32.gmra.mxu0 %v1433
  %v1501 = vpop.f32.mrf.mxu0
  %v1502 = vadd.f32 %v1110, %v1501
  %v1503 = vpop.f32.mrf.mxu0
  %1504 = vdwg.mxu0
  %v1506 = vrot.slane %v1502, 2
  %v1508 = vadd.f32 %v1098, %v1506
  %v1509 = vxor.u32 %v1508, 2147483648
  %v1510 = vmul.f32 %v1509, 1.442695
  %v1511 = vpow.pop %v1510
  %v1512 = vadd.f32 %v1511, 1.0
  %v1513 = vrcp.pop %v1512
  %v1514 = vmul.f32 1.0, %v1513
  %1515 = vrot.lane.b32.xlu0 %v1506, 64
  %v1516 = vpop.permute.xlu0 %1515
  %v1518 = vmul.f32 %v1514, %v1516
  %1520 = vrot.lane.b32.xlu0 %v1518, 64
  %v1521 = vpop.permute.xlu0 %1520
  %v1523 = vadd.f32 %v1098, %v1521
  %v1524 = vtanh.pop %v1523
  %v1525 = vsub.f32 1.0, %v1514
  %1527 = vrot.lane.b32.xlu0 %v1524, 96
  %v1528 = vpop.permute.xlu0 %1527
  %v1530 = vmul.f32 %v1525, %v1528
  %v1531 = vrot.slane %v1424, 6
  %v1533 = vmul.f32 %v1514, %v1531
  %v1534 = vadd.f32 %v1530, %v1533
  %1536 = vrot.lane.b32.xlu0 %v1534, 96
  %v1537 = vpop.permute.xlu0 %1536
  %1539 = vst.msk [vmem:[#allocation2] sm:$0xc0] %vm570, %v1537
  %v1540 = vrot.slane %v1534, 6
  %1541 = vrot.lane.b32.xlu0 %v1540, 96
  %v1542 = vpop.permute.xlu0 %1541
  %v1543 = vsel %vm136, %v1542, 0
  %1545 = vmatprep.subr.mxu0 0.0
  %1546 = vmatpush1.msra.mxu0 0.0
  %1547 = vmatprep.subr.mxu0 0.0
  %1548 = vmatpush1.msra.mxu0 0.0
  %1549 = vmatprep.subr.mxu0 0.0
  %1550 = vmatpush1.msra.mxu0 0.0
  %1551 = vmatprep.subr.mxu0 0.0
  %1552 = vmatpush1.msra.mxu0 0.0
  %1553 = vmatprep.subr.mxu0 0.0
  %1554 = vmatpush1.msra.mxu0 0.0
  %1555 = vmatprep.subr.mxu0 0.0
  %1556 = vmatpush1.msra.mxu0 0.0
  %1557 = vmatprep.subr.mxu0 0.0
  %1558 = vmatpush1.msra.mxu0 0.0
  %1559 = vmatprep.subr.mxu0 0.0
  %1560 = vmatpush1.msra.mxu0 0.0
  %1561 = vmatprep.subr.mxu0 0.0
  %1562 = vmatpush1.msra.mxu0 0.0
  %1563 = vmatprep.subr.mxu0 0.0
  %1564 = vmatpush1.msra.mxu0 0.0
  %1565 = vmatprep.subr.mxu0 0.0
  %1566 = vmatpush1.msra.mxu0 0.0
  %1567 = vmatprep.subr.mxu0 0.0
  %1568 = vmatpush1.msra.mxu0 0.0
  %1569 = vmatprep.subr.mxu0 0.0
  %1570 = vmatpush1.msra.mxu0 %v1016
  %1571 = vmatprep.subr.mxu0 0.0
  %1572 = vmatpush1.msra.mxu0 %v1015
  %1573 = vmatprep.subr.mxu0 0.0
  %1574 = vmatpush1.msra.mxu0 %v1014
  %1575 = vmatprep.subr.mxu0 0.0
  %1576 = vmatpush1.msra.mxu0 %v1013
  %1577 = vmatprep.subr.mxu0 0.0
  %1578 = vmatpush2.msra.mxu0 0.0
  %1579 = vmatprep.subr.mxu0 0.0
  %1580 = vmatpush2.msra.mxu0 0.0
  %1581 = vmatprep.subr.mxu0 0.0
  %1582 = vmatpush2.msra.mxu0 0.0
  %1583 = vmatprep.subr.mxu0 0.0
  %1584 = vmatpush2.msra.mxu0 0.0
  %1585 = vmatprep.subr.mxu0 0.0
  %1586 = vmatpush2.msra.mxu0 0.0
  %1587 = vmatprep.subr.mxu0 0.0
  %1588 = vmatpush2.msra.mxu0 0.0
  %1589 = vmatprep.subr.mxu0 0.0
  %1590 = vmatpush2.msra.mxu0 0.0
  %1591 = vmatprep.subr.mxu0 0.0
  %1592 = vmatpush2.msra.mxu0 0.0
  %1593 = vmatprep.subr.mxu0 0.0
  %1594 = vmatpush2.msra.mxu0 0.0
  %1595 = vmatprep.subr.mxu0 0.0
  %1596 = vmatpush2.msra.mxu0 0.0
  %1597 = vmatprep.subr.mxu0 0.0
  %1598 = vmatpush2.msra.mxu0 0.0
  %1599 = vmatprep.subr.mxu0 0.0
  %1600 = vmatpush2.msra.mxu0 0.0
  %1601 = vmatprep.subr.mxu0 0.0
  %1602 = vmatpush2.msra.mxu0 0.0
  %1603 = vmatprep.subr.mxu0 0.0
  %1604 = vmatpush2.msra.mxu0 0.0
  %1605 = vmatprep.subr.mxu0 0.0
  %1606 = vmatpush2.msra.mxu0 0.0
  %1607 = vmatprep.subr.mxu0 0.0
  %1608 = vmatpush2.msra.mxu0 0.0
  %1609 = vmatprep.mubr.f32.mxu0 0.0
  %1610 = vmatmul.mubr.f32.gmra.mxu0 %v1543
  %v1611 = vpop.f32.mrf.mxu0
  %v1612 = vadd.f32 %v1110, %v1611
  %v1613 = vpop.f32.mrf.mxu0
  %1614 = vdwg.mxu0
  %v1615 = vadd.f32 %v1103, %v1612
  %v1616 = vxor.u32 %v1615, 2147483648
  %v1617 = vmul.f32 %v1616, 1.442695
  %v1618 = vpow.pop %v1617
  %v1619 = vadd.f32 %v1618, 1.0
  %v1620 = vrcp.pop %v1619
  %v1621 = vmul.f32 1.0, %v1620
  %1623 = vrot.lane.b32.xlu0 %v1612, 64
  %v1624 = vpop.permute.xlu0 %1623
  %v1626 = vmul.f32 %v1621, %v1624
  %1628 = vrot.lane.b32.xlu0 %v1626, 64
  %v1629 = vpop.permute.xlu0 %1628
  %v1631 = vadd.f32 %v1103, %v1629
  %v1632 = vtanh.pop %v1631
  %v1633 = vsub.f32 1.0, %v1621
  %1635 = vrot.lane.b32.xlu0 %v1632, 96
  %v1636 = vpop.permute.xlu0 %1635
  %v1638 = vmul.f32 %v1633, %v1636
  %v1640 = vmul.f32 %v1621, %v1540
  %v1641 = vadd.f32 %v1638, %v1640
  %1643 = vrot.lane.b32.xlu0 %v1641, 96
  %v1644 = vpop.permute.xlu0 %1643
  %1646 = vst.msk [vmem:[#allocation2 + $0x8] sm:$0x3] %vm240, %v1644
  %v1647 = vsel %vm136, %v1644, 0
  %1649 = vmatprep.subr.mxu0 0.0
  %1650 = vmatpush1.msra.mxu0 0.0
  %1651 = vmatprep.subr.mxu0 0.0
  %1652 = vmatpush1.msra.mxu0 0.0
  %1653 = vmatprep.subr.mxu0 0.0
  %1654 = vmatpush1.msra.mxu0 0.0
  %1655 = vmatprep.subr.mxu0 0.0
  %1656 = vmatpush1.msra.mxu0 0.0
  %1657 = vmatprep.subr.mxu0 0.0
  %1658 = vmatpush1.msra.mxu0 0.0
  %1659 = vmatprep.subr.mxu0 0.0
  %1660 = vmatpush1.msra.mxu0 0.0
  %1661 = vmatprep.subr.mxu0 0.0
  %1662 = vmatpush1.msra.mxu0 0.0
  %1663 = vmatprep.subr.mxu0 0.0
  %1664 = vmatpush1.msra.mxu0 0.0
  %1665 = vmatprep.subr.mxu0 0.0
  %1666 = vmatpush1.msra.mxu0 0.0
  %1667 = vmatprep.subr.mxu0 0.0
  %1668 = vmatpush1.msra.mxu0 0.0
  %1669 = vmatprep.subr.mxu0 0.0
  %1670 = vmatpush1.msra.mxu0 0.0
  %1671 = vmatprep.subr.mxu0 0.0
  %1672 = vmatpush1.msra.mxu0 0.0
  %1673 = vmatprep.subr.mxu0 0.0
  %1674 = vmatpush1.msra.mxu0 %v1016
  %1675 = vmatprep.subr.mxu0 0.0
  %1676 = vmatpush1.msra.mxu0 %v1015
  %1677 = vmatprep.subr.mxu0 0.0
  %1678 = vmatpush1.msra.mxu0 %v1014
  %1679 = vmatprep.subr.mxu0 0.0
  %1680 = vmatpush1.msra.mxu0 %v1013
  %1681 = vmatprep.subr.mxu0 0.0
  %1682 = vmatpush2.msra.mxu0 0.0
  %1683 = vmatprep.subr.mxu0 0.0
  %1684 = vmatpush2.msra.mxu0 0.0
  %1685 = vmatprep.subr.mxu0 0.0
  %1686 = vmatpush2.msra.mxu0 0.0
  %1687 = vmatprep.subr.mxu0 0.0
  %1688 = vmatpush2.msra.mxu0 0.0
  %1689 = vmatprep.subr.mxu0 0.0
  %1690 = vmatpush2.msra.mxu0 0.0
  %1691 = vmatprep.subr.mxu0 0.0
  %1692 = vmatpush2.msra.mxu0 0.0
  %1693 = vmatprep.subr.mxu0 0.0
  %1694 = vmatpush2.msra.mxu0 0.0
  %1695 = vmatprep.subr.mxu0 0.0
  %1696 = vmatpush2.msra.mxu0 0.0
  %1697 = vmatprep.subr.mxu0 0.0
  %1698 = vmatpush2.msra.mxu0 0.0
  %1699 = vmatprep.subr.mxu0 0.0
  %1700 = vmatpush2.msra.mxu0 0.0
  %1701 = vmatprep.subr.mxu0 0.0
  %1702 = vmatpush2.msra.mxu0 0.0
  %1703 = vmatprep.subr.mxu0 0.0
  %1704 = vmatpush2.msra.mxu0 0.0
  %1705 = vmatprep.subr.mxu0 0.0
  %1706 = vmatpush2.msra.mxu0 0.0
  %1707 = vmatprep.subr.mxu0 0.0
  %1708 = vmatpush2.msra.mxu0 0.0
  %1709 = vmatprep.subr.mxu0 0.0
  %1710 = vmatpush2.msra.mxu0 0.0
  %1711 = vmatprep.subr.mxu0 0.0
  %1712 = vmatpush2.msra.mxu0 0.0
  %1713 = vmatprep.mubr.f32.mxu0 0.0
  %1714 = vmatmul.mubr.f32.gmra.mxu0 %v1647
  %v1715 = vpop.f32.mrf.mxu0
  %v1716 = vadd.f32 %v1110, %v1715
  %v1717 = vpop.f32.mrf.mxu0
  %1718 = vdwg.mxu0
  %v1720 = vrot.slane %v1716, 6
  %v1722 = vadd.f32 %v1103, %v1720
  %v1723 = vxor.u32 %v1722, 2147483648
  %v1724 = vmul.f32 %v1723, 1.442695
  %v1725 = vpow.pop %v1724
  %v1726 = vadd.f32 %v1725, 1.0
  %v1727 = vrcp.pop %v1726
  %v1728 = vmul.f32 1.0, %v1727
  %1729 = vrot.lane.b32.xlu0 %v1720, 64
  %v1730 = vpop.permute.xlu0 %1729
  %v1732 = vmul.f32 %v1728, %v1730
  %1734 = vrot.lane.b32.xlu0 %v1732, 64
  %v1735 = vpop.permute.xlu0 %1734
  %v1737 = vadd.f32 %v1103, %v1735
  %v1738 = vtanh.pop %v1737
  %v1739 = vsub.f32 1.0, %v1728
  %1741 = vrot.lane.b32.xlu0 %v1738, 96
  %v1742 = vpop.permute.xlu0 %1741
  %v1744 = vmul.f32 %v1739, %v1742
  %v1745 = vrot.slane %v1641, 6
  %v1747 = vmul.f32 %v1728, %v1745
  %v1748 = vadd.f32 %v1744, %v1747
  %1750 = vrot.lane.b32.xlu0 %v1748, 96
  %v1751 = vpop.permute.xlu0 %1750
  %1753 = vst.msk [vmem:[#allocation2 + $0x8] sm:$0xc] %vm348, %v1751
  %v1754 = vrot.slane %v1748, 2
  %1755 = vrot.lane.b32.xlu0 %v1754, 96
  %v1756 = vpop.permute.xlu0 %1755
  %v1757 = vsel %vm136, %v1756, 0
  %1759 = vmatprep.subr.mxu0 0.0
  %1760 = vmatpush1.msra.mxu0 0.0
  %1761 = vmatprep.subr.mxu0 0.0
  %1762 = vmatpush1.msra.mxu0 0.0
  %1763 = vmatprep.subr.mxu0 0.0
  %1764 = vmatpush1.msra.mxu0 0.0
  %1765 = vmatprep.subr.mxu0 0.0
  %1766 = vmatpush1.msra.mxu0 0.0
  %1767 = vmatprep.subr.mxu0 0.0
  %1768 = vmatpush1.msra.mxu0 0.0
  %1769 = vmatprep.subr.mxu0 0.0
  %1770 = vmatpush1.msra.mxu0 0.0
  %1771 = vmatprep.subr.mxu0 0.0
  %1772 = vmatpush1.msra.mxu0 0.0
  %1773 = vmatprep.subr.mxu0 0.0
  %1774 = vmatpush1.msra.mxu0 0.0
  %1775 = vmatprep.subr.mxu0 0.0
  %1776 = vmatpush1.msra.mxu0 0.0
  %1777 = vmatprep.subr.mxu0 0.0
  %1778 = vmatpush1.msra.mxu0 0.0
  %1779 = vmatprep.subr.mxu0 0.0
  %1780 = vmatpush1.msra.mxu0 0.0
  %1781 = vmatprep.subr.mxu0 0.0
  %1782 = vmatpush1.msra.mxu0 0.0
  %1783 = vmatprep.subr.mxu0 0.0
  %1784 = vmatpush1.msra.mxu0 %v1016
  %1785 = vmatprep.subr.mxu0 0.0
  %1786 = vmatpush1.msra.mxu0 %v1015
  %1787 = vmatprep.subr.mxu0 0.0
  %1788 = vmatpush1.msra.mxu0 %v1014
  %1789 = vmatprep.subr.mxu0 0.0
  %1790 = vmatpush1.msra.mxu0 %v1013
  %1791 = vmatprep.subr.mxu0 0.0
  %1792 = vmatpush2.msra.mxu0 0.0
  %1793 = vmatprep.subr.mxu0 0.0
  %1794 = vmatpush2.msra.mxu0 0.0
  %1795 = vmatprep.subr.mxu0 0.0
  %1796 = vmatpush2.msra.mxu0 0.0
  %1797 = vmatprep.subr.mxu0 0.0
  %1798 = vmatpush2.msra.mxu0 0.0
  %1799 = vmatprep.subr.mxu0 0.0
  %1800 = vmatpush2.msra.mxu0 0.0
  %1801 = vmatprep.subr.mxu0 0.0
  %1802 = vmatpush2.msra.mxu0 0.0
  %1803 = vmatprep.subr.mxu0 0.0
  %1804 = vmatpush2.msra.mxu0 0.0
  %1805 = vmatprep.subr.mxu0 0.0
  %1806 = vmatpush2.msra.mxu0 0.0
  %1807 = vmatprep.subr.mxu0 0.0
  %1808 = vmatpush2.msra.mxu0 0.0
  %1809 = vmatprep.subr.mxu0 0.0
  %1810 = vmatpush2.msra.mxu0 0.0
  %1811 = vmatprep.subr.mxu0 0.0
  %1812 = vmatpush2.msra.mxu0 0.0
  %1813 = vmatprep.subr.mxu0 0.0
  %1814 = vmatpush2.msra.mxu0 0.0
  %1815 = vmatprep.subr.mxu0 0.0
  %1816 = vmatpush2.msra.mxu0 0.0
  %1817 = vmatprep.subr.mxu0 0.0
  %1818 = vmatpush2.msra.mxu0 0.0
  %1819 = vmatprep.subr.mxu0 0.0
  %1820 = vmatpush2.msra.mxu0 0.0
  %1821 = vmatprep.subr.mxu0 0.0
  %1822 = vmatpush2.msra.mxu0 0.0
  %1823 = vmatprep.mubr.f32.mxu0 0.0
  %1824 = vmatmul.mubr.f32.gmra.mxu0 %v1757
  %v1825 = vpop.f32.mrf.mxu0
  %v1826 = vadd.f32 %v1110, %v1825
  %v1827 = vpop.f32.mrf.mxu0
  %1828 = vdwg.mxu0
  %v1830 = vrot.slane %v1826, 4
  %v1832 = vadd.f32 %v1103, %v1830
  %v1833 = vxor.u32 %v1832, 2147483648
  %v1834 = vmul.f32 %v1833, 1.442695
  %v1835 = vpow.pop %v1834
  %v1836 = vadd.f32 %v1835, 1.0
  %v1837 = vrcp.pop %v1836
  %v1838 = vmul.f32 1.0, %v1837
  %1839 = vrot.lane.b32.xlu0 %v1830, 64
  %v1840 = vpop.permute.xlu0 %1839
  %v1842 = vmul.f32 %v1838, %v1840
  %1844 = vrot.lane.b32.xlu0 %v1842, 64
  %v1845 = vpop.permute.xlu0 %1844
  %v1847 = vadd.f32 %v1103, %v1845
  %v1848 = vtanh.pop %v1847
  %v1849 = vsub.f32 1.0, %v1838
  %1851 = vrot.lane.b32.xlu0 %v1848, 96
  %v1852 = vpop.permute.xlu0 %1851
  %v1854 = vmul.f32 %v1849, %v1852
  %v1855 = vrot.slane %v1748, 6
  %v1857 = vmul.f32 %v1838, %v1855
  %v1858 = vadd.f32 %v1854, %v1857
  %1860 = vrot.lane.b32.xlu0 %v1858, 96
  %v1861 = vpop.permute.xlu0 %1860
  %1863 = vst.msk [vmem:[#allocation2 + $0x8] sm:$0x30] %vm459, %v1861
  %v1864 = vrot.slane %v1858, 4
  %1865 = vrot.lane.b32.xlu0 %v1864, 96
  %v1866 = vpop.permute.xlu0 %1865
  %v1867 = vsel %vm136, %v1866, 0
  %1869 = vmatprep.subr.mxu0 0.0
  %1870 = vmatpush1.msra.mxu0 0.0
  %1871 = vmatprep.subr.mxu0 0.0
  %1872 = vmatpush1.msra.mxu0 0.0
  %1873 = vmatprep.subr.mxu0 0.0
  %1874 = vmatpush1.msra.mxu0 0.0
  %1875 = vmatprep.subr.mxu0 0.0
  %1876 = vmatpush1.msra.mxu0 0.0
  %1877 = vmatprep.subr.mxu0 0.0
  %1878 = vmatpush1.msra.mxu0 0.0
  %1879 = vmatprep.subr.mxu0 0.0
  %1880 = vmatpush1.msra.mxu0 0.0
  %1881 = vmatprep.subr.mxu0 0.0
  %1882 = vmatpush1.msra.mxu0 0.0
  %1883 = vmatprep.subr.mxu0 0.0
  %1884 = vmatpush1.msra.mxu0 0.0
  %1885 = vmatprep.subr.mxu0 0.0
  %1886 = vmatpush1.msra.mxu0 0.0
  %1887 = vmatprep.subr.mxu0 0.0
  %1888 = vmatpush1.msra.mxu0 0.0
  %1889 = vmatprep.subr.mxu0 0.0
  %1890 = vmatpush1.msra.mxu0 0.0
  %1891 = vmatprep.subr.mxu0 0.0
  %1892 = vmatpush1.msra.mxu0 0.0
  %1893 = vmatprep.subr.mxu0 0.0
  %1894 = vmatpush1.msra.mxu0 %v1016
  %1895 = vmatprep.subr.mxu0 0.0
  %1896 = vmatpush1.msra.mxu0 %v1015
  %1897 = vmatprep.subr.mxu0 0.0
  %1898 = vmatpush1.msra.mxu0 %v1014
  %1899 = vmatprep.subr.mxu0 0.0
  %1900 = vmatpush1.msra.mxu0 %v1013
  %1901 = vmatprep.subr.mxu0 0.0
  %1902 = vmatpush2.msra.mxu0 0.0
  %1903 = vmatprep.subr.mxu0 0.0
  %1904 = vmatpush2.msra.mxu0 0.0
  %1905 = vmatprep.subr.mxu0 0.0
  %1906 = vmatpush2.msra.mxu0 0.0
  %1907 = vmatprep.subr.mxu0 0.0
  %1908 = vmatpush2.msra.mxu0 0.0
  %1909 = vmatprep.subr.mxu0 0.0
  %1910 = vmatpush2.msra.mxu0 0.0
  %1911 = vmatprep.subr.mxu0 0.0
  %1912 = vmatpush2.msra.mxu0 0.0
  %1913 = vmatprep.subr.mxu0 0.0
  %1914 = vmatpush2.msra.mxu0 0.0
  %1915 = vmatprep.subr.mxu0 0.0
  %1916 = vmatpush2.msra.mxu0 0.0
  %1917 = vmatprep.subr.mxu0 0.0
  %1918 = vmatpush2.msra.mxu0 0.0
  %1919 = vmatprep.subr.mxu0 0.0
  %1920 = vmatpush2.msra.mxu0 0.0
  %1921 = vmatprep.subr.mxu0 0.0
  %1922 = vmatpush2.msra.mxu0 0.0
  %1923 = vmatprep.subr.mxu0 0.0
  %1924 = vmatpush2.msra.mxu0 0.0
  %1925 = vmatprep.subr.mxu0 0.0
  %1926 = vmatpush2.msra.mxu0 0.0
  %1927 = vmatprep.subr.mxu0 0.0
  %1928 = vmatpush2.msra.mxu0 0.0
  %1929 = vmatprep.subr.mxu0 0.0
  %1930 = vmatpush2.msra.mxu0 0.0
  %1931 = vmatprep.subr.mxu0 0.0
  %1932 = vmatpush2.msra.mxu0 0.0
  %1933 = vmatprep.mubr.f32.mxu0 0.0
  %1934 = vmatmul.mubr.f32.gmra.mxu0 %v1867
  %v1935 = vpop.f32.mrf.mxu0
  %v1936 = vadd.f32 %v1110, %v1935
  %v1937 = vpop.f32.mrf.mxu0
  %1938 = vdwg.mxu0
  %v1940 = vrot.slane %v1936, 2
  %v1942 = vadd.f32 %v1103, %v1940
  %v1943 = vxor.u32 %v1942, 2147483648
  %v1944 = vmul.f32 %v1943, 1.442695
  %v1945 = vpow.pop %v1944
  %v1946 = vadd.f32 %v1945, 1.0
  %v1947 = vrcp.pop %v1946
  %v1948 = vmul.f32 1.0, %v1947
  %1949 = vrot.lane.b32.xlu0 %v1940, 64
  %v1950 = vpop.permute.xlu0 %1949
  %v1952 = vmul.f32 %v1948, %v1950
  %1954 = vrot.lane.b32.xlu0 %v1952, 64
  %v1955 = vpop.permute.xlu0 %1954
  %v1957 = vadd.f32 %v1103, %v1955
  %v1958 = vtanh.pop %v1957
  %v1959 = vsub.f32 1.0, %v1948
  %1961 = vrot.lane.b32.xlu0 %v1958, 96
  %v1962 = vpop.permute.xlu0 %1961
  %v1964 = vmul.f32 %v1959, %v1962
  %v1965 = vrot.slane %v1858, 6
  %v1967 = vmul.f32 %v1948, %v1965
  %v1968 = vadd.f32 %v1964, %v1967
  %1970 = vrot.lane.b32.xlu0 %v1968, 96
  %v1971 = vpop.permute.xlu0 %1970
  %1973 = vst.msk [vmem:[#allocation2 + $0x8] sm:$0xc0] %vm570, %v1971
  %s1974 = scalar_lea.vmem %s9, 2
  %1975 = vst.msk [vmem:[%s1974 - $0x6] sm:$0xc0] %vm570, %v1971
  // Predicated region
  $region38: #{baseline_forward.2} parent=0 // pred_check
    _
  $region39: #{baseline_forward.2} parent=0 // pred_check_branch
    %1977 = sbr.rel (0) target = $region41
  $region40: #{baseline_forward.2} parent=0 // pred_region
    _
  $region41: #{baseline_forward.2} parent=0 // pred_fallthru
    _
  // Predicated region
  $region42: #{baseline_forward.2} parent=0 // pred_check
    _
  $region43: #{baseline_forward.2} parent=0 // pred_check_branch
    %1979 = sbr.rel (0) target = $region45
  $region44: #{baseline_forward.2} parent=0 // pred_region
    _
  $region45: #{baseline_forward.2} parent=0 // pred_fallthru
    _

// kernel: baseline_forward.3
$region0: #{baseline_forward.3}
  #allocation0 [shape = 'u32[]', space=smem, size = 0x4, offset = 0x4, fixed_abs, tag = 'smem constant byte address 0x4 - core index']
  #allocation1 [shape = 'u32[144,128]{1,0:T(1,128)}', space=vmem, size = 0x12000, scoped, tag = 'internal scratch']
  #allocation2 [shape = 'f32[16,32]{1,0:T(8,128)}', space=vmem, size = 0x2000, scoped, tag = 'scratch operand']
  %s0 = inlined_call_operand.vmem [shape: f32[16,16], index: 0, kind: input, shape index: {}]
  %s1 = inlined_call_operand.vmem [shape: f32[2,2,32], index: 1, kind: input, shape index: {}]
  %s2 = inlined_call_operand.vmem [shape: f32[16,96], index: 2, kind: input, shape index: {}]
  %s3 = inlined_call_operand.vmem [shape: f32[32,96], index: 3, kind: input, shape index: {}]
  %s4 = inlined_call_operand.vmem [shape: f32[1,96], index: 4, kind: input, shape index: {}]
  %s5 = inlined_call_operand.vmem [shape: f32[1,96], index: 5, kind: input, shape index: {}]
  %s6 = inlined_call_operand.vmem [shape: f32[32,96], index: 6, kind: input, shape index: {}]
  %s7 = inlined_call_operand.vmem [shape: f32[32,96], index: 7, kind: input, shape index: {}]
  %s8 = inlined_call_operand.vmem [shape: f32[1,96], index: 8, kind: input, shape index: {}]
  %s9 = inlined_call_operand.vmem [shape: f32[1,96], index: 9, kind: input, shape index: {}]
  %s10 = inlined_call_operand.vmem [shape: f32[32,64], index: 10, kind: input, shape index: {}]
  %s11 = inlined_call_operand.vmem [shape: f32[1,64], index: 11, kind: input, shape index: {}]
  %s12 = inlined_call_operand.vmem [shape: f32[16,64], index: 12, kind: output, shape index: {}]
  %s13 = sld [smem:[#allocation0]]
  $region58: #{baseline_forward.3} parent=0
    _
  %s15 = ssub.s32 1, %s13
  %s16 = scalar_select 0, %s15, %s13
  // Predicated region
  $region2: #{baseline_forward.3} parent=0 // pred_check
    _
  $region3: #{baseline_forward.3} parent=0 // pred_check_branch
    %18 = sbr.rel (0) target = $region5
  $region4: #{baseline_forward.3} parent=0 // pred_region
    _
  $region5: #{baseline_forward.3} parent=0 // pred_fallthru
    _
  // Predicated region
  $region6: #{baseline_forward.3} parent=0 // pred_check
    _
  $region7: #{baseline_forward.3} parent=0 // pred_check_branch
    %20 = sbr.rel (0) target = $region9
  $region8: #{baseline_forward.3} parent=0 // pred_region
    _
  $region9: #{baseline_forward.3} parent=0 // pred_fallthru
    _
  // Predicated region
  $region10: #{baseline_forward.3} parent=0 // pred_check
    _
  $region11: #{baseline_forward.3} parent=0 // pred_check_branch
    %22 = sbr.rel (0) target = $region13
  $region12: #{baseline_forward.3} parent=0 // pred_region
    _
  $region13: #{baseline_forward.3} parent=0 // pred_fallthru
    _
  // Predicated region
  $region14: #{baseline_forward.3} parent=0 // pred_check
    _
  $region15: #{baseline_forward.3} parent=0 // pred_check_branch
    %24 = sbr.rel (0) target = $region17
  $region16: #{baseline_forward.3} parent=0 // pred_region
    _
  $region17: #{baseline_forward.3} parent=0 // pred_fallthru
    _
  // Predicated region
  $region18: #{baseline_forward.3} parent=0 // pred_check
    _
  $region19: #{baseline_forward.3} parent=0 // pred_check_branch
    %26 = sbr.rel (0) target = $region21
  $region20: #{baseline_forward.3} parent=0 // pred_region
    _
  $region21: #{baseline_forward.3} parent=0 // pred_fallthru
    _
  // Predicated region
  $region22: #{baseline_forward.3} parent=0 // pred_check
    _
  $region23: #{baseline_forward.3} parent=0 // pred_check_branch
    %28 = sbr.rel (0) target = $region25
  $region24: #{baseline_forward.3} parent=0 // pred_region
    _
  $region25: #{baseline_forward.3} parent=0 // pred_fallthru
    _
  // Predicated region
  $region26: #{baseline_forward.3} parent=0 // pred_check
    _
  $region27: #{baseline_forward.3} parent=0 // pred_check_branch
    %30 = sbr.rel (0) target = $region29
  $region28: #{baseline_forward.3} parent=0 // pred_region
    _
  $region29: #{baseline_forward.3} parent=0 // pred_fallthru
    _
  // Predicated region
  $region30: #{baseline_forward.3} parent=0 // pred_check
    _
  $region31: #{baseline_forward.3} parent=0 // pred_check_branch
    %32 = sbr.rel (0) target = $region33
  $region32: #{baseline_forward.3} parent=0 // pred_region
    _
  $region33: #{baseline_forward.3} parent=0 // pred_fallthru
    _
  // Predicated region
  $region34: #{baseline_forward.3} parent=0 // pred_check
    _
  $region35: #{baseline_forward.3} parent=0 // pred_check_branch
    %34 = sbr.rel (0) target = $region37
  $region36: #{baseline_forward.3} parent=0 // pred_region
    _
  $region37: #{baseline_forward.3} parent=0 // pred_fallthru
    _
  // Predicated region
  $region38: #{baseline_forward.3} parent=0 // pred_check
    _
  $region39: #{baseline_forward.3} parent=0 // pred_check_branch
    %36 = sbr.rel (0) target = $region41
  $region40: #{baseline_forward.3} parent=0 // pred_region
    _
  $region41: #{baseline_forward.3} parent=0 // pred_fallthru
    _
  // Predicated region
  $region42: #{baseline_forward.3} parent=0 // pred_check
    _
  $region43: #{baseline_forward.3} parent=0 // pred_check_branch
    %38 = sbr.rel (0) target = $region45
  $region44: #{baseline_forward.3} parent=0 // pred_region
    _
  $region45: #{baseline_forward.3} parent=0 // pred_fallthru
    _
  // Predicated region
  $region46: #{baseline_forward.3} parent=0 // pred_check
    _
  $region47: #{baseline_forward.3} parent=0 // pred_check_branch
    %40 = sbr.rel (0) target = $region49
  $region48: #{baseline_forward.3} parent=0 // pred_region
    _
  $region49: #{baseline_forward.3} parent=0 // pred_fallthru
    _
  %v41 = vld [vmem:[%s0] sm:$0xff]
  %v42 = vld [vmem:[%s0 + $0x8] sm:$0xff]
  %v43 = vld [vmem:[%s2] sm:$0xff]
  %v44 = vld [vmem:[%s2 + $0x8] sm:$0xff]
  %v45 = vld [vmem:[%s3] sm:$0xff]
  %v46 = vld [vmem:[%s3 + $0x8] sm:$0xff]
  %v47 = vld [vmem:[%s3 + $0x10] sm:$0xff]
  %v48 = vld [vmem:[%s3 + $0x18] sm:$0xff]
  %v49 = vld [vmem:[%s4] sm:$0x1]
  %v50 = vld [vmem:[%s5] sm:$0x1]
  %v52 = vlaneseq
  %v53 = vshrl.u32 %v52, 7
  %v54 = vsub.s32 0, %v53
  %v55 = vrot.slane %v49, %v54
  %vm57 = vcmask 130048
  %v59 = vsel %vm57, %v41, 0
  %v62 = vsel %vm57, %v42, 0
  %64 = vmatprep.subr.mxu0 0.0
  %65 = vmatpush1.msra.mxu0 0.0
  %66 = vmatprep.subr.mxu0 0.0
  %67 = vmatpush1.msra.mxu0 0.0
  %68 = vmatprep.subr.mxu0 0.0
  %69 = vmatpush1.msra.mxu0 0.0
  %70 = vmatprep.subr.mxu0 0.0
  %71 = vmatpush1.msra.mxu0 0.0
  %72 = vmatprep.subr.mxu0 0.0
  %73 = vmatpush1.msra.mxu0 0.0
  %74 = vmatprep.subr.mxu0 0.0
  %75 = vmatpush1.msra.mxu0 0.0
  %76 = vmatprep.subr.mxu0 0.0
  %77 = vmatpush1.msra.mxu0 0.0
  %78 = vmatprep.subr.mxu0 0.0
  %79 = vmatpush1.msra.mxu0 0.0
  %80 = vmatprep.subr.mxu0 0.0
  %81 = vmatpush1.msra.mxu0 0.0
  %82 = vmatprep.subr.mxu0 0.0
  %83 = vmatpush1.msra.mxu0 0.0
  %84 = vmatprep.subr.mxu0 0.0
  %85 = vmatpush1.msra.mxu0 0.0
  %86 = vmatprep.subr.mxu0 0.0
  %87 = vmatpush1.msra.mxu0 0.0
  %88 = vmatprep.subr.mxu0 0.0
  %89 = vmatpush1.msra.mxu0 0.0
  %90 = vmatprep.subr.mxu0 0.0
  %91 = vmatpush1.msra.mxu0 0.0
  %92 = vmatprep.subr.mxu0 0.0
  %93 = vmatpush1.msra.mxu0 %v44
  %94 = vmatprep.subr.mxu0 0.0
  %95 = vmatpush1.msra.mxu0 %v43
  %96 = vmatprep.subr.mxu0 0.0
  %97 = vmatpush2.msra.mxu0 0.0
  %98 = vmatprep.subr.mxu0 0.0
  %99 = vmatpush2.msra.mxu0 0.0
  %100 = vmatprep.subr.mxu0 0.0
  %101 = vmatpush2.msra.mxu0 0.0
  %102 = vmatprep.subr.mxu0 0.0
  %103 = vmatpush2.msra.mxu0 0.0
  %104 = vmatprep.subr.mxu0 0.0
  %105 = vmatpush2.msra.mxu0 0.0
  %106 = vmatprep.subr.mxu0 0.0
  %107 = vmatpush2.msra.mxu0 0.0
  %108 = vmatprep.subr.mxu0 0.0
  %109 = vmatpush2.msra.mxu0 0.0
  %110 = vmatprep.subr.mxu0 0.0
  %111 = vmatpush2.msra.mxu0 0.0
  %112 = vmatprep.subr.mxu0 0.0
  %113 = vmatpush2.msra.mxu0 0.0
  %114 = vmatprep.subr.mxu0 0.0
  %115 = vmatpush2.msra.mxu0 0.0
  %116 = vmatprep.subr.mxu0 0.0
  %117 = vmatpush2.msra.mxu0 0.0
  %118 = vmatprep.subr.mxu0 0.0
  %119 = vmatpush2.msra.mxu0 0.0
  %120 = vmatprep.subr.mxu0 0.0
  %121 = vmatpush2.msra.mxu0 0.0
  %122 = vmatprep.subr.mxu0 0.0
  %123 = vmatpush2.msra.mxu0 0.0
  %124 = vmatprep.subr.mxu0 0.0
  %125 = vmatpush2.msra.mxu0 0.0
  %126 = vmatprep.subr.mxu0 0.0
  %127 = vmatpush2.msra.mxu0 0.0
  %128 = vmatprep.mubr.f32.mxu0 0.0
  %129 = vmatmul.mubr.f32.gmra.mxu0 %v59
  %v130 = vpop.f32.mrf.mxu0
  %v131 = vadd.f32 %v55, %v130
  %v132 = vpop.f32.mrf.mxu0
  %133 = vmatprep.mubr.f32.mxu0 0.0
  %134 = vmatmul.mubr.f32.gmra.mxu0 %v62
  %v135 = vpop.f32.mrf.mxu0
  %v136 = vadd.f32 %v55, %v135
  %v137 = vpop.f32.mrf.mxu0
  %138 = vdwg.mxu0
  %v139 = vld [vmem:[%s1] sm:$0x3]
  %v141 = vlaneseq
  %v142 = vshrl.u32 %v141, 7
  %v143 = vsub.s32 0, %v142
  %v144 = vrot.slane %v50, %v143
  %vm146 = vcmask 261120
  %v148 = vsel %vm146, %v139, 0
  %150 = vmatprep.subr.mxu0 0.0
  %151 = vmatpush1.msra.mxu0 0.0
  %152 = vmatprep.subr.mxu0 0.0
  %153 = vmatpush1.msra.mxu0 0.0
  %154 = vmatprep.subr.mxu0 0.0
  %155 = vmatpush1.msra.mxu0 0.0
  %156 = vmatprep.subr.mxu0 0.0
  %157 = vmatpush1.msra.mxu0 0.0
  %158 = vmatprep.subr.mxu0 0.0
  %159 = vmatpush1.msra.mxu0 0.0
  %160 = vmatprep.subr.mxu0 0.0
  %161 = vmatpush1.msra.mxu0 0.0
  %162 = vmatprep.subr.mxu0 0.0
  %163 = vmatpush1.msra.mxu0 0.0
  %164 = vmatprep.subr.mxu0 0.0
  %165 = vmatpush1.msra.mxu0 0.0
  %166 = vmatprep.subr.mxu0 0.0
  %167 = vmatpush1.msra.mxu0 0.0
  %168 = vmatprep.subr.mxu0 0.0
  %169 = vmatpush1.msra.mxu0 0.0
  %170 = vmatprep.subr.mxu0 0.0
  %171 = vmatpush1.msra.mxu0 0.0
  %172 = vmatprep.subr.mxu0 0.0
  %173 = vmatpush1.msra.mxu0 0.0
  %174 = vmatprep.subr.mxu0 0.0
  %175 = vmatpush1.msra.mxu0 %v48
  %176 = vmatprep.subr.mxu0 0.0
  %177 = vmatpush1.msra.mxu0 %v47
  %178 = vmatprep.subr.mxu0 0.0
  %179 = vmatpush1.msra.mxu0 %v46
  %180 = vmatprep.subr.mxu0 0.0
  %181 = vmatpush1.msra.mxu0 %v45
  %182 = vmatprep.subr.mxu0 0.0
  %183 = vmatpush2.msra.mxu0 0.0
  %184 = vmatprep.subr.mxu0 0.0
  %185 = vmatpush2.msra.mxu0 0.0
  %186 = vmatprep.subr.mxu0 0.0
  %187 = vmatpush2.msra.mxu0 0.0
  %188 = vmatprep.subr.mxu0 0.0
  %189 = vmatpush2.msra.mxu0 0.0
  %190 = vmatprep.subr.mxu0 0.0
  %191 = vmatpush2.msra.mxu0 0.0
  %192 = vmatprep.subr.mxu0 0.0
  %193 = vmatpush2.msra.mxu0 0.0
  %194 = vmatprep.subr.mxu0 0.0
  %195 = vmatpush2.msra.mxu0 0.0
  %196 = vmatprep.subr.mxu0 0.0
  %197 = vmatpush2.msra.mxu0 0.0
  %198 = vmatprep.subr.mxu0 0.0
  %199 = vmatpush2.msra.mxu0 0.0
  %200 = vmatprep.subr.mxu0 0.0
  %201 = vmatpush2.msra.mxu0 0.0
  %202 = vmatprep.subr.mxu0 0.0
  %203 = vmatpush2.msra.mxu0 0.0
  %204 = vmatprep.subr.mxu0 0.0
  %205 = vmatpush2.msra.mxu0 0.0
  %206 = vmatprep.subr.mxu0 0.0
  %207 = vmatpush2.msra.mxu0 0.0
  %208 = vmatprep.subr.mxu0 0.0
  %209 = vmatpush2.msra.mxu0 0.0
  %210 = vmatprep.subr.mxu0 0.0
  %211 = vmatpush2.msra.mxu0 0.0
  %212 = vmatprep.subr.mxu0 0.0
  %213 = vmatpush2.msra.mxu0 0.0
  %214 = vmatprep.mubr.f32.mxu0 0.0
  %215 = vmatmul.mubr.f32.gmra.mxu0 %v148
  %v216 = vpop.f32.mrf.mxu0
  %v217 = vadd.f32 %v144, %v216
  %v218 = vpop.f32.mrf.mxu0
  %219 = vdwg.mxu0
  %v220 = vadd.f32 %v131, %v217
  %v221 = vxor.u32 %v220, 2147483648
  %v222 = vmul.f32 %v221, 1.442695
  %v223 = vpow.pop %v222
  %v224 = vadd.f32 %v223, 1.0
  %v225 = vrcp.pop %v224
  %v226 = vmul.f32 1.0, %v225
  %228 = vrot.lane.b32.xlu0 %v217, 64
  %v229 = vpop.permute.xlu0 %228
  %v231 = vmul.f32 %v226, %v229
  %233 = vrot.lane.b32.xlu0 %v231, 64
  %v234 = vpop.permute.xlu0 %233
  %v236 = vadd.f32 %v131, %v234
  %v237 = vtanh.pop %v236
  %v238 = vsub.f32 1.0, %v226
  %240 = vrot.lane.b32.xlu0 %v237, 96
  %v241 = vpop.permute.xlu0 %240
  %v243 = vmul.f32 %v238, %v241
  %244 = vrot.lane.b32.xlu0 %v139, 32
  %v245 = vpop.permute.xlu0 %244
  %v247 = vmul.f32 %v226, %v245
  %v248 = vadd.f32 %v243, %v247
  %250 = vrot.lane.b32.xlu0 %v248, 96
  %v251 = vpop.permute.xlu0 %250
  %vm253 = vcmask 254976
  %254 = vst.msk [vmem:[#allocation2] sm:$0x3] %vm253, %v251
  %v255 = vsel %vm146, %v251, 0
  %257 = vmatprep.subr.mxu0 0.0
  %258 = vmatpush1.msra.mxu0 0.0
  %259 = vmatprep.subr.mxu0 0.0
  %260 = vmatpush1.msra.mxu0 0.0
  %261 = vmatprep.subr.mxu0 0.0
  %262 = vmatpush1.msra.mxu0 0.0
  %263 = vmatprep.subr.mxu0 0.0
  %264 = vmatpush1.msra.mxu0 0.0
  %265 = vmatprep.subr.mxu0 0.0
  %266 = vmatpush1.msra.mxu0 0.0
  %267 = vmatprep.subr.mxu0 0.0
  %268 = vmatpush1.msra.mxu0 0.0
  %269 = vmatprep.subr.mxu0 0.0
  %270 = vmatpush1.msra.mxu0 0.0
  %271 = vmatprep.subr.mxu0 0.0
  %272 = vmatpush1.msra.mxu0 0.0
  %273 = vmatprep.subr.mxu0 0.0
  %274 = vmatpush1.msra.mxu0 0.0
  %275 = vmatprep.subr.mxu0 0.0
  %276 = vmatpush1.msra.mxu0 0.0
  %277 = vmatprep.subr.mxu0 0.0
  %278 = vmatpush1.msra.mxu0 0.0
  %279 = vmatprep.subr.mxu0 0.0
  %280 = vmatpush1.msra.mxu0 0.0
  %281 = vmatprep.subr.mxu0 0.0
  %282 = vmatpush1.msra.mxu0 %v48
  %283 = vmatprep.subr.mxu0 0.0
  %284 = vmatpush1.msra.mxu0 %v47
  %285 = vmatprep.subr.mxu0 0.0
  %286 = vmatpush1.msra.mxu0 %v46
  %287 = vmatprep.subr.mxu0 0.0
  %288 = vmatpush1.msra.mxu0 %v45
  %289 = vmatprep.subr.mxu0 0.0
  %290 = vmatpush2.msra.mxu0 0.0
  %291 = vmatprep.subr.mxu0 0.0
  %292 = vmatpush2.msra.mxu0 0.0
  %293 = vmatprep.subr.mxu0 0.0
  %294 = vmatpush2.msra.mxu0 0.0
  %295 = vmatprep.subr.mxu0 0.0
  %296 = vmatpush2.msra.mxu0 0.0
  %297 = vmatprep.subr.mxu0 0.0
  %298 = vmatpush2.msra.mxu0 0.0
  %299 = vmatprep.subr.mxu0 0.0
  %300 = vmatpush2.msra.mxu0 0.0
  %301 = vmatprep.subr.mxu0 0.0
  %302 = vmatpush2.msra.mxu0 0.0
  %303 = vmatprep.subr.mxu0 0.0
  %304 = vmatpush2.msra.mxu0 0.0
  %305 = vmatprep.subr.mxu0 0.0
  %306 = vmatpush2.msra.mxu0 0.0
  %307 = vmatprep.subr.mxu0 0.0
  %308 = vmatpush2.msra.mxu0 0.0
  %309 = vmatprep.subr.mxu0 0.0
  %310 = vmatpush2.msra.mxu0 0.0
  %311 = vmatprep.subr.mxu0 0.0
  %312 = vmatpush2.msra.mxu0 0.0
  %313 = vmatprep.subr.mxu0 0.0
  %314 = vmatpush2.msra.mxu0 0.0
  %315 = vmatprep.subr.mxu0 0.0
  %316 = vmatpush2.msra.mxu0 0.0
  %317 = vmatprep.subr.mxu0 0.0
  %318 = vmatpush2.msra.mxu0 0.0
  %319 = vmatprep.subr.mxu0 0.0
  %320 = vmatpush2.msra.mxu0 0.0
  %321 = vmatprep.mubr.f32.mxu0 0.0
  %322 = vmatmul.mubr.f32.gmra.mxu0 %v255
  %v323 = vpop.f32.mrf.mxu0
  %v324 = vadd.f32 %v144, %v323
  %v325 = vpop.f32.mrf.mxu0
  %326 = vdwg.mxu0
  %v328 = vrot.slane %v324, 6
  %v330 = vadd.f32 %v131, %v328
  %v331 = vxor.u32 %v330, 2147483648
  %v332 = vmul.f32 %v331, 1.442695
  %v333 = vpow.pop %v332
  %v334 = vadd.f32 %v333, 1.0
  %v335 = vrcp.pop %v334
  %v336 = vmul.f32 1.0, %v335
  %337 = vrot.lane.b32.xlu0 %v328, 64
  %v338 = vpop.permute.xlu0 %337
  %v340 = vmul.f32 %v336, %v338
  %342 = vrot.lane.b32.xlu0 %v340, 64
  %v343 = vpop.permute.xlu0 %342
  %v345 = vadd.f32 %v131, %v343
  %v346 = vtanh.pop %v345
  %v347 = vsub.f32 1.0, %v336
  %349 = vrot.lane.b32.xlu0 %v346, 96
  %v350 = vpop.permute.xlu0 %349
  %v352 = vmul.f32 %v347, %v350
  %v353 = vrot.slane %v248, 6
  %v355 = vmul.f32 %v336, %v353
  %v356 = vadd.f32 %v352, %v355
  %358 = vrot.lane.b32.xlu0 %v356, 96
  %v359 = vpop.permute.xlu0 %358
  %vm361 = vcmask 257026
  %362 = vst.msk [vmem:[#allocation2] sm:$0xc] %vm361, %v359
  %v363 = vrot.slane %v356, 2
  %364 = vrot.lane.b32.xlu0 %v363, 96
  %v365 = vpop.permute.xlu0 %364
  %v366 = vsel %vm146, %v365, 0
  %368 = vmatprep.subr.mxu0 0.0
  %369 = vmatpush1.msra.mxu0 0.0
  %370 = vmatprep.subr.mxu0 0.0
  %371 = vmatpush1.msra.mxu0 0.0
  %372 = vmatprep.subr.mxu0 0.0
  %373 = vmatpush1.msra.mxu0 0.0
  %374 = vmatprep.subr.mxu0 0.0
  %375 = vmatpush1.msra.mxu0 0.0
  %376 = vmatprep.subr.mxu0 0.0
  %377 = vmatpush1.msra.mxu0 0.0
  %378 = vmatprep.subr.mxu0 0.0
  %379 = vmatpush1.msra.mxu0 0.0
  %380 = vmatprep.subr.mxu0 0.0
  %381 = vmatpush1.msra.mxu0 0.0
  %382 = vmatprep.subr.mxu0 0.0
  %383 = vmatpush1.msra.mxu0 0.0
  %384 = vmatprep.subr.mxu0 0.0
  %385 = vmatpush1.msra.mxu0 0.0
  %386 = vmatprep.subr.mxu0 0.0
  %387 = vmatpush1.msra.mxu0 0.0
  %388 = vmatprep.subr.mxu0 0.0
  %389 = vmatpush1.msra.mxu0 0.0
  %390 = vmatprep.subr.mxu0 0.0
  %391 = vmatpush1.msra.mxu0 0.0
  %392 = vmatprep.subr.mxu0 0.0
  %393 = vmatpush1.msra.mxu0 %v48
  %394 = vmatprep.subr.mxu0 0.0
  %395 = vmatpush1.msra.mxu0 %v47
  %396 = vmatprep.subr.mxu0 0.0
  %397 = vmatpush1.msra.mxu0 %v46
  %398 = vmatprep.subr.mxu0 0.0
  %399 = vmatpush1.msra.mxu0 %v45
  %400 = vmatprep.subr.mxu0 0.0
  %401 = vmatpush2.msra.mxu0 0.0
  %402 = vmatprep.subr.mxu0 0.0
  %403 = vmatpush2.msra.mxu0 0.0
  %404 = vmatprep.subr.mxu0 0.0
  %405 = vmatpush2.msra.mxu0 0.0
  %406 = vmatprep.subr.mxu0 0.0
  %407 = vmatpush2.msra.mxu0 0.0
  %408 = vmatprep.subr.mxu0 0.0
  %409 = vmatpush2.msra.mxu0 0.0
  %410 = vmatprep.subr.mxu0 0.0
  %411 = vmatpush2.msra.mxu0 0.0
  %412 = vmatprep.subr.mxu0 0.0
  %413 = vmatpush2.msra.mxu0 0.0
  %414 = vmatprep.subr.mxu0 0.0
  %415 = vmatpush2.msra.mxu0 0.0
  %416 = vmatprep.subr.mxu0 0.0
  %417 = vmatpush2.msra.mxu0 0.0
  %418 = vmatprep.subr.mxu0 0.0
  %419 = vmatpush2.msra.mxu0 0.0
  %420 = vmatprep.subr.mxu0 0.0
  %421 = vmatpush2.msra.mxu0 0.0
  %422 = vmatprep.subr.mxu0 0.0
  %423 = vmatpush2.msra.mxu0 0.0
  %424 = vmatprep.subr.mxu0 0.0
  %425 = vmatpush2.msra.mxu0 0.0
  %426 = vmatprep.subr.mxu0 0.0
  %427 = vmatpush2.msra.mxu0 0.0
  %428 = vmatprep.subr.mxu0 0.0
  %429 = vmatpush2.msra.mxu0 0.0
  %430 = vmatprep.subr.mxu0 0.0
  %431 = vmatpush2.msra.mxu0 0.0
  %432 = vmatprep.mubr.f32.mxu0 0.0
  %433 = vmatmul.mubr.f32.gmra.mxu0 %v366
  %v434 = vpop.f32.mrf.mxu0
  %v435 = vadd.f32 %v144, %v434
  %v436 = vpop.f32.mrf.mxu0
  %437 = vdwg.mxu0
  %v439 = vrot.slane %v435, 4
  %v441 = vadd.f32 %v131, %v439
  %v442 = vxor.u32 %v441, 2147483648
  %v443 = vmul.f32 %v442, 1.442695
  %v444 = vpow.pop %v443
  %v445 = vadd.f32 %v444, 1.0
  %v446 = vrcp.pop %v445
  %v447 = vmul.f32 1.0, %v446
  %448 = vrot.lane.b32.xlu0 %v439, 64
  %v449 = vpop.permute.xlu0 %448
  %v451 = vmul.f32 %v447, %v449
  %453 = vrot.lane.b32.xlu0 %v451, 64
  %v454 = vpop.permute.xlu0 %453
  %v456 = vadd.f32 %v131, %v454
  %v457 = vtanh.pop %v456
  %v458 = vsub.f32 1.0, %v447
  %460 = vrot.lane.b32.xlu0 %v457, 96
  %v461 = vpop.permute.xlu0 %460
  %v463 = vmul.f32 %v458, %v461
  %v464 = vrot.slane %v356, 6
  %v466 = vmul.f32 %v447, %v464
  %v467 = vadd.f32 %v463, %v466
  %469 = vrot.lane.b32.xlu0 %v467, 96
  %v470 = vpop.permute.xlu0 %469
  %vm472 = vcmask 259076
  %473 = vst.msk [vmem:[#allocation2] sm:$0x30] %vm472, %v470
  %v474 = vrot.slane %v467, 4
  %475 = vrot.lane.b32.xlu0 %v474, 96
  %v476 = vpop.permute.xlu0 %475
  %v477 = vsel %vm146, %v476, 0
  %479 = vmatprep.subr.mxu0 0.0
  %480 = vmatpush1.msra.mxu0 0.0
  %481 = vmatprep.subr.mxu0 0.0
  %482 = vmatpush1.msra.mxu0 0.0
  %483 = vmatprep.subr.mxu0 0.0
  %484 = vmatpush1.msra.mxu0 0.0
  %485 = vmatprep.subr.mxu0 0.0
  %486 = vmatpush1.msra.mxu0 0.0
  %487 = vmatprep.subr.mxu0 0.0
  %488 = vmatpush1.msra.mxu0 0.0
  %489 = vmatprep.subr.mxu0 0.0
  %490 = vmatpush1.msra.mxu0 0.0
  %491 = vmatprep.subr.mxu0 0.0
  %492 = vmatpush1.msra.mxu0 0.0
  %493 = vmatprep.subr.mxu0 0.0
  %494 = vmatpush1.msra.mxu0 0.0
  %495 = vmatprep.subr.mxu0 0.0
  %496 = vmatpush1.msra.mxu0 0.0
  %497 = vmatprep.subr.mxu0 0.0
  %498 = vmatpush1.msra.mxu0 0.0
  %499 = vmatprep.subr.mxu0 0.0
  %500 = vmatpush1.msra.mxu0 0.0
  %501 = vmatprep.subr.mxu0 0.0
  %502 = vmatpush1.msra.mxu0 0.0
  %503 = vmatprep.subr.mxu0 0.0
  %504 = vmatpush1.msra.mxu0 %v48
  %505 = vmatprep.subr.mxu0 0.0
  %506 = vmatpush1.msra.mxu0 %v47
  %507 = vmatprep.subr.mxu0 0.0
  %508 = vmatpush1.msra.mxu0 %v46
  %509 = vmatprep.subr.mxu0 0.0
  %510 = vmatpush1.msra.mxu0 %v45
  %511 = vmatprep.subr.mxu0 0.0
  %512 = vmatpush2.msra.mxu0 0.0
  %513 = vmatprep.subr.mxu0 0.0
  %514 = vmatpush2.msra.mxu0 0.0
  %515 = vmatprep.subr.mxu0 0.0
  %516 = vmatpush2.msra.mxu0 0.0
  %517 = vmatprep.subr.mxu0 0.0
  %518 = vmatpush2.msra.mxu0 0.0
  %519 = vmatprep.subr.mxu0 0.0
  %520 = vmatpush2.msra.mxu0 0.0
  %521 = vmatprep.subr.mxu0 0.0
  %522 = vmatpush2.msra.mxu0 0.0
  %523 = vmatprep.subr.mxu0 0.0
  %524 = vmatpush2.msra.mxu0 0.0
  %525 = vmatprep.subr.mxu0 0.0
  %526 = vmatpush2.msra.mxu0 0.0
  %527 = vmatprep.subr.mxu0 0.0
  %528 = vmatpush2.msra.mxu0 0.0
  %529 = vmatprep.subr.mxu0 0.0
  %530 = vmatpush2.msra.mxu0 0.0
  %531 = vmatprep.subr.mxu0 0.0
  %532 = vmatpush2.msra.mxu0 0.0
  %533 = vmatprep.subr.mxu0 0.0
  %534 = vmatpush2.msra.mxu0 0.0
  %535 = vmatprep.subr.mxu0 0.0
  %536 = vmatpush2.msra.mxu0 0.0
  %537 = vmatprep.subr.mxu0 0.0
  %538 = vmatpush2.msra.mxu0 0.0
  %539 = vmatprep.subr.mxu0 0.0
  %540 = vmatpush2.msra.mxu0 0.0
  %541 = vmatprep.subr.mxu0 0.0
  %542 = vmatpush2.msra.mxu0 0.0
  %543 = vmatprep.mubr.f32.mxu0 0.0
  %544 = vmatmul.mubr.f32.gmra.mxu0 %v477
  %v545 = vpop.f32.mrf.mxu0
  %v546 = vadd.f32 %v144, %v545
  %v547 = vpop.f32.mrf.mxu0
  %548 = vdwg.mxu0
  %v550 = vrot.slane %v546, 2
  %v552 = vadd.f32 %v131, %v550
  %v553 = vxor.u32 %v552, 2147483648
  %v554 = vmul.f32 %v553, 1.442695
  %v555 = vpow.pop %v554
  %v556 = vadd.f32 %v555, 1.0
  %v557 = vrcp.pop %v556
  %v558 = vmul.f32 1.0, %v557
  %559 = vrot.lane.b32.xlu0 %v550, 64
  %v560 = vpop.permute.xlu0 %559
  %v562 = vmul.f32 %v558, %v560
  %564 = vrot.lane.b32.xlu0 %v562, 64
  %v565 = vpop.permute.xlu0 %564
  %v567 = vadd.f32 %v131, %v565
  %v568 = vtanh.pop %v567
  %v569 = vsub.f32 1.0, %v558
  %571 = vrot.lane.b32.xlu0 %v568, 96
  %v572 = vpop.permute.xlu0 %571
  %v574 = vmul.f32 %v569, %v572
  %v575 = vrot.slane %v467, 6
  %v577 = vmul.f32 %v558, %v575
  %v578 = vadd.f32 %v574, %v577
  %580 = vrot.lane.b32.xlu0 %v578, 96
  %v581 = vpop.permute.xlu0 %580
  %vm583 = vcmask 261126
  %584 = vst.msk [vmem:[#allocation2] sm:$0xc0] %vm583, %v581
  %v585 = vrot.slane %v578, 6
  %586 = vrot.lane.b32.xlu0 %v585, 96
  %v587 = vpop.permute.xlu0 %586
  %v588 = vsel %vm146, %v587, 0
  %590 = vmatprep.subr.mxu0 0.0
  %591 = vmatpush1.msra.mxu0 0.0
  %592 = vmatprep.subr.mxu0 0.0
  %593 = vmatpush1.msra.mxu0 0.0
  %594 = vmatprep.subr.mxu0 0.0
  %595 = vmatpush1.msra.mxu0 0.0
  %596 = vmatprep.subr.mxu0 0.0
  %597 = vmatpush1.msra.mxu0 0.0
  %598 = vmatprep.subr.mxu0 0.0
  %599 = vmatpush1.msra.mxu0 0.0
  %600 = vmatprep.subr.mxu0 0.0
  %601 = vmatpush1.msra.mxu0 0.0
  %602 = vmatprep.subr.mxu0 0.0
  %603 = vmatpush1.msra.mxu0 0.0
  %604 = vmatprep.subr.mxu0 0.0
  %605 = vmatpush1.msra.mxu0 0.0
  %606 = vmatprep.subr.mxu0 0.0
  %607 = vmatpush1.msra.mxu0 0.0
  %608 = vmatprep.subr.mxu0 0.0
  %609 = vmatpush1.msra.mxu0 0.0
  %610 = vmatprep.subr.mxu0 0.0
  %611 = vmatpush1.msra.mxu0 0.0
  %612 = vmatprep.subr.mxu0 0.0
  %613 = vmatpush1.msra.mxu0 0.0
  %614 = vmatprep.subr.mxu0 0.0
  %615 = vmatpush1.msra.mxu0 %v48
  %616 = vmatprep.subr.mxu0 0.0
  %617 = vmatpush1.msra.mxu0 %v47
  %618 = vmatprep.subr.mxu0 0.0
  %619 = vmatpush1.msra.mxu0 %v46
  %620 = vmatprep.subr.mxu0 0.0
  %621 = vmatpush1.msra.mxu0 %v45
  %622 = vmatprep.subr.mxu0 0.0
  %623 = vmatpush2.msra.mxu0 0.0
  %624 = vmatprep.subr.mxu0 0.0
  %625 = vmatpush2.msra.mxu0 0.0
  %626 = vmatprep.subr.mxu0 0.0
  %627 = vmatpush2.msra.mxu0 0.0
  %628 = vmatprep.subr.mxu0 0.0
  %629 = vmatpush2.msra.mxu0 0.0
  %630 = vmatprep.subr.mxu0 0.0
  %631 = vmatpush2.msra.mxu0 0.0
  %632 = vmatprep.subr.mxu0 0.0
  %633 = vmatpush2.msra.mxu0 0.0
  %634 = vmatprep.subr.mxu0 0.0
  %635 = vmatpush2.msra.mxu0 0.0
  %636 = vmatprep.subr.mxu0 0.0
  %637 = vmatpush2.msra.mxu0 0.0
  %638 = vmatprep.subr.mxu0 0.0
  %639 = vmatpush2.msra.mxu0 0.0
  %640 = vmatprep.subr.mxu0 0.0
  %641 = vmatpush2.msra.mxu0 0.0
  %642 = vmatprep.subr.mxu0 0.0
  %643 = vmatpush2.msra.mxu0 0.0
  %644 = vmatprep.subr.mxu0 0.0
  %645 = vmatpush2.msra.mxu0 0.0
  %646 = vmatprep.subr.mxu0 0.0
  %647 = vmatpush2.msra.mxu0 0.0
  %648 = vmatprep.subr.mxu0 0.0
  %649 = vmatpush2.msra.mxu0 0.0
  %650 = vmatprep.subr.mxu0 0.0
  %651 = vmatpush2.msra.mxu0 0.0
  %652 = vmatprep.subr.mxu0 0.0
  %653 = vmatpush2.msra.mxu0 0.0
  %654 = vmatprep.mubr.f32.mxu0 0.0
  %655 = vmatmul.mubr.f32.gmra.mxu0 %v588
  %v656 = vpop.f32.mrf.mxu0
  %v657 = vadd.f32 %v144, %v656
  %v658 = vpop.f32.mrf.mxu0
  %659 = vdwg.mxu0
  %v660 = vadd.f32 %v136, %v657
  %v661 = vxor.u32 %v660, 2147483648
  %v662 = vmul.f32 %v661, 1.442695
  %v663 = vpow.pop %v662
  %v664 = vadd.f32 %v663, 1.0
  %v665 = vrcp.pop %v664
  %v666 = vmul.f32 1.0, %v665
  %668 = vrot.lane.b32.xlu0 %v657, 64
  %v669 = vpop.permute.xlu0 %668
  %v671 = vmul.f32 %v666, %v669
  %673 = vrot.lane.b32.xlu0 %v671, 64
  %v674 = vpop.permute.xlu0 %673
  %v676 = vadd.f32 %v136, %v674
  %v677 = vtanh.pop %v676
  %v678 = vsub.f32 1.0, %v666
  %680 = vrot.lane.b32.xlu0 %v677, 96
  %v681 = vpop.permute.xlu0 %680
  %v683 = vmul.f32 %v678, %v681
  %v685 = vmul.f32 %v666, %v585
  %v686 = vadd.f32 %v683, %v685
  %688 = vrot.lane.b32.xlu0 %v686, 96
  %v689 = vpop.permute.xlu0 %688
  %691 = vst.msk [vmem:[#allocation2 + $0x8] sm:$0x3] %vm253, %v689
  %v692 = vsel %vm146, %v689, 0
  %694 = vmatprep.subr.mxu0 0.0
  %695 = vmatpush1.msra.mxu0 0.0
  %696 = vmatprep.subr.mxu0 0.0
  %697 = vmatpush1.msra.mxu0 0.0
  %698 = vmatprep.subr.mxu0 0.0
  %699 = vmatpush1.msra.mxu0 0.0
  %700 = vmatprep.subr.mxu0 0.0
  %701 = vmatpush1.msra.mxu0 0.0
  %702 = vmatprep.subr.mxu0 0.0
  %703 = vmatpush1.msra.mxu0 0.0
  %704 = vmatprep.subr.mxu0 0.0
  %705 = vmatpush1.msra.mxu0 0.0
  %706 = vmatprep.subr.mxu0 0.0
  %707 = vmatpush1.msra.mxu0 0.0
  %708 = vmatprep.subr.mxu0 0.0
  %709 = vmatpush1.msra.mxu0 0.0
  %710 = vmatprep.subr.mxu0 0.0
  %711 = vmatpush1.msra.mxu0 0.0
  %712 = vmatprep.subr.mxu0 0.0
  %713 = vmatpush1.msra.mxu0 0.0
  %714 = vmatprep.subr.mxu0 0.0
  %715 = vmatpush1.msra.mxu0 0.0
  %716 = vmatprep.subr.mxu0 0.0
  %717 = vmatpush1.msra.mxu0 0.0
  %718 = vmatprep.subr.mxu0 0.0
  %719 = vmatpush1.msra.mxu0 %v48
  %720 = vmatprep.subr.mxu0 0.0
  %721 = vmatpush1.msra.mxu0 %v47
  %722 = vmatprep.subr.mxu0 0.0
  %723 = vmatpush1.msra.mxu0 %v46
  %724 = vmatprep.subr.mxu0 0.0
  %725 = vmatpush1.msra.mxu0 %v45
  %726 = vmatprep.subr.mxu0 0.0
  %727 = vmatpush2.msra.mxu0 0.0
  %728 = vmatprep.subr.mxu0 0.0
  %729 = vmatpush2.msra.mxu0 0.0
  %730 = vmatprep.subr.mxu0 0.0
  %731 = vmatpush2.msra.mxu0 0.0
  %732 = vmatprep.subr.mxu0 0.0
  %733 = vmatpush2.msra.mxu0 0.0
  %734 = vmatprep.subr.mxu0 0.0
  %735 = vmatpush2.msra.mxu0 0.0
  %736 = vmatprep.subr.mxu0 0.0
  %737 = vmatpush2.msra.mxu0 0.0
  %738 = vmatprep.subr.mxu0 0.0
  %739 = vmatpush2.msra.mxu0 0.0
  %740 = vmatprep.subr.mxu0 0.0
  %741 = vmatpush2.msra.mxu0 0.0
  %742 = vmatprep.subr.mxu0 0.0
  %743 = vmatpush2.msra.mxu0 0.0
  %744 = vmatprep.subr.mxu0 0.0
  %745 = vmatpush2.msra.mxu0 0.0
  %746 = vmatprep.subr.mxu0 0.0
  %747 = vmatpush2.msra.mxu0 0.0
  %748 = vmatprep.subr.mxu0 0.0
  %749 = vmatpush2.msra.mxu0 0.0
  %750 = vmatprep.subr.mxu0 0.0
  %751 = vmatpush2.msra.mxu0 0.0
  %752 = vmatprep.subr.mxu0 0.0
  %753 = vmatpush2.msra.mxu0 0.0
  %754 = vmatprep.subr.mxu0 0.0
  %755 = vmatpush2.msra.mxu0 0.0
  %756 = vmatprep.subr.mxu0 0.0
  %757 = vmatpush2.msra.mxu0 0.0
  %758 = vmatprep.mubr.f32.mxu0 0.0
  %759 = vmatmul.mubr.f32.gmra.mxu0 %v692
  %v760 = vpop.f32.mrf.mxu0
  %v761 = vadd.f32 %v144, %v760
  %v762 = vpop.f32.mrf.mxu0
  %763 = vdwg.mxu0
  %v765 = vrot.slane %v761, 6
  %v767 = vadd.f32 %v136, %v765
  %v768 = vxor.u32 %v767, 2147483648
  %v769 = vmul.f32 %v768, 1.442695
  %v770 = vpow.pop %v769
  %v771 = vadd.f32 %v770, 1.0
  %v772 = vrcp.pop %v771
  %v773 = vmul.f32 1.0, %v772
  %774 = vrot.lane.b32.xlu0 %v765, 64
  %v775 = vpop.permute.xlu0 %774
  %v777 = vmul.f32 %v773, %v775
  %779 = vrot.lane.b32.xlu0 %v777, 64
  %v780 = vpop.permute.xlu0 %779
  %v782 = vadd.f32 %v136, %v780
  %v783 = vtanh.pop %v782
  %v784 = vsub.f32 1.0, %v773
  %786 = vrot.lane.b32.xlu0 %v783, 96
  %v787 = vpop.permute.xlu0 %786
  %v789 = vmul.f32 %v784, %v787
  %v790 = vrot.slane %v686, 6
  %v792 = vmul.f32 %v773, %v790
  %v793 = vadd.f32 %v789, %v792
  %795 = vrot.lane.b32.xlu0 %v793, 96
  %v796 = vpop.permute.xlu0 %795
  %798 = vst.msk [vmem:[#allocation2 + $0x8] sm:$0xc] %vm361, %v796
  %v799 = vrot.slane %v793, 2
  %800 = vrot.lane.b32.xlu0 %v799, 96
  %v801 = vpop.permute.xlu0 %800
  %v802 = vsel %vm146, %v801, 0
  %804 = vmatprep.subr.mxu0 0.0
  %805 = vmatpush1.msra.mxu0 0.0
  %806 = vmatprep.subr.mxu0 0.0
  %807 = vmatpush1.msra.mxu0 0.0
  %808 = vmatprep.subr.mxu0 0.0
  %809 = vmatpush1.msra.mxu0 0.0
  %810 = vmatprep.subr.mxu0 0.0
  %811 = vmatpush1.msra.mxu0 0.0
  %812 = vmatprep.subr.mxu0 0.0
  %813 = vmatpush1.msra.mxu0 0.0
  %814 = vmatprep.subr.mxu0 0.0
  %815 = vmatpush1.msra.mxu0 0.0
  %816 = vmatprep.subr.mxu0 0.0
  %817 = vmatpush1.msra.mxu0 0.0
  %818 = vmatprep.subr.mxu0 0.0
  %819 = vmatpush1.msra.mxu0 0.0
  %820 = vmatprep.subr.mxu0 0.0
  %821 = vmatpush1.msra.mxu0 0.0
  %822 = vmatprep.subr.mxu0 0.0
  %823 = vmatpush1.msra.mxu0 0.0
  %824 = vmatprep.subr.mxu0 0.0
  %825 = vmatpush1.msra.mxu0 0.0
  %826 = vmatprep.subr.mxu0 0.0
  %827 = vmatpush1.msra.mxu0 0.0
  %828 = vmatprep.subr.mxu0 0.0
  %829 = vmatpush1.msra.mxu0 %v48
  %830 = vmatprep.subr.mxu0 0.0
  %831 = vmatpush1.msra.mxu0 %v47
  %832 = vmatprep.subr.mxu0 0.0
  %833 = vmatpush1.msra.mxu0 %v46
  %834 = vmatprep.subr.mxu0 0.0
  %835 = vmatpush1.msra.mxu0 %v45
  %836 = vmatprep.subr.mxu0 0.0
  %837 = vmatpush2.msra.mxu0 0.0
  %838 = vmatprep.subr.mxu0 0.0
  %839 = vmatpush2.msra.mxu0 0.0
  %840 = vmatprep.subr.mxu0 0.0
  %841 = vmatpush2.msra.mxu0 0.0
  %842 = vmatprep.subr.mxu0 0.0
  %843 = vmatpush2.msra.mxu0 0.0
  %844 = vmatprep.subr.mxu0 0.0
  %845 = vmatpush2.msra.mxu0 0.0
  %846 = vmatprep.subr.mxu0 0.0
  %847 = vmatpush2.msra.mxu0 0.0
  %848 = vmatprep.subr.mxu0 0.0
  %849 = vmatpush2.msra.mxu0 0.0
  %850 = vmatprep.subr.mxu0 0.0
  %851 = vmatpush2.msra.mxu0 0.0
  %852 = vmatprep.subr.mxu0 0.0
  %853 = vmatpush2.msra.mxu0 0.0
  %854 = vmatprep.subr.mxu0 0.0
  %855 = vmatpush2.msra.mxu0 0.0
  %856 = vmatprep.subr.mxu0 0.0
  %857 = vmatpush2.msra.mxu0 0.0
  %858 = vmatprep.subr.mxu0 0.0
  %859 = vmatpush2.msra.mxu0 0.0
  %860 = vmatprep.subr.mxu0 0.0
  %861 = vmatpush2.msra.mxu0 0.0
  %862 = vmatprep.subr.mxu0 0.0
  %863 = vmatpush2.msra.mxu0 0.0
  %864 = vmatprep.subr.mxu0 0.0
  %865 = vmatpush2.msra.mxu0 0.0
  %866 = vmatprep.subr.mxu0 0.0
  %867 = vmatpush2.msra.mxu0 0.0
  %868 = vmatprep.mubr.f32.mxu0 0.0
  %869 = vmatmul.mubr.f32.gmra.mxu0 %v802
  %v870 = vpop.f32.mrf.mxu0
  %v871 = vadd.f32 %v144, %v870
  %v872 = vpop.f32.mrf.mxu0
  %873 = vdwg.mxu0
  %v875 = vrot.slane %v871, 4
  %v877 = vadd.f32 %v136, %v875
  %v878 = vxor.u32 %v877, 2147483648
  %v879 = vmul.f32 %v878, 1.442695
  %v880 = vpow.pop %v879
  %v881 = vadd.f32 %v880, 1.0
  %v882 = vrcp.pop %v881
  %v883 = vmul.f32 1.0, %v882
  %884 = vrot.lane.b32.xlu0 %v875, 64
  %v885 = vpop.permute.xlu0 %884
  %v887 = vmul.f32 %v883, %v885
  %889 = vrot.lane.b32.xlu0 %v887, 64
  %v890 = vpop.permute.xlu0 %889
  %v892 = vadd.f32 %v136, %v890
  %v893 = vtanh.pop %v892
  %v894 = vsub.f32 1.0, %v883
  %896 = vrot.lane.b32.xlu0 %v893, 96
  %v897 = vpop.permute.xlu0 %896
  %v899 = vmul.f32 %v894, %v897
  %v900 = vrot.slane %v793, 6
  %v902 = vmul.f32 %v883, %v900
  %v903 = vadd.f32 %v899, %v902
  %905 = vrot.lane.b32.xlu0 %v903, 96
  %v906 = vpop.permute.xlu0 %905
  %908 = vst.msk [vmem:[#allocation2 + $0x8] sm:$0x30] %vm472, %v906
  %v909 = vrot.slane %v903, 4
  %910 = vrot.lane.b32.xlu0 %v909, 96
  %v911 = vpop.permute.xlu0 %910
  %v912 = vsel %vm146, %v911, 0
  %914 = vmatprep.subr.mxu0 0.0
  %915 = vmatpush1.msra.mxu0 0.0
  %916 = vmatprep.subr.mxu0 0.0
  %917 = vmatpush1.msra.mxu0 0.0
  %918 = vmatprep.subr.mxu0 0.0
  %919 = vmatpush1.msra.mxu0 0.0
  %920 = vmatprep.subr.mxu0 0.0
  %921 = vmatpush1.msra.mxu0 0.0
  %922 = vmatprep.subr.mxu0 0.0
  %923 = vmatpush1.msra.mxu0 0.0
  %924 = vmatprep.subr.mxu0 0.0
  %925 = vmatpush1.msra.mxu0 0.0
  %926 = vmatprep.subr.mxu0 0.0
  %927 = vmatpush1.msra.mxu0 0.0
  %928 = vmatprep.subr.mxu0 0.0
  %929 = vmatpush1.msra.mxu0 0.0
  %930 = vmatprep.subr.mxu0 0.0
  %931 = vmatpush1.msra.mxu0 0.0
  %932 = vmatprep.subr.mxu0 0.0
  %933 = vmatpush1.msra.mxu0 0.0
  %934 = vmatprep.subr.mxu0 0.0
  %935 = vmatpush1.msra.mxu0 0.0
  %936 = vmatprep.subr.mxu0 0.0
  %937 = vmatpush1.msra.mxu0 0.0
  %938 = vmatprep.subr.mxu0 0.0
  %939 = vmatpush1.msra.mxu0 %v48
  %940 = vmatprep.subr.mxu0 0.0
  %941 = vmatpush1.msra.mxu0 %v47
  %942 = vmatprep.subr.mxu0 0.0
  %943 = vmatpush1.msra.mxu0 %v46
  %944 = vmatprep.subr.mxu0 0.0
  %945 = vmatpush1.msra.mxu0 %v45
  %946 = vmatprep.subr.mxu0 0.0
  %947 = vmatpush2.msra.mxu0 0.0
  %948 = vmatprep.subr.mxu0 0.0
  %949 = vmatpush2.msra.mxu0 0.0
  %950 = vmatprep.subr.mxu0 0.0
  %951 = vmatpush2.msra.mxu0 0.0
  %952 = vmatprep.subr.mxu0 0.0
  %953 = vmatpush2.msra.mxu0 0.0
  %954 = vmatprep.subr.mxu0 0.0
  %955 = vmatpush2.msra.mxu0 0.0
  %956 = vmatprep.subr.mxu0 0.0
  %957 = vmatpush2.msra.mxu0 0.0
  %958 = vmatprep.subr.mxu0 0.0
  %959 = vmatpush2.msra.mxu0 0.0
  %960 = vmatprep.subr.mxu0 0.0
  %961 = vmatpush2.msra.mxu0 0.0
  %962 = vmatprep.subr.mxu0 0.0
  %963 = vmatpush2.msra.mxu0 0.0
  %964 = vmatprep.subr.mxu0 0.0
  %965 = vmatpush2.msra.mxu0 0.0
  %966 = vmatprep.subr.mxu0 0.0
  %967 = vmatpush2.msra.mxu0 0.0
  %968 = vmatprep.subr.mxu0 0.0
  %969 = vmatpush2.msra.mxu0 0.0
  %970 = vmatprep.subr.mxu0 0.0
  %971 = vmatpush2.msra.mxu0 0.0
  %972 = vmatprep.subr.mxu0 0.0
  %973 = vmatpush2.msra.mxu0 0.0
  %974 = vmatprep.subr.mxu0 0.0
  %975 = vmatpush2.msra.mxu0 0.0
  %976 = vmatprep.subr.mxu0 0.0
  %977 = vmatpush2.msra.mxu0 0.0
  %978 = vmatprep.mubr.f32.mxu0 0.0
  %979 = vmatmul.mubr.f32.gmra.mxu0 %v912
  %v980 = vpop.f32.mrf.mxu0
  %v981 = vadd.f32 %v144, %v980
  %v982 = vpop.f32.mrf.mxu0
  %983 = vdwg.mxu0
  %v985 = vrot.slane %v981, 2
  %v987 = vadd.f32 %v136, %v985
  %v988 = vxor.u32 %v987, 2147483648
  %v989 = vmul.f32 %v988, 1.442695
  %v990 = vpow.pop %v989
  %v991 = vadd.f32 %v990, 1.0
  %v992 = vrcp.pop %v991
  %v993 = vmul.f32 1.0, %v992
  %994 = vrot.lane.b32.xlu0 %v985, 64
  %v995 = vpop.permute.xlu0 %994
  %v997 = vmul.f32 %v993, %v995
  %999 = vrot.lane.b32.xlu0 %v997, 64
  %v1000 = vpop.permute.xlu0 %999
  %v1002 = vadd.f32 %v136, %v1000
  %v1003 = vtanh.pop %v1002
  %v1004 = vsub.f32 1.0, %v993
  %1006 = vrot.lane.b32.xlu0 %v1003, 96
  %v1007 = vpop.permute.xlu0 %1006
  %v1009 = vmul.f32 %v1004, %v1007
  %v1010 = vrot.slane %v903, 6
  %v1012 = vmul.f32 %v993, %v1010
  %v1013 = vadd.f32 %v1009, %v1012
  %1015 = vrot.lane.b32.xlu0 %v1013, 96
  %v1016 = vpop.permute.xlu0 %1015
  %1018 = vst.msk [vmem:[#allocation2 + $0x8] sm:$0xc0] %vm583, %v1016
  %v1019 = vld [vmem:[#allocation2] sm:$0xff]
  %v1020 = vld [vmem:[#allocation2 + $0x8] sm:$0xff]
  %v1021 = vld [vmem:[%s6] sm:$0xff]
  %v1022 = vld [vmem:[%s6 + $0x8] sm:$0xff]
  %v1023 = vld [vmem:[%s6 + $0x10] sm:$0xff]
  %v1024 = vld [vmem:[%s6 + $0x18] sm:$0xff]
  %v1025 = vld [vmem:[%s7] sm:$0xff]
  %v1026 = vld [vmem:[%s7 + $0x8] sm:$0xff]
  %v1027 = vld [vmem:[%s7 + $0x10] sm:$0xff]
  %v1028 = vld [vmem:[%s7 + $0x18] sm:$0xff]
  %v1029 = vld [vmem:[%s8] sm:$0x1]
  %v1030 = vld [vmem:[%s9] sm:$0x1]
  %v1032 = vlaneseq
  %v1033 = vshrl.u32 %v1032, 7
  %v1034 = vsub.s32 0, %v1033
  %v1035 = vrot.slane %v1029, %v1034
  %v1038 = vsel %vm146, %v1019, 0
  %v1041 = vsel %vm146, %v1020, 0
  %1043 = vmatprep.subr.mxu0 0.0
  %1044 = vmatpush1.msra.mxu0 0.0
  %1045 = vmatprep.subr.mxu0 0.0
  %1046 = vmatpush1.msra.mxu0 0.0
  %1047 = vmatprep.subr.mxu0 0.0
  %1048 = vmatpush1.msra.mxu0 0.0
  %1049 = vmatprep.subr.mxu0 0.0
  %1050 = vmatpush1.msra.mxu0 0.0
  %1051 = vmatprep.subr.mxu0 0.0
  %1052 = vmatpush1.msra.mxu0 0.0
  %1053 = vmatprep.subr.mxu0 0.0
  %1054 = vmatpush1.msra.mxu0 0.0
  %1055 = vmatprep.subr.mxu0 0.0
  %1056 = vmatpush1.msra.mxu0 0.0
  %1057 = vmatprep.subr.mxu0 0.0
  %1058 = vmatpush1.msra.mxu0 0.0
  %1059 = vmatprep.subr.mxu0 0.0
  %1060 = vmatpush1.msra.mxu0 0.0
  %1061 = vmatprep.subr.mxu0 0.0
  %1062 = vmatpush1.msra.mxu0 0.0
  %1063 = vmatprep.subr.mxu0 0.0
  %1064 = vmatpush1.msra.mxu0 0.0
  %1065 = vmatprep.subr.mxu0 0.0
  %1066 = vmatpush1.msra.mxu0 0.0
  %1067 = vmatprep.subr.mxu0 0.0
  %1068 = vmatpush1.msra.mxu0 %v1024
  %1069 = vmatprep.subr.mxu0 0.0
  %1070 = vmatpush1.msra.mxu0 %v1023
  %1071 = vmatprep.subr.mxu0 0.0
  %1072 = vmatpush1.msra.mxu0 %v1022
  %1073 = vmatprep.subr.mxu0 0.0
  %1074 = vmatpush1.msra.mxu0 %v1021
  %1075 = vmatprep.subr.mxu0 0.0
  %1076 = vmatpush2.msra.mxu0 0.0
  %1077 = vmatprep.subr.mxu0 0.0
  %1078 = vmatpush2.msra.mxu0 0.0
  %1079 = vmatprep.subr.mxu0 0.0
  %1080 = vmatpush2.msra.mxu0 0.0
  %1081 = vmatprep.subr.mxu0 0.0
  %1082 = vmatpush2.msra.mxu0 0.0
  %1083 = vmatprep.subr.mxu0 0.0
  %1084 = vmatpush2.msra.mxu0 0.0
  %1085 = vmatprep.subr.mxu0 0.0
  %1086 = vmatpush2.msra.mxu0 0.0
  %1087 = vmatprep.subr.mxu0 0.0
  %1088 = vmatpush2.msra.mxu0 0.0
  %1089 = vmatprep.subr.mxu0 0.0
  %1090 = vmatpush2.msra.mxu0 0.0
  %1091 = vmatprep.subr.mxu0 0.0
  %1092 = vmatpush2.msra.mxu0 0.0
  %1093 = vmatprep.subr.mxu0 0.0
  %1094 = vmatpush2.msra.mxu0 0.0
  %1095 = vmatprep.subr.mxu0 0.0
  %1096 = vmatpush2.msra.mxu0 0.0
  %1097 = vmatprep.subr.mxu0 0.0
  %1098 = vmatpush2.msra.mxu0 0.0
  %1099 = vmatprep.subr.mxu0 0.0
  %1100 = vmatpush2.msra.mxu0 0.0
  %1101 = vmatprep.subr.mxu0 0.0
  %1102 = vmatpush2.msra.mxu0 0.0
  %1103 = vmatprep.subr.mxu0 0.0
  %1104 = vmatpush2.msra.mxu0 0.0
  %1105 = vmatprep.subr.mxu0 0.0
  %1106 = vmatpush2.msra.mxu0 0.0
  %1107 = vmatprep.mubr.f32.mxu0 0.0
  %1108 = vmatmul.mubr.f32.gmra.mxu0 %v1038
  %v1109 = vpop.f32.mrf.mxu0
  %v1110 = vadd.f32 %v1035, %v1109
  %v1111 = vpop.f32.mrf.mxu0
  %1112 = vmatprep.mubr.f32.mxu0 0.0
  %1113 = vmatmul.mubr.f32.gmra.mxu0 %v1041
  %v1114 = vpop.f32.mrf.mxu0
  %v1115 = vadd.f32 %v1035, %v1114
  %v1116 = vpop.f32.mrf.mxu0
  %1117 = vdwg.mxu0
  %s1118 = scalar_lea.vmem %s1, 2
  %v1119 = vld [vmem:[%s1118] sm:$0x3]
  %v1121 = vlaneseq
  %v1122 = vshrl.u32 %v1121, 7
  %v1123 = vsub.s32 0, %v1122
  %v1124 = vrot.slane %v1030, %v1123
  %v1127 = vsel %vm146, %v1119, 0
  %1129 = vmatprep.subr.mxu0 0.0
  %1130 = vmatpush1.msra.mxu0 0.0
  %1131 = vmatprep.subr.mxu0 0.0
  %1132 = vmatpush1.msra.mxu0 0.0
  %1133 = vmatprep.subr.mxu0 0.0
  %1134 = vmatpush1.msra.mxu0 0.0
  %1135 = vmatprep.subr.mxu0 0.0
  %1136 = vmatpush1.msra.mxu0 0.0
  %1137 = vmatprep.subr.mxu0 0.0
  %1138 = vmatpush1.msra.mxu0 0.0
  %1139 = vmatprep.subr.mxu0 0.0
  %1140 = vmatpush1.msra.mxu0 0.0
  %1141 = vmatprep.subr.mxu0 0.0
  %1142 = vmatpush1.msra.mxu0 0.0
  %1143 = vmatprep.subr.mxu0 0.0
  %1144 = vmatpush1.msra.mxu0 0.0
  %1145 = vmatprep.subr.mxu0 0.0
  %1146 = vmatpush1.msra.mxu0 0.0
  %1147 = vmatprep.subr.mxu0 0.0
  %1148 = vmatpush1.msra.mxu0 0.0
  %1149 = vmatprep.subr.mxu0 0.0
  %1150 = vmatpush1.msra.mxu0 0.0
  %1151 = vmatprep.subr.mxu0 0.0
  %1152 = vmatpush1.msra.mxu0 0.0
  %1153 = vmatprep.subr.mxu0 0.0
  %1154 = vmatpush1.msra.mxu0 %v1028
  %1155 = vmatprep.subr.mxu0 0.0
  %1156 = vmatpush1.msra.mxu0 %v1027
  %1157 = vmatprep.subr.mxu0 0.0
  %1158 = vmatpush1.msra.mxu0 %v1026
  %1159 = vmatprep.subr.mxu0 0.0
  %1160 = vmatpush1.msra.mxu0 %v1025
  %1161 = vmatprep.subr.mxu0 0.0
  %1162 = vmatpush2.msra.mxu0 0.0
  %1163 = vmatprep.subr.mxu0 0.0
  %1164 = vmatpush2.msra.mxu0 0.0
  %1165 = vmatprep.subr.mxu0 0.0
  %1166 = vmatpush2.msra.mxu0 0.0
  %1167 = vmatprep.subr.mxu0 0.0
  %1168 = vmatpush2.msra.mxu0 0.0
  %1169 = vmatprep.subr.mxu0 0.0
  %1170 = vmatpush2.msra.mxu0 0.0
  %1171 = vmatprep.subr.mxu0 0.0
  %1172 = vmatpush2.msra.mxu0 0.0
  %1173 = vmatprep.subr.mxu0 0.0
  %1174 = vmatpush2.msra.mxu0 0.0
  %1175 = vmatprep.subr.mxu0 0.0
  %1176 = vmatpush2.msra.mxu0 0.0
  %1177 = vmatprep.subr.mxu0 0.0
  %1178 = vmatpush2.msra.mxu0 0.0
  %1179 = vmatprep.subr.mxu0 0.0
  %1180 = vmatpush2.msra.mxu0 0.0
  %1181 = vmatprep.subr.mxu0 0.0
  %1182 = vmatpush2.msra.mxu0 0.0
  %1183 = vmatprep.subr.mxu0 0.0
  %1184 = vmatpush2.msra.mxu0 0.0
  %1185 = vmatprep.subr.mxu0 0.0
  %1186 = vmatpush2.msra.mxu0 0.0
  %1187 = vmatprep.subr.mxu0 0.0
  %1188 = vmatpush2.msra.mxu0 0.0
  %1189 = vmatprep.subr.mxu0 0.0
  %1190 = vmatpush2.msra.mxu0 0.0
  %1191 = vmatprep.subr.mxu0 0.0
  %1192 = vmatpush2.msra.mxu0 0.0
  %1193 = vmatprep.mubr.f32.mxu0 0.0
  %1194 = vmatmul.mubr.f32.gmra.mxu0 %v1127
  %v1195 = vpop.f32.mrf.mxu0
  %v1196 = vadd.f32 %v1124, %v1195
  %v1197 = vpop.f32.mrf.mxu0
  %1198 = vdwg.mxu0
  %v1199 = vadd.f32 %v1110, %v1196
  %v1200 = vxor.u32 %v1199, 2147483648
  %v1201 = vmul.f32 %v1200, 1.442695
  %v1202 = vpow.pop %v1201
  %v1203 = vadd.f32 %v1202, 1.0
  %v1204 = vrcp.pop %v1203
  %v1205 = vmul.f32 1.0, %v1204
  %1207 = vrot.lane.b32.xlu0 %v1196, 64
  %v1208 = vpop.permute.xlu0 %1207
  %v1210 = vmul.f32 %v1205, %v1208
  %1212 = vrot.lane.b32.xlu0 %v1210, 64
  %v1213 = vpop.permute.xlu0 %1212
  %v1215 = vadd.f32 %v1110, %v1213
  %v1216 = vtanh.pop %v1215
  %v1217 = vsub.f32 1.0, %v1205
  %1219 = vrot.lane.b32.xlu0 %v1216, 96
  %v1220 = vpop.permute.xlu0 %1219
  %v1222 = vmul.f32 %v1217, %v1220
  %1223 = vrot.lane.b32.xlu0 %v1119, 32
  %v1224 = vpop.permute.xlu0 %1223
  %v1226 = vmul.f32 %v1205, %v1224
  %v1227 = vadd.f32 %v1222, %v1226
  %1229 = vrot.lane.b32.xlu0 %v1227, 96
  %v1230 = vpop.permute.xlu0 %1229
  %1232 = vst.msk [vmem:[#allocation2] sm:$0x3] %vm253, %v1230
  %v1233 = vsel %vm146, %v1230, 0
  %1235 = vmatprep.subr.mxu0 0.0
  %1236 = vmatpush1.msra.mxu0 0.0
  %1237 = vmatprep.subr.mxu0 0.0
  %1238 = vmatpush1.msra.mxu0 0.0
  %1239 = vmatprep.subr.mxu0 0.0
  %1240 = vmatpush1.msra.mxu0 0.0
  %1241 = vmatprep.subr.mxu0 0.0
  %1242 = vmatpush1.msra.mxu0 0.0
  %1243 = vmatprep.subr.mxu0 0.0
  %1244 = vmatpush1.msra.mxu0 0.0
  %1245 = vmatprep.subr.mxu0 0.0
  %1246 = vmatpush1.msra.mxu0 0.0
  %1247 = vmatprep.subr.mxu0 0.0
  %1248 = vmatpush1.msra.mxu0 0.0
  %1249 = vmatprep.subr.mxu0 0.0
  %1250 = vmatpush1.msra.mxu0 0.0
  %1251 = vmatprep.subr.mxu0 0.0
  %1252 = vmatpush1.msra.mxu0 0.0
  %1253 = vmatprep.subr.mxu0 0.0
  %1254 = vmatpush1.msra.mxu0 0.0
  %1255 = vmatprep.subr.mxu0 0.0
  %1256 = vmatpush1.msra.mxu0 0.0
  %1257 = vmatprep.subr.mxu0 0.0
  %1258 = vmatpush1.msra.mxu0 0.0
  %1259 = vmatprep.subr.mxu0 0.0
  %1260 = vmatpush1.msra.mxu0 %v1028
  %1261 = vmatprep.subr.mxu0 0.0
  %1262 = vmatpush1.msra.mxu0 %v1027
  %1263 = vmatprep.subr.mxu0 0.0
  %1264 = vmatpush1.msra.mxu0 %v1026
  %1265 = vmatprep.subr.mxu0 0.0
  %1266 = vmatpush1.msra.mxu0 %v1025
  %1267 = vmatprep.subr.mxu0 0.0
  %1268 = vmatpush2.msra.mxu0 0.0
  %1269 = vmatprep.subr.mxu0 0.0
  %1270 = vmatpush2.msra.mxu0 0.0
  %1271 = vmatprep.subr.mxu0 0.0
  %1272 = vmatpush2.msra.mxu0 0.0
  %1273 = vmatprep.subr.mxu0 0.0
  %1274 = vmatpush2.msra.mxu0 0.0
  %1275 = vmatprep.subr.mxu0 0.0
  %1276 = vmatpush2.msra.mxu0 0.0
  %1277 = vmatprep.subr.mxu0 0.0
  %1278 = vmatpush2.msra.mxu0 0.0
  %1279 = vmatprep.subr.mxu0 0.0
  %1280 = vmatpush2.msra.mxu0 0.0
  %1281 = vmatprep.subr.mxu0 0.0
  %1282 = vmatpush2.msra.mxu0 0.0
  %1283 = vmatprep.subr.mxu0 0.0
  %1284 = vmatpush2.msra.mxu0 0.0
  %1285 = vmatprep.subr.mxu0 0.0
  %1286 = vmatpush2.msra.mxu0 0.0
  %1287 = vmatprep.subr.mxu0 0.0
  %1288 = vmatpush2.msra.mxu0 0.0
  %1289 = vmatprep.subr.mxu0 0.0
  %1290 = vmatpush2.msra.mxu0 0.0
  %1291 = vmatprep.subr.mxu0 0.0
  %1292 = vmatpush2.msra.mxu0 0.0
  %1293 = vmatprep.subr.mxu0 0.0
  %1294 = vmatpush2.msra.mxu0 0.0
  %1295 = vmatprep.subr.mxu0 0.0
  %1296 = vmatpush2.msra.mxu0 0.0
  %1297 = vmatprep.subr.mxu0 0.0
  %1298 = vmatpush2.msra.mxu0 0.0
  %1299 = vmatprep.mubr.f32.mxu0 0.0
  %1300 = vmatmul.mubr.f32.gmra.mxu0 %v1233
  %v1301 = vpop.f32.mrf.mxu0
  %v1302 = vadd.f32 %v1124, %v1301
  %v1303 = vpop.f32.mrf.mxu0
  %1304 = vdwg.mxu0
  %v1306 = vrot.slane %v1302, 6
  %v1308 = vadd.f32 %v1110, %v1306
  %v1309 = vxor.u32 %v1308, 2147483648
  %v1310 = vmul.f32 %v1309, 1.442695
  %v1311 = vpow.pop %v1310
  %v1312 = vadd.f32 %v1311, 1.0
  %v1313 = vrcp.pop %v1312
  %v1314 = vmul.f32 1.0, %v1313
  %1315 = vrot.lane.b32.xlu0 %v1306, 64
  %v1316 = vpop.permute.xlu0 %1315
  %v1318 = vmul.f32 %v1314, %v1316
  %1320 = vrot.lane.b32.xlu0 %v1318, 64
  %v1321 = vpop.permute.xlu0 %1320
  %v1323 = vadd.f32 %v1110, %v1321
  %v1324 = vtanh.pop %v1323
  %v1325 = vsub.f32 1.0, %v1314
  %1327 = vrot.lane.b32.xlu0 %v1324, 96
  %v1328 = vpop.permute.xlu0 %1327
  %v1330 = vmul.f32 %v1325, %v1328
  %v1331 = vrot.slane %v1227, 6
  %v1333 = vmul.f32 %v1314, %v1331
  %v1334 = vadd.f32 %v1330, %v1333
  %1336 = vrot.lane.b32.xlu0 %v1334, 96
  %v1337 = vpop.permute.xlu0 %1336
  %1339 = vst.msk [vmem:[#allocation2] sm:$0xc] %vm361, %v1337
  %v1340 = vrot.slane %v1334, 2
  %1341 = vrot.lane.b32.xlu0 %v1340, 96
  %v1342 = vpop.permute.xlu0 %1341
  %v1343 = vsel %vm146, %v1342, 0
  %1345 = vmatprep.subr.mxu0 0.0
  %1346 = vmatpush1.msra.mxu0 0.0
  %1347 = vmatprep.subr.mxu0 0.0
  %1348 = vmatpush1.msra.mxu0 0.0
  %1349 = vmatprep.subr.mxu0 0.0
  %1350 = vmatpush1.msra.mxu0 0.0
  %1351 = vmatprep.subr.mxu0 0.0
  %1352 = vmatpush1.msra.mxu0 0.0
  %1353 = vmatprep.subr.mxu0 0.0
  %1354 = vmatpush1.msra.mxu0 0.0
  %1355 = vmatprep.subr.mxu0 0.0
  %1356 = vmatpush1.msra.mxu0 0.0
  %1357 = vmatprep.subr.mxu0 0.0
  %1358 = vmatpush1.msra.mxu0 0.0
  %1359 = vmatprep.subr.mxu0 0.0
  %1360 = vmatpush1.msra.mxu0 0.0
  %1361 = vmatprep.subr.mxu0 0.0
  %1362 = vmatpush1.msra.mxu0 0.0
  %1363 = vmatprep.subr.mxu0 0.0
  %1364 = vmatpush1.msra.mxu0 0.0
  %1365 = vmatprep.subr.mxu0 0.0
  %1366 = vmatpush1.msra.mxu0 0.0
  %1367 = vmatprep.subr.mxu0 0.0
  %1368 = vmatpush1.msra.mxu0 0.0
  %1369 = vmatprep.subr.mxu0 0.0
  %1370 = vmatpush1.msra.mxu0 %v1028
  %1371 = vmatprep.subr.mxu0 0.0
  %1372 = vmatpush1.msra.mxu0 %v1027
  %1373 = vmatprep.subr.mxu0 0.0
  %1374 = vmatpush1.msra.mxu0 %v1026
  %1375 = vmatprep.subr.mxu0 0.0
  %1376 = vmatpush1.msra.mxu0 %v1025
  %1377 = vmatprep.subr.mxu0 0.0
  %1378 = vmatpush2.msra.mxu0 0.0
  %1379 = vmatprep.subr.mxu0 0.0
  %1380 = vmatpush2.msra.mxu0 0.0
  %1381 = vmatprep.subr.mxu0 0.0
  %1382 = vmatpush2.msra.mxu0 0.0
  %1383 = vmatprep.subr.mxu0 0.0
  %1384 = vmatpush2.msra.mxu0 0.0
  %1385 = vmatprep.subr.mxu0 0.0
  %1386 = vmatpush2.msra.mxu0 0.0
  %1387 = vmatprep.subr.mxu0 0.0
  %1388 = vmatpush2.msra.mxu0 0.0
  %1389 = vmatprep.subr.mxu0 0.0
  %1390 = vmatpush2.msra.mxu0 0.0
  %1391 = vmatprep.subr.mxu0 0.0
  %1392 = vmatpush2.msra.mxu0 0.0
  %1393 = vmatprep.subr.mxu0 0.0
  %1394 = vmatpush2.msra.mxu0 0.0
  %1395 = vmatprep.subr.mxu0 0.0
  %1396 = vmatpush2.msra.mxu0 0.0
  %1397 = vmatprep.subr.mxu0 0.0
  %1398 = vmatpush2.msra.mxu0 0.0
  %1399 = vmatprep.subr.mxu0 0.0
  %1400 = vmatpush2.msra.mxu0 0.0
  %1401 = vmatprep.subr.mxu0 0.0
  %1402 = vmatpush2.msra.mxu0 0.0
  %1403 = vmatprep.subr.mxu0 0.0
  %1404 = vmatpush2.msra.mxu0 0.0
  %1405 = vmatprep.subr.mxu0 0.0
  %1406 = vmatpush2.msra.mxu0 0.0
  %1407 = vmatprep.subr.mxu0 0.0
  %1408 = vmatpush2.msra.mxu0 0.0
  %1409 = vmatprep.mubr.f32.mxu0 0.0
  %1410 = vmatmul.mubr.f32.gmra.mxu0 %v1343
  %v1411 = vpop.f32.mrf.mxu0
  %v1412 = vadd.f32 %v1124, %v1411
  %v1413 = vpop.f32.mrf.mxu0
  %1414 = vdwg.mxu0
  %v1416 = vrot.slane %v1412, 4
  %v1418 = vadd.f32 %v1110, %v1416
  %v1419 = vxor.u32 %v1418, 2147483648
  %v1420 = vmul.f32 %v1419, 1.442695
  %v1421 = vpow.pop %v1420
  %v1422 = vadd.f32 %v1421, 1.0
  %v1423 = vrcp.pop %v1422
  %v1424 = vmul.f32 1.0, %v1423
  %1425 = vrot.lane.b32.xlu0 %v1416, 64
  %v1426 = vpop.permute.xlu0 %1425
  %v1428 = vmul.f32 %v1424, %v1426
  %1430 = vrot.lane.b32.xlu0 %v1428, 64
  %v1431 = vpop.permute.xlu0 %1430
  %v1433 = vadd.f32 %v1110, %v1431
  %v1434 = vtanh.pop %v1433
  %v1435 = vsub.f32 1.0, %v1424
  %1437 = vrot.lane.b32.xlu0 %v1434, 96
  %v1438 = vpop.permute.xlu0 %1437
  %v1440 = vmul.f32 %v1435, %v1438
  %v1441 = vrot.slane %v1334, 6
  %v1443 = vmul.f32 %v1424, %v1441
  %v1444 = vadd.f32 %v1440, %v1443
  %1446 = vrot.lane.b32.xlu0 %v1444, 96
  %v1447 = vpop.permute.xlu0 %1446
  %1449 = vst.msk [vmem:[#allocation2] sm:$0x30] %vm472, %v1447
  %v1450 = vrot.slane %v1444, 4
  %1451 = vrot.lane.b32.xlu0 %v1450, 96
  %v1452 = vpop.permute.xlu0 %1451
  %v1453 = vsel %vm146, %v1452, 0
  %1455 = vmatprep.subr.mxu0 0.0
  %1456 = vmatpush1.msra.mxu0 0.0
  %1457 = vmatprep.subr.mxu0 0.0
  %1458 = vmatpush1.msra.mxu0 0.0
  %1459 = vmatprep.subr.mxu0 0.0
  %1460 = vmatpush1.msra.mxu0 0.0
  %1461 = vmatprep.subr.mxu0 0.0
  %1462 = vmatpush1.msra.mxu0 0.0
  %1463 = vmatprep.subr.mxu0 0.0
  %1464 = vmatpush1.msra.mxu0 0.0
  %1465 = vmatprep.subr.mxu0 0.0
  %1466 = vmatpush1.msra.mxu0 0.0
  %1467 = vmatprep.subr.mxu0 0.0
  %1468 = vmatpush1.msra.mxu0 0.0
  %1469 = vmatprep.subr.mxu0 0.0
  %1470 = vmatpush1.msra.mxu0 0.0
  %1471 = vmatprep.subr.mxu0 0.0
  %1472 = vmatpush1.msra.mxu0 0.0
  %1473 = vmatprep.subr.mxu0 0.0
  %1474 = vmatpush1.msra.mxu0 0.0
  %1475 = vmatprep.subr.mxu0 0.0
  %1476 = vmatpush1.msra.mxu0 0.0
  %1477 = vmatprep.subr.mxu0 0.0
  %1478 = vmatpush1.msra.mxu0 0.0
  %1479 = vmatprep.subr.mxu0 0.0
  %1480 = vmatpush1.msra.mxu0 %v1028
  %1481 = vmatprep.subr.mxu0 0.0
  %1482 = vmatpush1.msra.mxu0 %v1027
  %1483 = vmatprep.subr.mxu0 0.0
  %1484 = vmatpush1.msra.mxu0 %v1026
  %1485 = vmatprep.subr.mxu0 0.0
  %1486 = vmatpush1.msra.mxu0 %v1025
  %1487 = vmatprep.subr.mxu0 0.0
  %1488 = vmatpush2.msra.mxu0 0.0
  %1489 = vmatprep.subr.mxu0 0.0
  %1490 = vmatpush2.msra.mxu0 0.0
  %1491 = vmatprep.subr.mxu0 0.0
  %1492 = vmatpush2.msra.mxu0 0.0
  %1493 = vmatprep.subr.mxu0 0.0
  %1494 = vmatpush2.msra.mxu0 0.0
  %1495 = vmatprep.subr.mxu0 0.0
  %1496 = vmatpush2.msra.mxu0 0.0
  %1497 = vmatprep.subr.mxu0 0.0
  %1498 = vmatpush2.msra.mxu0 0.0
  %1499 = vmatprep.subr.mxu0 0.0
  %1500 = vmatpush2.msra.mxu0 0.0
  %1501 = vmatprep.subr.mxu0 0.0
  %1502 = vmatpush2.msra.mxu0 0.0
  %1503 = vmatprep.subr.mxu0 0.0
  %1504 = vmatpush2.msra.mxu0 0.0
  %1505 = vmatprep.subr.mxu0 0.0
  %1506 = vmatpush2.msra.mxu0 0.0
  %1507 = vmatprep.subr.mxu0 0.0
  %1508 = vmatpush2.msra.mxu0 0.0
  %1509 = vmatprep.subr.mxu0 0.0
  %1510 = vmatpush2.msra.mxu0 0.0
  %1511 = vmatprep.subr.mxu0 0.0
  %1512 = vmatpush2.msra.mxu0 0.0
  %1513 = vmatprep.subr.mxu0 0.0
  %1514 = vmatpush2.msra.mxu0 0.0
  %1515 = vmatprep.subr.mxu0 0.0
  %1516 = vmatpush2.msra.mxu0 0.0
  %1517 = vmatprep.subr.mxu0 0.0
  %1518 = vmatpush2.msra.mxu0 0.0
  %1519 = vmatprep.mubr.f32.mxu0 0.0
  %1520 = vmatmul.mubr.f32.gmra.mxu0 %v1453
  %v1521 = vpop.f32.mrf.mxu0
  %v1522 = vadd.f32 %v1124, %v1521
  %v1523 = vpop.f32.mrf.mxu0
  %1524 = vdwg.mxu0
  %v1526 = vrot.slane %v1522, 2
  %v1528 = vadd.f32 %v1110, %v1526
  %v1529 = vxor.u32 %v1528, 2147483648
  %v1530 = vmul.f32 %v1529, 1.442695
  %v1531 = vpow.pop %v1530
  %v1532 = vadd.f32 %v1531, 1.0
  %v1533 = vrcp.pop %v1532
  %v1534 = vmul.f32 1.0, %v1533
  %1535 = vrot.lane.b32.xlu0 %v1526, 64
  %v1536 = vpop.permute.xlu0 %1535
  %v1538 = vmul.f32 %v1534, %v1536
  %1540 = vrot.lane.b32.xlu0 %v1538, 64
  %v1541 = vpop.permute.xlu0 %1540
  %v1543 = vadd.f32 %v1110, %v1541
  %v1544 = vtanh.pop %v1543
  %v1545 = vsub.f32 1.0, %v1534
  %1547 = vrot.lane.b32.xlu0 %v1544, 96
  %v1548 = vpop.permute.xlu0 %1547
  %v1550 = vmul.f32 %v1545, %v1548
  %v1551 = vrot.slane %v1444, 6
  %v1553 = vmul.f32 %v1534, %v1551
  %v1554 = vadd.f32 %v1550, %v1553
  %1556 = vrot.lane.b32.xlu0 %v1554, 96
  %v1557 = vpop.permute.xlu0 %1556
  %1559 = vst.msk [vmem:[#allocation2] sm:$0xc0] %vm583, %v1557
  %v1560 = vrot.slane %v1554, 6
  %1561 = vrot.lane.b32.xlu0 %v1560, 96
  %v1562 = vpop.permute.xlu0 %1561
  %v1563 = vsel %vm146, %v1562, 0
  %1565 = vmatprep.subr.mxu0 0.0
  %1566 = vmatpush1.msra.mxu0 0.0
  %1567 = vmatprep.subr.mxu0 0.0
  %1568 = vmatpush1.msra.mxu0 0.0
  %1569 = vmatprep.subr.mxu0 0.0
  %1570 = vmatpush1.msra.mxu0 0.0
  %1571 = vmatprep.subr.mxu0 0.0
  %1572 = vmatpush1.msra.mxu0 0.0
  %1573 = vmatprep.subr.mxu0 0.0
  %1574 = vmatpush1.msra.mxu0 0.0
  %1575 = vmatprep.subr.mxu0 0.0
  %1576 = vmatpush1.msra.mxu0 0.0
  %1577 = vmatprep.subr.mxu0 0.0
  %1578 = vmatpush1.msra.mxu0 0.0
  %1579 = vmatprep.subr.mxu0 0.0
  %1580 = vmatpush1.msra.mxu0 0.0
  %1581 = vmatprep.subr.mxu0 0.0
  %1582 = vmatpush1.msra.mxu0 0.0
  %1583 = vmatprep.subr.mxu0 0.0
  %1584 = vmatpush1.msra.mxu0 0.0
  %1585 = vmatprep.subr.mxu0 0.0
  %1586 = vmatpush1.msra.mxu0 0.0
  %1587 = vmatprep.subr.mxu0 0.0
  %1588 = vmatpush1.msra.mxu0 0.0
  %1589 = vmatprep.subr.mxu0 0.0
  %1590 = vmatpush1.msra.mxu0 %v1028
  %1591 = vmatprep.subr.mxu0 0.0
  %1592 = vmatpush1.msra.mxu0 %v1027
  %1593 = vmatprep.subr.mxu0 0.0
  %1594 = vmatpush1.msra.mxu0 %v1026
  %1595 = vmatprep.subr.mxu0 0.0
  %1596 = vmatpush1.msra.mxu0 %v1025
  %1597 = vmatprep.subr.mxu0 0.0
  %1598 = vmatpush2.msra.mxu0 0.0
  %1599 = vmatprep.subr.mxu0 0.0
  %1600 = vmatpush2.msra.mxu0 0.0
  %1601 = vmatprep.subr.mxu0 0.0
  %1602 = vmatpush2.msra.mxu0 0.0
  %1603 = vmatprep.subr.mxu0 0.0
  %1604 = vmatpush2.msra.mxu0 0.0
  %1605 = vmatprep.subr.mxu0 0.0
  %1606 = vmatpush2.msra.mxu0 0.0
  %1607 = vmatprep.subr.mxu0 0.0
  %1608 = vmatpush2.msra.mxu0 0.0
  %1609 = vmatprep.subr.mxu0 0.0
  %1610 = vmatpush2.msra.mxu0 0.0
  %1611 = vmatprep.subr.mxu0 0.0
  %1612 = vmatpush2.msra.mxu0 0.0
  %1613 = vmatprep.subr.mxu0 0.0
  %1614 = vmatpush2.msra.mxu0 0.0
  %1615 = vmatprep.subr.mxu0 0.0
  %1616 = vmatpush2.msra.mxu0 0.0
  %1617 = vmatprep.subr.mxu0 0.0
  %1618 = vmatpush2.msra.mxu0 0.0
  %1619 = vmatprep.subr.mxu0 0.0
  %1620 = vmatpush2.msra.mxu0 0.0
  %1621 = vmatprep.subr.mxu0 0.0
  %1622 = vmatpush2.msra.mxu0 0.0
  %1623 = vmatprep.subr.mxu0 0.0
  %1624 = vmatpush2.msra.mxu0 0.0
  %1625 = vmatprep.subr.mxu0 0.0
  %1626 = vmatpush2.msra.mxu0 0.0
  %1627 = vmatprep.subr.mxu0 0.0
  %1628 = vmatpush2.msra.mxu0 0.0
  %1629 = vmatprep.mubr.f32.mxu0 0.0
  %1630 = vmatmul.mubr.f32.gmra.mxu0 %v1563
  %v1631 = vpop.f32.mrf.mxu0
  %v1632 = vadd.f32 %v1124, %v1631
  %v1633 = vpop.f32.mrf.mxu0
  %1634 = vdwg.mxu0
  %v1635 = vadd.f32 %v1115, %v1632
  %v1636 = vxor.u32 %v1635, 2147483648
  %v1637 = vmul.f32 %v1636, 1.442695
  %v1638 = vpow.pop %v1637
  %v1639 = vadd.f32 %v1638, 1.0
  %v1640 = vrcp.pop %v1639
  %v1641 = vmul.f32 1.0, %v1640
  %1643 = vrot.lane.b32.xlu0 %v1632, 64
  %v1644 = vpop.permute.xlu0 %1643
  %v1646 = vmul.f32 %v1641, %v1644
  %1648 = vrot.lane.b32.xlu0 %v1646, 64
  %v1649 = vpop.permute.xlu0 %1648
  %v1651 = vadd.f32 %v1115, %v1649
  %v1652 = vtanh.pop %v1651
  %v1653 = vsub.f32 1.0, %v1641
  %1655 = vrot.lane.b32.xlu0 %v1652, 96
  %v1656 = vpop.permute.xlu0 %1655
  %v1658 = vmul.f32 %v1653, %v1656
  %v1660 = vmul.f32 %v1641, %v1560
  %v1661 = vadd.f32 %v1658, %v1660
  %1663 = vrot.lane.b32.xlu0 %v1661, 96
  %v1664 = vpop.permute.xlu0 %1663
  %1666 = vst.msk [vmem:[#allocation2 + $0x8] sm:$0x3] %vm253, %v1664
  %v1667 = vsel %vm146, %v1664, 0
  %1669 = vmatprep.subr.mxu0 0.0
  %1670 = vmatpush1.msra.mxu0 0.0
  %1671 = vmatprep.subr.mxu0 0.0
  %1672 = vmatpush1.msra.mxu0 0.0
  %1673 = vmatprep.subr.mxu0 0.0
  %1674 = vmatpush1.msra.mxu0 0.0
  %1675 = vmatprep.subr.mxu0 0.0
  %1676 = vmatpush1.msra.mxu0 0.0
  %1677 = vmatprep.subr.mxu0 0.0
  %1678 = vmatpush1.msra.mxu0 0.0
  %1679 = vmatprep.subr.mxu0 0.0
  %1680 = vmatpush1.msra.mxu0 0.0
  %1681 = vmatprep.subr.mxu0 0.0
  %1682 = vmatpush1.msra.mxu0 0.0
  %1683 = vmatprep.subr.mxu0 0.0
  %1684 = vmatpush1.msra.mxu0 0.0
  %1685 = vmatprep.subr.mxu0 0.0
  %1686 = vmatpush1.msra.mxu0 0.0
  %1687 = vmatprep.subr.mxu0 0.0
  %1688 = vmatpush1.msra.mxu0 0.0
  %1689 = vmatprep.subr.mxu0 0.0
  %1690 = vmatpush1.msra.mxu0 0.0
  %1691 = vmatprep.subr.mxu0 0.0
  %1692 = vmatpush1.msra.mxu0 0.0
  %1693 = vmatprep.subr.mxu0 0.0
  %1694 = vmatpush1.msra.mxu0 %v1028
  %1695 = vmatprep.subr.mxu0 0.0
  %1696 = vmatpush1.msra.mxu0 %v1027
  %1697 = vmatprep.subr.mxu0 0.0
  %1698 = vmatpush1.msra.mxu0 %v1026
  %1699 = vmatprep.subr.mxu0 0.0
  %1700 = vmatpush1.msra.mxu0 %v1025
  %1701 = vmatprep.subr.mxu0 0.0
  %1702 = vmatpush2.msra.mxu0 0.0
  %1703 = vmatprep.subr.mxu0 0.0
  %1704 = vmatpush2.msra.mxu0 0.0
  %1705 = vmatprep.subr.mxu0 0.0
  %1706 = vmatpush2.msra.mxu0 0.0
  %1707 = vmatprep.subr.mxu0 0.0
  %1708 = vmatpush2.msra.mxu0 0.0
  %1709 = vmatprep.subr.mxu0 0.0
  %1710 = vmatpush2.msra.mxu0 0.0
  %1711 = vmatprep.subr.mxu0 0.0
  %1712 = vmatpush2.msra.mxu0 0.0
  %1713 = vmatprep.subr.mxu0 0.0
  %1714 = vmatpush2.msra.mxu0 0.0
  %1715 = vmatprep.subr.mxu0 0.0
  %1716 = vmatpush2.msra.mxu0 0.0
  %1717 = vmatprep.subr.mxu0 0.0
  %1718 = vmatpush2.msra.mxu0 0.0
  %1719 = vmatprep.subr.mxu0 0.0
  %1720 = vmatpush2.msra.mxu0 0.0
  %1721 = vmatprep.subr.mxu0 0.0
  %1722 = vmatpush2.msra.mxu0 0.0
  %1723 = vmatprep.subr.mxu0 0.0
  %1724 = vmatpush2.msra.mxu0 0.0
  %1725 = vmatprep.subr.mxu0 0.0
  %1726 = vmatpush2.msra.mxu0 0.0
  %1727 = vmatprep.subr.mxu0 0.0
  %1728 = vmatpush2.msra.mxu0 0.0
  %1729 = vmatprep.subr.mxu0 0.0
  %1730 = vmatpush2.msra.mxu0 0.0
  %1731 = vmatprep.subr.mxu0 0.0
  %1732 = vmatpush2.msra.mxu0 0.0
  %1733 = vmatprep.mubr.f32.mxu0 0.0
  %1734 = vmatmul.mubr.f32.gmra.mxu0 %v1667
  %v1735 = vpop.f32.mrf.mxu0
  %v1736 = vadd.f32 %v1124, %v1735
  %v1737 = vpop.f32.mrf.mxu0
  %1738 = vdwg.mxu0
  %v1740 = vrot.slane %v1736, 6
  %v1742 = vadd.f32 %v1115, %v1740
  %v1743 = vxor.u32 %v1742, 2147483648
  %v1744 = vmul.f32 %v1743, 1.442695
  %v1745 = vpow.pop %v1744
  %v1746 = vadd.f32 %v1745, 1.0
  %v1747 = vrcp.pop %v1746
  %v1748 = vmul.f32 1.0, %v1747
  %1749 = vrot.lane.b32.xlu0 %v1740, 64
  %v1750 = vpop.permute.xlu0 %1749
  %v1752 = vmul.f32 %v1748, %v1750
  %1754 = vrot.lane.b32.xlu0 %v1752, 64
  %v1755 = vpop.permute.xlu0 %1754
  %v1757 = vadd.f32 %v1115, %v1755
  %v1758 = vtanh.pop %v1757
  %v1759 = vsub.f32 1.0, %v1748
  %1761 = vrot.lane.b32.xlu0 %v1758, 96
  %v1762 = vpop.permute.xlu0 %1761
  %v1764 = vmul.f32 %v1759, %v1762
  %v1765 = vrot.slane %v1661, 6
  %v1767 = vmul.f32 %v1748, %v1765
  %v1768 = vadd.f32 %v1764, %v1767
  %1770 = vrot.lane.b32.xlu0 %v1768, 96
  %v1771 = vpop.permute.xlu0 %1770
  %1773 = vst.msk [vmem:[#allocation2 + $0x8] sm:$0xc] %vm361, %v1771
  %v1774 = vrot.slane %v1768, 2
  %1775 = vrot.lane.b32.xlu0 %v1774, 96
  %v1776 = vpop.permute.xlu0 %1775
  %v1777 = vsel %vm146, %v1776, 0
  %1779 = vmatprep.subr.mxu0 0.0
  %1780 = vmatpush1.msra.mxu0 0.0
  %1781 = vmatprep.subr.mxu0 0.0
  %1782 = vmatpush1.msra.mxu0 0.0
  %1783 = vmatprep.subr.mxu0 0.0
  %1784 = vmatpush1.msra.mxu0 0.0
  %1785 = vmatprep.subr.mxu0 0.0
  %1786 = vmatpush1.msra.mxu0 0.0
  %1787 = vmatprep.subr.mxu0 0.0
  %1788 = vmatpush1.msra.mxu0 0.0
  %1789 = vmatprep.subr.mxu0 0.0
  %1790 = vmatpush1.msra.mxu0 0.0
  %1791 = vmatprep.subr.mxu0 0.0
  %1792 = vmatpush1.msra.mxu0 0.0
  %1793 = vmatprep.subr.mxu0 0.0
  %1794 = vmatpush1.msra.mxu0 0.0
  %1795 = vmatprep.subr.mxu0 0.0
  %1796 = vmatpush1.msra.mxu0 0.0
  %1797 = vmatprep.subr.mxu0 0.0
  %1798 = vmatpush1.msra.mxu0 0.0
  %1799 = vmatprep.subr.mxu0 0.0
  %1800 = vmatpush1.msra.mxu0 0.0
  %1801 = vmatprep.subr.mxu0 0.0
  %1802 = vmatpush1.msra.mxu0 0.0
  %1803 = vmatprep.subr.mxu0 0.0
  %1804 = vmatpush1.msra.mxu0 %v1028
  %1805 = vmatprep.subr.mxu0 0.0
  %1806 = vmatpush1.msra.mxu0 %v1027
  %1807 = vmatprep.subr.mxu0 0.0
  %1808 = vmatpush1.msra.mxu0 %v1026
  %1809 = vmatprep.subr.mxu0 0.0
  %1810 = vmatpush1.msra.mxu0 %v1025
  %1811 = vmatprep.subr.mxu0 0.0
  %1812 = vmatpush2.msra.mxu0 0.0
  %1813 = vmatprep.subr.mxu0 0.0
  %1814 = vmatpush2.msra.mxu0 0.0
  %1815 = vmatprep.subr.mxu0 0.0
  %1816 = vmatpush2.msra.mxu0 0.0
  %1817 = vmatprep.subr.mxu0 0.0
  %1818 = vmatpush2.msra.mxu0 0.0
  %1819 = vmatprep.subr.mxu0 0.0
  %1820 = vmatpush2.msra.mxu0 0.0
  %1821 = vmatprep.subr.mxu0 0.0
  %1822 = vmatpush2.msra.mxu0 0.0
  %1823 = vmatprep.subr.mxu0 0.0
  %1824 = vmatpush2.msra.mxu0 0.0
  %1825 = vmatprep.subr.mxu0 0.0
  %1826 = vmatpush2.msra.mxu0 0.0
  %1827 = vmatprep.subr.mxu0 0.0
  %1828 = vmatpush2.msra.mxu0 0.0
  %1829 = vmatprep.subr.mxu0 0.0
  %1830 = vmatpush2.msra.mxu0 0.0
  %1831 = vmatprep.subr.mxu0 0.0
  %1832 = vmatpush2.msra.mxu0 0.0
  %1833 = vmatprep.subr.mxu0 0.0
  %1834 = vmatpush2.msra.mxu0 0.0
  %1835 = vmatprep.subr.mxu0 0.0
  %1836 = vmatpush2.msra.mxu0 0.0
  %1837 = vmatprep.subr.mxu0 0.0
  %1838 = vmatpush2.msra.mxu0 0.0
  %1839 = vmatprep.subr.mxu0 0.0
  %1840 = vmatpush2.msra.mxu0 0.0
  %1841 = vmatprep.subr.mxu0 0.0
  %1842 = vmatpush2.msra.mxu0 0.0
  %1843 = vmatprep.mubr.f32.mxu0 0.0
  %1844 = vmatmul.mubr.f32.gmra.mxu0 %v1777
  %v1845 = vpop.f32.mrf.mxu0
  %v1846 = vadd.f32 %v1124, %v1845
  %v1847 = vpop.f32.mrf.mxu0
  %1848 = vdwg.mxu0
  %v1850 = vrot.slane %v1846, 4
  %v1852 = vadd.f32 %v1115, %v1850
  %v1853 = vxor.u32 %v1852, 2147483648
  %v1854 = vmul.f32 %v1853, 1.442695
  %v1855 = vpow.pop %v1854
  %v1856 = vadd.f32 %v1855, 1.0
  %v1857 = vrcp.pop %v1856
  %v1858 = vmul.f32 1.0, %v1857
  %1859 = vrot.lane.b32.xlu0 %v1850, 64
  %v1860 = vpop.permute.xlu0 %1859
  %v1862 = vmul.f32 %v1858, %v1860
  %1864 = vrot.lane.b32.xlu0 %v1862, 64
  %v1865 = vpop.permute.xlu0 %1864
  %v1867 = vadd.f32 %v1115, %v1865
  %v1868 = vtanh.pop %v1867
  %v1869 = vsub.f32 1.0, %v1858
  %1871 = vrot.lane.b32.xlu0 %v1868, 96
  %v1872 = vpop.permute.xlu0 %1871
  %v1874 = vmul.f32 %v1869, %v1872
  %v1875 = vrot.slane %v1768, 6
  %v1877 = vmul.f32 %v1858, %v1875
  %v1878 = vadd.f32 %v1874, %v1877
  %1880 = vrot.lane.b32.xlu0 %v1878, 96
  %v1881 = vpop.permute.xlu0 %1880
  %1883 = vst.msk [vmem:[#allocation2 + $0x8] sm:$0x30] %vm472, %v1881
  %v1884 = vrot.slane %v1878, 4
  %1885 = vrot.lane.b32.xlu0 %v1884, 96
  %v1886 = vpop.permute.xlu0 %1885
  %v1887 = vsel %vm146, %v1886, 0
  %1889 = vmatprep.subr.mxu0 0.0
  %1890 = vmatpush1.msra.mxu0 0.0
  %1891 = vmatprep.subr.mxu0 0.0
  %1892 = vmatpush1.msra.mxu0 0.0
  %1893 = vmatprep.subr.mxu0 0.0
  %1894 = vmatpush1.msra.mxu0 0.0
  %1895 = vmatprep.subr.mxu0 0.0
  %1896 = vmatpush1.msra.mxu0 0.0
  %1897 = vmatprep.subr.mxu0 0.0
  %1898 = vmatpush1.msra.mxu0 0.0
  %1899 = vmatprep.subr.mxu0 0.0
  %1900 = vmatpush1.msra.mxu0 0.0
  %1901 = vmatprep.subr.mxu0 0.0
  %1902 = vmatpush1.msra.mxu0 0.0
  %1903 = vmatprep.subr.mxu0 0.0
  %1904 = vmatpush1.msra.mxu0 0.0
  %1905 = vmatprep.subr.mxu0 0.0
  %1906 = vmatpush1.msra.mxu0 0.0
  %1907 = vmatprep.subr.mxu0 0.0
  %1908 = vmatpush1.msra.mxu0 0.0
  %1909 = vmatprep.subr.mxu0 0.0
  %1910 = vmatpush1.msra.mxu0 0.0
  %1911 = vmatprep.subr.mxu0 0.0
  %1912 = vmatpush1.msra.mxu0 0.0
  %1913 = vmatprep.subr.mxu0 0.0
  %1914 = vmatpush1.msra.mxu0 %v1028
  %1915 = vmatprep.subr.mxu0 0.0
  %1916 = vmatpush1.msra.mxu0 %v1027
  %1917 = vmatprep.subr.mxu0 0.0
  %1918 = vmatpush1.msra.mxu0 %v1026
  %1919 = vmatprep.subr.mxu0 0.0
  %1920 = vmatpush1.msra.mxu0 %v1025
  %1921 = vmatprep.subr.mxu0 0.0
  %1922 = vmatpush2.msra.mxu0 0.0
  %1923 = vmatprep.subr.mxu0 0.0
  %1924 = vmatpush2.msra.mxu0 0.0
  %1925 = vmatprep.subr.mxu0 0.0
  %1926 = vmatpush2.msra.mxu0 0.0
  %1927 = vmatprep.subr.mxu0 0.0
  %1928 = vmatpush2.msra.mxu0 0.0
  %1929 = vmatprep.subr.mxu0 0.0
  %1930 = vmatpush2.msra.mxu0 0.0
  %1931 = vmatprep.subr.mxu0 0.0
  %1932 = vmatpush2.msra.mxu0 0.0
  %1933 = vmatprep.subr.mxu0 0.0
  %1934 = vmatpush2.msra.mxu0 0.0
  %1935 = vmatprep.subr.mxu0 0.0
  %1936 = vmatpush2.msra.mxu0 0.0
  %1937 = vmatprep.subr.mxu0 0.0
  %1938 = vmatpush2.msra.mxu0 0.0
  %1939 = vmatprep.subr.mxu0 0.0
  %1940 = vmatpush2.msra.mxu0 0.0
  %1941 = vmatprep.subr.mxu0 0.0
  %1942 = vmatpush2.msra.mxu0 0.0
  %1943 = vmatprep.subr.mxu0 0.0
  %1944 = vmatpush2.msra.mxu0 0.0
  %1945 = vmatprep.subr.mxu0 0.0
  %1946 = vmatpush2.msra.mxu0 0.0
  %1947 = vmatprep.subr.mxu0 0.0
  %1948 = vmatpush2.msra.mxu0 0.0
  %1949 = vmatprep.subr.mxu0 0.0
  %1950 = vmatpush2.msra.mxu0 0.0
  %1951 = vmatprep.subr.mxu0 0.0
  %1952 = vmatpush2.msra.mxu0 0.0
  %1953 = vmatprep.mubr.f32.mxu0 0.0
  %1954 = vmatmul.mubr.f32.gmra.mxu0 %v1887
  %v1955 = vpop.f32.mrf.mxu0
  %v1956 = vadd.f32 %v1124, %v1955
  %v1957 = vpop.f32.mrf.mxu0
  %1958 = vdwg.mxu0
  %v1960 = vrot.slane %v1956, 2
  %v1962 = vadd.f32 %v1115, %v1960
  %v1963 = vxor.u32 %v1962, 2147483648
  %v1964 = vmul.f32 %v1963, 1.442695
  %v1965 = vpow.pop %v1964
  %v1966 = vadd.f32 %v1965, 1.0
  %v1967 = vrcp.pop %v1966
  %v1968 = vmul.f32 1.0, %v1967
  %1969 = vrot.lane.b32.xlu0 %v1960, 64
  %v1970 = vpop.permute.xlu0 %1969
  %v1972 = vmul.f32 %v1968, %v1970
  %1974 = vrot.lane.b32.xlu0 %v1972, 64
  %v1975 = vpop.permute.xlu0 %1974
  %v1977 = vadd.f32 %v1115, %v1975
  %v1978 = vtanh.pop %v1977
  %v1979 = vsub.f32 1.0, %v1968
  %1981 = vrot.lane.b32.xlu0 %v1978, 96
  %v1982 = vpop.permute.xlu0 %1981
  %v1984 = vmul.f32 %v1979, %v1982
  %v1985 = vrot.slane %v1878, 6
  %v1987 = vmul.f32 %v1968, %v1985
  %v1988 = vadd.f32 %v1984, %v1987
  %1990 = vrot.lane.b32.xlu0 %v1988, 96
  %v1991 = vpop.permute.xlu0 %1990
  %1993 = vst.msk [vmem:[#allocation2 + $0x8] sm:$0xc0] %vm583, %v1991
  %v1994 = vld [vmem:[#allocation2] sm:$0xff]
  %v1995 = vld [vmem:[#allocation2 + $0x8] sm:$0xff]
  %v1996 = vld [vmem:[%s10] sm:$0xff]
  %v1997 = vld [vmem:[%s10 + $0x8] sm:$0xff]
  %v1998 = vld [vmem:[%s10 + $0x10] sm:$0xff]
  %v1999 = vld [vmem:[%s10 + $0x18] sm:$0xff]
  %v2000 = vld [vmem:[%s11] sm:$0x1]
  %v2002 = vlaneseq
  %v2003 = vshrl.u32 %v2002, 7
  %v2004 = vsub.s32 0, %v2003
  %v2005 = vrot.slane %v2000, %v2004
  %v2008 = vsel %vm146, %v1994, 0
  %v2011 = vsel %vm146, %v1995, 0
  %2013 = vmatprep.subr.mxu0 0.0
  %2014 = vmatpush1.msra.mxu0 0.0
  %2015 = vmatprep.subr.mxu0 0.0
  %2016 = vmatpush1.msra.mxu0 0.0
  %2017 = vmatprep.subr.mxu0 0.0
  %2018 = vmatpush1.msra.mxu0 0.0
  %2019 = vmatprep.subr.mxu0 0.0
  %2020 = vmatpush1.msra.mxu0 0.0
  %2021 = vmatprep.subr.mxu0 0.0
  %2022 = vmatpush1.msra.mxu0 0.0
  %2023 = vmatprep.subr.mxu0 0.0
  %2024 = vmatpush1.msra.mxu0 0.0
  %2025 = vmatprep.subr.mxu0 0.0
  %2026 = vmatpush1.msra.mxu0 0.0
  %2027 = vmatprep.subr.mxu0 0.0
  %2028 = vmatpush1.msra.mxu0 0.0
  %2029 = vmatprep.subr.mxu0 0.0
  %2030 = vmatpush1.msra.mxu0 0.0
  %2031 = vmatprep.subr.mxu0 0.0
  %2032 = vmatpush1.msra.mxu0 0.0
  %2033 = vmatprep.subr.mxu0 0.0
  %2034 = vmatpush1.msra.mxu0 0.0
  %2035 = vmatprep.subr.mxu0 0.0
  %2036 = vmatpush1.msra.mxu0 0.0
  %2037 = vmatprep.subr.mxu0 0.0
  %2038 = vmatpush1.msra.mxu0 %v1999
  %2039 = vmatprep.subr.mxu0 0.0
  %2040 = vmatpush1.msra.mxu0 %v1998
  %2041 = vmatprep.subr.mxu0 0.0
  %2042 = vmatpush1.msra.mxu0 %v1997
  %2043 = vmatprep.subr.mxu0 0.0
  %2044 = vmatpush1.msra.mxu0 %v1996
  %2045 = vmatprep.subr.mxu0 0.0
  %2046 = vmatpush2.msra.mxu0 0.0
  %2047 = vmatprep.subr.mxu0 0.0
  %2048 = vmatpush2.msra.mxu0 0.0
  %2049 = vmatprep.subr.mxu0 0.0
  %2050 = vmatpush2.msra.mxu0 0.0
  %2051 = vmatprep.subr.mxu0 0.0
  %2052 = vmatpush2.msra.mxu0 0.0
  %2053 = vmatprep.subr.mxu0 0.0
  %2054 = vmatpush2.msra.mxu0 0.0
  %2055 = vmatprep.subr.mxu0 0.0
  %2056 = vmatpush2.msra.mxu0 0.0
  %2057 = vmatprep.subr.mxu0 0.0
  %2058 = vmatpush2.msra.mxu0 0.0
  %2059 = vmatprep.subr.mxu0 0.0
  %2060 = vmatpush2.msra.mxu0 0.0
  %2061 = vmatprep.subr.mxu0 0.0
  %2062 = vmatpush2.msra.mxu0 0.0
  %2063 = vmatprep.subr.mxu0 0.0
  %2064 = vmatpush2.msra.mxu0 0.0
  %2065 = vmatprep.subr.mxu0 0.0
  %2066 = vmatpush2.msra.mxu0 0.0
  %2067 = vmatprep.subr.mxu0 0.0
  %2068 = vmatpush2.msra.mxu0 0.0
  %2069 = vmatprep.subr.mxu0 0.0
  %2070 = vmatpush2.msra.mxu0 0.0
  %2071 = vmatprep.subr.mxu0 0.0
  %2072 = vmatpush2.msra.mxu0 0.0
  %2073 = vmatprep.subr.mxu0 0.0
  %2074 = vmatpush2.msra.mxu0 0.0
  %2075 = vmatprep.subr.mxu0 0.0
  %2076 = vmatpush2.msra.mxu0 0.0
  %2077 = vmatprep.mubr.f32.mxu0 0.0
  %2078 = vmatmul.mubr.f32.gmra.mxu0 %v2008
  %v2079 = vpop.f32.mrf.mxu0
  %v2080 = vadd.f32 %v2005, %v2079
  %v2081 = vpop.f32.mrf.mxu0
  %2082 = vmatprep.mubr.f32.mxu0 0.0
  %2083 = vmatmul.mubr.f32.gmra.mxu0 %v2011
  %v2084 = vpop.f32.mrf.mxu0
  %v2085 = vadd.f32 %v2005, %v2084
  %v2086 = vpop.f32.mrf.mxu0
  %2087 = vdwg.mxu0
  %vm2088 = vcmask 523264
  %2089 = vst.msk [vmem:[%s12] sm:$0xff] %vm2088, %v2080
  %2090 = vst.msk [vmem:[%s12 + $0x8] sm:$0xff] %vm2088, %v2085
  // Predicated region
  $region50: #{baseline_forward.3} parent=0 // pred_check
    _
  $region51: #{baseline_forward.3} parent=0 // pred_check_branch
    %2092 = sbr.rel (0) target = $region53
  $region52: #{baseline_forward.3} parent=0 // pred_region
    _
  $region53: #{baseline_forward.3} parent=0 // pred_fallthru
    _
  // Predicated region
  $region54: #{baseline_forward.3} parent=0 // pred_check
    _
  $region55: #{baseline_forward.3} parent=0 // pred_check_branch
    %2094 = sbr.rel (0) target = $region57
  $region56: #{baseline_forward.3} parent=0 // pred_region
    _
  $region57: #{baseline_forward.3} parent=0 // pred_fallthru
    _

</llo_original>
